<compile_context>
chip_gen: v6e
topology: v6e:2x2x1
jax: 0.10.0
libtpu: 0.0.40
codegen_flags: <defaults>
</compile_context>

<pallas_src>
import numpy as np
import jax
import jax.numpy as jnp
from jax.experimental import pallas as pl
from jax.experimental.pallas import tpu as pltpu

HH = 16                      # h_hi : number of 64-row bands
HLO = 64                     # h_lo : rows per band
WHI = 16                     # w_hi : 64-column tiles per band
WLO = 64                     # w_lo : columns per tile
WW = WHI * WLO               # 1024 flattened width (lane-dense, multiple of 128)
NCH = HH * WHI               # 256 output channels
NTOT = HH * HLO * WHI * WLO  # 1,048,576 elements, fixed by the module's view()

GH = 4                       # h_hi bands per grid step -> grid of 4 steps


def spade_feature_unpack_kernel(x_ref, o_ref):
    """(GH, 64, 1024) band -> (GH, 16, 64, 64) channel tiles via lane-window copies only."""
    # x_ref[g, r, :]      : row r of band g = 16 consecutive 64-lane tiles.
    # o_ref[g, k, r, :]   : row r of output channel (band g, tile k).
    # Rows (sublanes) map 1:1; only the lane offset changes, so every copy is a lane slice.
    for g in range(GH):
        for k2 in range(WHI // 2):
            # One aligned, full-128-lane load feeds two adjacent output channels.
            pair = x_ref[g, :, 2 * k2 * WLO:(2 * k2 + 2) * WLO]        # (64, 128)
            o_ref[g, 2 * k2, :, :] = pair[:, :WLO]                     # (64, 64)
            o_ref[g, 2 * k2 + 1, :, :] = pair[:, WLO:]                 # (64, 64)


def live_portrait_spade_generator(x):
    """Forward pass of LivePortraitNukeSpadeGenerator (feature unpack; decoder is a TODO)."""
    b, c, h, w = x.shape
    assert b == 1 and c * h * w == NTOT, (
        "forward hard-codes x.view(1, 16, 64, 16, 64); input must hold 1,048,576 elements")
    x_bands = x.astype(jnp.float32).reshape(HH, HLO, WW)   # free contiguous reshape

    feat = pl.pallas_call(
        spade_feature_unpack_kernel,
        out_shape=jax.ShapeDtypeStruct((HH, WHI, HLO, WLO), jnp.float32),
        grid=(HH // GH,),
        in_specs=[pl.BlockSpec((GH, HLO, WW), lambda i: (i, 0, 0))],
        out_specs=pl.BlockSpec((GH, WHI, HLO, WLO), lambda i: (i, 0, 0, 0)),
        compiler_params=pltpu.CompilerParams(dimension_semantics=("parallel",)),
    )(x_bands)

    out = feat.reshape(1, NCH, HLO, WLO)   # contiguous (== torch .contiguous())
    # TODO(synk): apply the (unspecified) SPADE decoder `self.model(feature=out)` here.
    return out


# ----------------------- pure-JAX reference (mirrors the torch forward) -----------------------
def reference_forward(x):
    f = x.astype(jnp.float32).reshape(1, HH, HLO, WHI, WLO)
    f = jnp.transpose(f, (0, 1, 3, 2, 4)).reshape(1, NCH, HLO, WLO)
    return f  # TODO(synk): self.model is not specified by the module


if __name__ == "__main__":
    key = jax.random.PRNGKey(0)
    # Any (1, c, h, w) with c*h*w == 1,048,576 is valid for the module's view(); use a
    # Nuke-style 4-channel 512x512 image.
    x = jax.random.normal(key, (1, 4, 512, 512), jnp.float32)

    out = jax.block_until_ready(live_portrait_spade_generator(x))
    ref = jax.block_until_ready(reference_forward(x))

    assert out.shape == (1, NCH, HLO, WLO) and out.dtype == jnp.float32
    # Pure data movement -> results must match bit-exactly.
    np.testing.assert_array_equal(np.asarray(out), np.asarray(ref))
    print("KERNEL_OK")
</pallas_src>

<mosaic_0001>
module attributes {stable_mosaic.version = 11 : i64} {
  func.func @spade_feature_unpack_kernel(%arg0: i32, %arg1: memref<4x64x1024xf32, #tpu.memory_space<vmem>>, %arg2: memref<4x16x64x64xf32, #tpu.memory_space<vmem>>) attributes {dimension_semantics = [#tpu.dimension_semantics<parallel>], iteration_bounds = array<i64: 4>, scalar_prefetch = 0 : i64, scratch_operands = 0 : i64, tpu.core_type = #tpu.core_type<tc>, window_params = [{transform_indices = @transform_0, window_bounds = array<i64: 4, 64, 1024>}, {transform_indices = @transform_1, window_bounds = array<i64: 4, 16, 64, 64>}]} {
    %c0 = arith.constant 0 : index
    %c0_0 = arith.constant 0 : index
    %c0_1 = arith.constant 0 : index
    %0 = vector.load %arg1[%c0, %c0_0, %c0_1] : memref<4x64x1024xf32, #tpu.memory_space<vmem>>, vector<1x64x128xf32>
    %1 = vector.shape_cast %0 : vector<1x64x128xf32> to vector<64x128xf32>
    %2 = vector.extract_strided_slice %1 {offsets = [0, 0], sizes = [64, 64], strides = [1, 1]} : vector<64x128xf32> to vector<64x64xf32>
    %c0_2 = arith.constant 0 : index
    %c0_3 = arith.constant 0 : index
    %c0_4 = arith.constant 0 : index
    %c0_5 = arith.constant 0 : index
    %3 = vector.load %arg2[%c0_2, %c0_3, %c0_4, %c0_5] : memref<4x16x64x64xf32, #tpu.memory_space<vmem>>, vector<1x1x64x64xf32>
    %4 = vector.shape_cast %3 : vector<1x1x64x64xf32> to vector<64x64xf32>
    %5 = vector.shape_cast %2 : vector<64x64xf32> to vector<1x1x64x64xf32>
    tpu.vector_store %arg2[%c0_2, %c0_3, %c0_4, %c0_5], %5 {strides = array<i32>} : memref<4x16x64x64xf32, #tpu.memory_space<vmem>>, vector<1x1x64x64xf32>,
    %6 = vector.extract_strided_slice %1 {offsets = [0, 64], sizes = [64, 64], strides = [1, 1]} : vector<64x128xf32> to vector<64x64xf32>
    %c0_6 = arith.constant 0 : index
    %c1 = arith.constant 1 : index
    %c0_7 = arith.constant 0 : index
    %c0_8 = arith.constant 0 : index
    %7 = vector.load %arg2[%c0_6, %c1, %c0_7, %c0_8] : memref<4x16x64x64xf32, #tpu.memory_space<vmem>>, vector<1x1x64x64xf32>
    %8 = vector.shape_cast %7 : vector<1x1x64x64xf32> to vector<64x64xf32>
    %9 = vector.shape_cast %6 : vector<64x64xf32> to vector<1x1x64x64xf32>
    tpu.vector_store %arg2[%c0_6, %c1, %c0_7, %c0_8], %9 {strides = array<i32>} : memref<4x16x64x64xf32, #tpu.memory_space<vmem>>, vector<1x1x64x64xf32>,
    %c0_9 = arith.constant 0 : index
    %c0_10 = arith.constant 0 : index
    %c128 = arith.constant 128 : index
    %10 = vector.load %arg1[%c0_9, %c0_10, %c128] : memref<4x64x1024xf32, #tpu.memory_space<vmem>>, vector<1x64x128xf32>
    %11 = vector.shape_cast %10 : vector<1x64x128xf32> to vector<64x128xf32>
    %12 = vector.extract_strided_slice %11 {offsets = [0, 0], sizes = [64, 64], strides = [1, 1]} : vector<64x128xf32> to vector<64x64xf32>
    %c0_11 = arith.constant 0 : index
    %c2 = arith.constant 2 : index
    %c0_12 = arith.constant 0 : index
    %c0_13 = arith.constant 0 : index
    %13 = vector.load %arg2[%c0_11, %c2, %c0_12, %c0_13] : memref<4x16x64x64xf32, #tpu.memory_space<vmem>>, vector<1x1x64x64xf32>
    %14 = vector.shape_cast %13 : vector<1x1x64x64xf32> to vector<64x64xf32>
    %15 = vector.shape_cast %12 : vector<64x64xf32> to vector<1x1x64x64xf32>
    tpu.vector_store %arg2[%c0_11, %c2, %c0_12, %c0_13], %15 {strides = array<i32>} : memref<4x16x64x64xf32, #tpu.memory_space<vmem>>, vector<1x1x64x64xf32>,
    %16 = vector.extract_strided_slice %11 {offsets = [0, 64], sizes = [64, 64], strides = [1, 1]} : vector<64x128xf32> to vector<64x64xf32>
    %c0_14 = arith.constant 0 : index
    %c3 = arith.constant 3 : index
    %c0_15 = arith.constant 0 : index
    %c0_16 = arith.constant 0 : index
    %17 = vector.load %arg2[%c0_14, %c3, %c0_15, %c0_16] : memref<4x16x64x64xf32, #tpu.memory_space<vmem>>, vector<1x1x64x64xf32>
    %18 = vector.shape_cast %17 : vector<1x1x64x64xf32> to vector<64x64xf32>
    %19 = vector.shape_cast %16 : vector<64x64xf32> to vector<1x1x64x64xf32>
    tpu.vector_store %arg2[%c0_14, %c3, %c0_15, %c0_16], %19 {strides = array<i32>} : memref<4x16x64x64xf32, #tpu.memory_space<vmem>>, vector<1x1x64x64xf32>,
    %c0_17 = arith.constant 0 : index
    %c0_18 = arith.constant 0 : index
    %c256 = arith.constant 256 : index
    %20 = vector.load %arg1[%c0_17, %c0_18, %c256] : memref<4x64x1024xf32, #tpu.memory_space<vmem>>, vector<1x64x128xf32>
    %21 = vector.shape_cast %20 : vector<1x64x128xf32> to vector<64x128xf32>
    %22 = vector.extract_strided_slice %21 {offsets = [0, 0], sizes = [64, 64], strides = [1, 1]} : vector<64x128xf32> to vector<64x64xf32>
    %c0_19 = arith.constant 0 : index
    %c4 = arith.constant 4 : index
    %c0_20 = arith.constant 0 : index
    %c0_21 = arith.constant 0 : index
    %23 = vector.load %arg2[%c0_19, %c4, %c0_20, %c0_21] : memref<4x16x64x64xf32, #tpu.memory_space<vmem>>, vector<1x1x64x64xf32>
    %24 = vector.shape_cast %23 : vector<1x1x64x64xf32> to vector<64x64xf32>
    %25 = vector.shape_cast %22 : vector<64x64xf32> to vector<1x1x64x64xf32>
    tpu.vector_store %arg2[%c0_19, %c4, %c0_20, %c0_21], %25 {strides = array<i32>} : memref<4x16x64x64xf32, #tpu.memory_space<vmem>>, vector<1x1x64x64xf32>,
    %26 = vector.extract_strided_slice %21 {offsets = [0, 64], sizes = [64, 64], strides = [1, 1]} : vector<64x128xf32> to vector<64x64xf32>
    %c0_22 = arith.constant 0 : index
    %c5 = arith.constant 5 : index
    %c0_23 = arith.constant 0 : index
    %c0_24 = arith.constant 0 : index
    %27 = vector.load %arg2[%c0_22, %c5, %c0_23, %c0_24] : memref<4x16x64x64xf32, #tpu.memory_space<vmem>>, vector<1x1x64x64xf32>
    %28 = vector.shape_cast %27 : vector<1x1x64x64xf32> to vector<64x64xf32>
    %29 = vector.shape_cast %26 : vector<64x64xf32> to vector<1x1x64x64xf32>
    tpu.vector_store %arg2[%c0_22, %c5, %c0_23, %c0_24], %29 {strides = array<i32>} : memref<4x16x64x64xf32, #tpu.memory_space<vmem>>, vector<1x1x64x64xf32>,
    %c0_25 = arith.constant 0 : index
    %c0_26 = arith.constant 0 : index
    %c384 = arith.constant 384 : index
    %30 = vector.load %arg1[%c0_25, %c0_26, %c384] : memref<4x64x1024xf32, #tpu.memory_space<vmem>>, vector<1x64x128xf32>
    %31 = vector.shape_cast %30 : vector<1x64x128xf32> to vector<64x128xf32>
    %32 = vector.extract_strided_slice %31 {offsets = [0, 0], sizes = [64, 64], strides = [1, 1]} : vector<64x128xf32> to vector<64x64xf32>
    %c0_27 = arith.constant 0 : index
    %c6 = arith.constant 6 : index
    %c0_28 = arith.constant 0 : index
    %c0_29 = arith.constant 0 : index
    %33 = vector.load %arg2[%c0_27, %c6, %c0_28, %c0_29] : memref<4x16x64x64xf32, #tpu.memory_space<vmem>>, vector<1x1x64x64xf32>
    %34 = vector.shape_cast %33 : vector<1x1x64x64xf32> to vector<64x64xf32>
    %35 = vector.shape_cast %32 : vector<64x64xf32> to vector<1x1x64x64xf32>
    tpu.vector_store %arg2[%c0_27, %c6, %c0_28, %c0_29], %35 {strides = array<i32>} : memref<4x16x64x64xf32, #tpu.memory_space<vmem>>, vector<1x1x64x64xf32>,
    %36 = vector.extract_strided_slice %31 {offsets = [0, 64], sizes = [64, 64], strides = [1, 1]} : vector<64x128xf32> to vector<64x64xf32>
    %c0_30 = arith.constant 0 : index
    %c7 = arith.constant 7 : index
    %c0_31 = arith.constant 0 : index
    %c0_32 = arith.constant 0 : index
    %37 = vector.load %arg2[%c0_30, %c7, %c0_31, %c0_32] : memref<4x16x64x64xf32, #tpu.memory_space<vmem>>, vector<1x1x64x64xf32>
    %38 = vector.shape_cast %37 : vector<1x1x64x64xf32> to vector<64x64xf32>
    %39 = vector.shape_cast %36 : vector<64x64xf32> to vector<1x1x64x64xf32>
    tpu.vector_store %arg2[%c0_30, %c7, %c0_31, %c0_32], %39 {strides = array<i32>} : memref<4x16x64x64xf32, #tpu.memory_space<vmem>>, vector<1x1x64x64xf32>,
    %c0_33 = arith.constant 0 : index
    %c0_34 = arith.constant 0 : index
    %c512 = arith.constant 512 : index
    %40 = vector.load %arg1[%c0_33, %c0_34, %c512] : memref<4x64x1024xf32, #tpu.memory_space<vmem>>, vector<1x64x128xf32>
    %41 = vector.shape_cast %40 : vector<1x64x128xf32> to vector<64x128xf32>
    %42 = vector.extract_strided_slice %41 {offsets = [0, 0], sizes = [64, 64], strides = [1, 1]} : vector<64x128xf32> to vector<64x64xf32>
    %c0_35 = arith.constant 0 : index
    %c8 = arith.constant 8 : index
    %c0_36 = arith.constant 0 : index
    %c0_37 = arith.constant 0 : index
    %43 = vector.load %arg2[%c0_35, %c8, %c0_36, %c0_37] : memref<4x16x64x64xf32, #tpu.memory_space<vmem>>, vector<1x1x64x64xf32>
    %44 = vector.shape_cast %43 : vector<1x1x64x64xf32> to vector<64x64xf32>
    %45 = vector.shape_cast %42 : vector<64x64xf32> to vector<1x1x64x64xf32>
    tpu.vector_store %arg2[%c0_35, %c8, %c0_36, %c0_37], %45 {strides = array<i32>} : memref<4x16x64x64xf32, #tpu.memory_space<vmem>>, vector<1x1x64x64xf32>,
    %46 = vector.extract_strided_slice %41 {offsets = [0, 64], sizes = [64, 64], strides = [1, 1]} : vector<64x128xf32> to vector<64x64xf32>
    %c0_38 = arith.constant 0 : index
    %c9 = arith.constant 9 : index
    %c0_39 = arith.constant 0 : index
    %c0_40 = arith.constant 0 : index
    %47 = vector.load %arg2[%c0_38, %c9, %c0_39, %c0_40] : memref<4x16x64x64xf32, #tpu.memory_space<vmem>>, vector<1x1x64x64xf32>
    %48 = vector.shape_cast %47 : vector<1x1x64x64xf32> to vector<64x64xf32>
    %49 = vector.shape_cast %46 : vector<64x64xf32> to vector<1x1x64x64xf32>
    tpu.vector_store %arg2[%c0_38, %c9, %c0_39, %c0_40], %49 {strides = array<i32>} : memref<4x16x64x64xf32, #tpu.memory_space<vmem>>, vector<1x1x64x64xf32>,
    %c0_41 = arith.constant 0 : index
    %c0_42 = arith.constant 0 : index
    %c640 = arith.constant 640 : index
    %50 = vector.load %arg1[%c0_41, %c0_42, %c640] : memref<4x64x1024xf32, #tpu.memory_space<vmem>>, vector<1x64x128xf32>
    %51 = vector.shape_cast %50 : vector<1x64x128xf32> to vector<64x128xf32>
    %52 = vector.extract_strided_slice %51 {offsets = [0, 0], sizes = [64, 64], strides = [1, 1]} : vector<64x128xf32> to vector<64x64xf32>
    %c0_43 = arith.constant 0 : index
    %c10 = arith.constant 10 : index
    %c0_44 = arith.constant 0 : index
    %c0_45 = arith.constant 0 : index
    %53 = vector.load %arg2[%c0_43, %c10, %c0_44, %c0_45] : memref<4x16x64x64xf32, #tpu.memory_space<vmem>>, vector<1x1x64x64xf32>
    %54 = vector.shape_cast %53 : vector<1x1x64x64xf32> to vector<64x64xf32>
    %55 = vector.shape_cast %52 : vector<64x64xf32> to vector<1x1x64x64xf32>
    tpu.vector_store %arg2[%c0_43, %c10, %c0_44, %c0_45], %55 {strides = array<i32>} : memref<4x16x64x64xf32, #tpu.memory_space<vmem>>, vector<1x1x64x64xf32>,
    %56 = vector.extract_strided_slice %51 {offsets = [0, 64], sizes = [64, 64], strides = [1, 1]} : vector<64x128xf32> to vector<64x64xf32>
    %c0_46 = arith.constant 0 : index
    %c11 = arith.constant 11 : index
    %c0_47 = arith.constant 0 : index
    %c0_48 = arith.constant 0 : index
    %57 = vector.load %arg2[%c0_46, %c11, %c0_47, %c0_48] : memref<4x16x64x64xf32, #tpu.memory_space<vmem>>, vector<1x1x64x64xf32>
    %58 = vector.shape_cast %57 : vector<1x1x64x64xf32> to vector<64x64xf32>
    %59 = vector.shape_cast %56 : vector<64x64xf32> to vector<1x1x64x64xf32>
    tpu.vector_store %arg2[%c0_46, %c11, %c0_47, %c0_48], %59 {strides = array<i32>} : memref<4x16x64x64xf32, #tpu.memory_space<vmem>>, vector<1x1x64x64xf32>,
    %c0_49 = arith.constant 0 : index
    %c0_50 = arith.constant 0 : index
    %c768 = arith.constant 768 : index
    %60 = vector.load %arg1[%c0_49, %c0_50, %c768] : memref<4x64x1024xf32, #tpu.memory_space<vmem>>, vector<1x64x128xf32>
    %61 = vector.shape_cast %60 : vector<1x64x128xf32> to vector<64x128xf32>
    %62 = vector.extract_strided_slice %61 {offsets = [0, 0], sizes = [64, 64], strides = [1, 1]} : vector<64x128xf32> to vector<64x64xf32>
    %c0_51 = arith.constant 0 : index
    %c12 = arith.constant 12 : index
    %c0_52 = arith.constant 0 : index
    %c0_53 = arith.constant 0 : index
    %63 = vector.load %arg2[%c0_51, %c12, %c0_52, %c0_53] : memref<4x16x64x64xf32, #tpu.memory_space<vmem>>, vector<1x1x64x64xf32>
    %64 = vector.shape_cast %63 : vector<1x1x64x64xf32> to vector<64x64xf32>
    %65 = vector.shape_cast %62 : vector<64x64xf32> to vector<1x1x64x64xf32>
    tpu.vector_store %arg2[%c0_51, %c12, %c0_52, %c0_53], %65 {strides = array<i32>} : memref<4x16x64x64xf32, #tpu.memory_space<vmem>>, vector<1x1x64x64xf32>,
    %66 = vector.extract_strided_slice %61 {offsets = [0, 64], sizes = [64, 64], strides = [1, 1]} : vector<64x128xf32> to vector<64x64xf32>
    %c0_54 = arith.constant 0 : index
    %c13 = arith.constant 13 : index
    %c0_55 = arith.constant 0 : index
    %c0_56 = arith.constant 0 : index
    %67 = vector.load %arg2[%c0_54, %c13, %c0_55, %c0_56] : memref<4x16x64x64xf32, #tpu.memory_space<vmem>>, vector<1x1x64x64xf32>
    %68 = vector.shape_cast %67 : vector<1x1x64x64xf32> to vector<64x64xf32>
    %69 = vector.shape_cast %66 : vector<64x64xf32> to vector<1x1x64x64xf32>
    tpu.vector_store %arg2[%c0_54, %c13, %c0_55, %c0_56], %69 {strides = array<i32>} : memref<4x16x64x64xf32, #tpu.memory_space<vmem>>, vector<1x1x64x64xf32>,
    %c0_57 = arith.constant 0 : index
    %c0_58 = arith.constant 0 : index
    %c896 = arith.constant 896 : index
    %70 = vector.load %arg1[%c0_57, %c0_58, %c896] : memref<4x64x1024xf32, #tpu.memory_space<vmem>>, vector<1x64x128xf32>
    %71 = vector.shape_cast %70 : vector<1x64x128xf32> to vector<64x128xf32>
    %72 = vector.extract_strided_slice %71 {offsets = [0, 0], sizes = [64, 64], strides = [1, 1]} : vector<64x128xf32> to vector<64x64xf32>
    %c0_59 = arith.constant 0 : index
    %c14 = arith.constant 14 : index
    %c0_60 = arith.constant 0 : index
    %c0_61 = arith.constant 0 : index
    %73 = vector.load %arg2[%c0_59, %c14, %c0_60, %c0_61] : memref<4x16x64x64xf32, #tpu.memory_space<vmem>>, vector<1x1x64x64xf32>
    %74 = vector.shape_cast %73 : vector<1x1x64x64xf32> to vector<64x64xf32>
    %75 = vector.shape_cast %72 : vector<64x64xf32> to vector<1x1x64x64xf32>
    tpu.vector_store %arg2[%c0_59, %c14, %c0_60, %c0_61], %75 {strides = array<i32>} : memref<4x16x64x64xf32, #tpu.memory_space<vmem>>, vector<1x1x64x64xf32>,
    %76 = vector.extract_strided_slice %71 {offsets = [0, 64], sizes = [64, 64], strides = [1, 1]} : vector<64x128xf32> to vector<64x64xf32>
    %c0_62 = arith.constant 0 : index
    %c15 = arith.constant 15 : index
    %c0_63 = arith.constant 0 : index
    %c0_64 = arith.constant 0 : index
    %77 = vector.load %arg2[%c0_62, %c15, %c0_63, %c0_64] : memref<4x16x64x64xf32, #tpu.memory_space<vmem>>, vector<1x1x64x64xf32>
    %78 = vector.shape_cast %77 : vector<1x1x64x64xf32> to vector<64x64xf32>
    %79 = vector.shape_cast %76 : vector<64x64xf32> to vector<1x1x64x64xf32>
    tpu.vector_store %arg2[%c0_62, %c15, %c0_63, %c0_64], %79 {strides = array<i32>} : memref<4x16x64x64xf32, #tpu.memory_space<vmem>>, vector<1x1x64x64xf32>,
    %c1_65 = arith.constant 1 : index
    %c0_66 = arith.constant 0 : index
    %c0_67 = arith.constant 0 : index
    %80 = vector.load %arg1[%c1_65, %c0_66, %c0_67] : memref<4x64x1024xf32, #tpu.memory_space<vmem>>, vector<1x64x128xf32>
    %81 = vector.shape_cast %80 : vector<1x64x128xf32> to vector<64x128xf32>
    %82 = vector.extract_strided_slice %81 {offsets = [0, 0], sizes = [64, 64], strides = [1, 1]} : vector<64x128xf32> to vector<64x64xf32>
    %c1_68 = arith.constant 1 : index
    %c0_69 = arith.constant 0 : index
    %c0_70 = arith.constant 0 : index
    %c0_71 = arith.constant 0 : index
    %83 = vector.load %arg2[%c1_68, %c0_69, %c0_70, %c0_71] : memref<4x16x64x64xf32, #tpu.memory_space<vmem>>, vector<1x1x64x64xf32>
    %84 = vector.shape_cast %83 : vector<1x1x64x64xf32> to vector<64x64xf32>
    %85 = vector.shape_cast %82 : vector<64x64xf32> to vector<1x1x64x64xf32>
    tpu.vector_store %arg2[%c1_68, %c0_69, %c0_70, %c0_71], %85 {strides = array<i32>} : memref<4x16x64x64xf32, #tpu.memory_space<vmem>>, vector<1x1x64x64xf32>,
    %86 = vector.extract_strided_slice %81 {offsets = [0, 64], sizes = [64, 64], strides = [1, 1]} : vector<64x128xf32> to vector<64x64xf32>
    %c1_72 = arith.constant 1 : index
    %c1_73 = arith.constant 1 : index
    %c0_74 = arith.constant 0 : index
    %c0_75 = arith.constant 0 : index
    %87 = vector.load %arg2[%c1_72, %c1_73, %c0_74, %c0_75] : memref<4x16x64x64xf32, #tpu.memory_space<vmem>>, vector<1x1x64x64xf32>
    %88 = vector.shape_cast %87 : vector<1x1x64x64xf32> to vector<64x64xf32>
    %89 = vector.shape_cast %86 : vector<64x64xf32> to vector<1x1x64x64xf32>
    tpu.vector_store %arg2[%c1_72, %c1_73, %c0_74, %c0_75], %89 {strides = array<i32>} : memref<4x16x64x64xf32, #tpu.memory_space<vmem>>, vector<1x1x64x64xf32>,
    %c1_76 = arith.constant 1 : index
    %c0_77 = arith.constant 0 : index
    %c128_78 = arith.constant 128 : index
    %90 = vector.load %arg1[%c1_76, %c0_77, %c128_78] : memref<4x64x1024xf32, #tpu.memory_space<vmem>>, vector<1x64x128xf32>
    %91 = vector.shape_cast %90 : vector<1x64x128xf32> to vector<64x128xf32>
    %92 = vector.extract_strided_slice %91 {offsets = [0, 0], sizes = [64, 64], strides = [1, 1]} : vector<64x128xf32> to vector<64x64xf32>
    %c1_79 = arith.constant 1 : index
    %c2_80 = arith.constant 2 : index
    %c0_81 = arith.constant 0 : index
    %c0_82 = arith.constant 0 : index
    %93 = vector.load %arg2[%c1_79, %c2_80, %c0_81, %c0_82] : memref<4x16x64x64xf32, #tpu.memory_space<vmem>>, vector<1x1x64x64xf32>
    %94 = vector.shape_cast %93 : vector<1x1x64x64xf32> to vector<64x64xf32>
    %95 = vector.shape_cast %92 : vector<64x64xf32> to vector<1x1x64x64xf32>
    tpu.vector_store %arg2[%c1_79, %c2_80, %c0_81, %c0_82], %95 {strides = array<i32>} : memref<4x16x64x64xf32, #tpu.memory_space<vmem>>, vector<1x1x64x64xf32>,
    %96 = vector.extract_strided_slice %91 {offsets = [0, 64], sizes = [64, 64], strides = [1, 1]} : vector<64x128xf32> to vector<64x64xf32>
    %c1_83 = arith.constant 1 : index
    %c3_84 = arith.constant 3 : index
    %c0_85 = arith.constant 0 : index
    %c0_86 = arith.constant 0 : index
    %97 = vector.load %arg2[%c1_83, %c3_84, %c0_85, %c0_86] : memref<4x16x64x64xf32, #tpu.memory_space<vmem>>, vector<1x1x64x64xf32>
    %98 = vector.shape_cast %97 : vector<1x1x64x64xf32> to vector<64x64xf32>
    %99 = vector.shape_cast %96 : vector<64x64xf32> to vector<1x1x64x64xf32>
    tpu.vector_store %arg2[%c1_83, %c3_84, %c0_85, %c0_86], %99 {strides = array<i32>} : memref<4x16x64x64xf32, #tpu.memory_space<vmem>>, vector<1x1x64x64xf32>,
    %c1_87 = arith.constant 1 : index
    %c0_88 = arith.constant 0 : index
    %c256_89 = arith.constant 256 : index
    %100 = vector.load %arg1[%c1_87, %c0_88, %c256_89] : memref<4x64x1024xf32, #tpu.memory_space<vmem>>, vector<1x64x128xf32>
    %101 = vector.shape_cast %100 : vector<1x64x128xf32> to vector<64x128xf32>
    %102 = vector.extract_strided_slice %101 {offsets = [0, 0], sizes = [64, 64], strides = [1, 1]} : vector<64x128xf32> to vector<64x64xf32>
    %c1_90 = arith.constant 1 : index
    %c4_91 = arith.constant 4 : index
    %c0_92 = arith.constant 0 : index
    %c0_93 = arith.constant 0 : index
    %103 = vector.load %arg2[%c1_90, %c4_91, %c0_92, %c0_93] : memref<4x16x64x64xf32, #tpu.memory_space<vmem>>, vector<1x1x64x64xf32>
    %104 = vector.shape_cast %103 : vector<1x1x64x64xf32> to vector<64x64xf32>
    %105 = vector.shape_cast %102 : vector<64x64xf32> to vector<1x1x64x64xf32>
    tpu.vector_store %arg2[%c1_90, %c4_91, %c0_92, %c0_93], %105 {strides = array<i32>} : memref<4x16x64x64xf32, #tpu.memory_space<vmem>>, vector<1x1x64x64xf32>,
    %106 = vector.extract_strided_slice %101 {offsets = [0, 64], sizes = [64, 64], strides = [1, 1]} : vector<64x128xf32> to vector<64x64xf32>
    %c1_94 = arith.constant 1 : index
    %c5_95 = arith.constant 5 : index
    %c0_96 = arith.constant 0 : index
    %c0_97 = arith.constant 0 : index
    %107 = vector.load %arg2[%c1_94, %c5_95, %c0_96, %c0_97] : memref<4x16x64x64xf32, #tpu.memory_space<vmem>>, vector<1x1x64x64xf32>
    %108 = vector.shape_cast %107 : vector<1x1x64x64xf32> to vector<64x64xf32>
    %109 = vector.shape_cast %106 : vector<64x64xf32> to vector<1x1x64x64xf32>
    tpu.vector_store %arg2[%c1_94, %c5_95, %c0_96, %c0_97], %109 {strides = array<i32>} : memref<4x16x64x64xf32, #tpu.memory_space<vmem>>, vector<1x1x64x64xf32>,
    %c1_98 = arith.constant 1 : index
    %c0_99 = arith.constant 0 : index
    %c384_100 = arith.constant 384 : index
    %110 = vector.load %arg1[%c1_98, %c0_99, %c384_100] : memref<4x64x1024xf32, #tpu.memory_space<vmem>>, vector<1x64x128xf32>
    %111 = vector.shape_cast %110 : vector<1x64x128xf32> to vector<64x128xf32>
    %112 = vector.extract_strided_slice %111 {offsets = [0, 0], sizes = [64, 64], strides = [1, 1]} : vector<64x128xf32> to vector<64x64xf32>
    %c1_101 = arith.constant 1 : index
    %c6_102 = arith.constant 6 : index
    %c0_103 = arith.constant 0 : index
    %c0_104 = arith.constant 0 : index
    %113 = vector.load %arg2[%c1_101, %c6_102, %c0_103, %c0_104] : memref<4x16x64x64xf32, #tpu.memory_space<vmem>>, vector<1x1x64x64xf32>
    %114 = vector.shape_cast %113 : vector<1x1x64x64xf32> to vector<64x64xf32>
    %115 = vector.shape_cast %112 : vector<64x64xf32> to vector<1x1x64x64xf32>
    tpu.vector_store %arg2[%c1_101, %c6_102, %c0_103, %c0_104], %115 {strides = array<i32>} : memref<4x16x64x64xf32, #tpu.memory_space<vmem>>, vector<1x1x64x64xf32>,
    %116 = vector.extract_strided_slice %111 {offsets = [0, 64], sizes = [64, 64], strides = [1, 1]} : vector<64x128xf32> to vector<64x64xf32>
    %c1_105 = arith.constant 1 : index
    %c7_106 = arith.constant 7 : index
    %c0_107 = arith.constant 0 : index
    %c0_108 = arith.constant 0 : index
    %117 = vector.load %arg2[%c1_105, %c7_106, %c0_107, %c0_108] : memref<4x16x64x64xf32, #tpu.memory_space<vmem>>, vector<1x1x64x64xf32>
    %118 = vector.shape_cast %117 : vector<1x1x64x64xf32> to vector<64x64xf32>
    %119 = vector.shape_cast %116 : vector<64x64xf32> to vector<1x1x64x64xf32>
    tpu.vector_store %arg2[%c1_105, %c7_106, %c0_107, %c0_108], %119 {strides = array<i32>} : memref<4x16x64x64xf32, #tpu.memory_space<vmem>>, vector<1x1x64x64xf32>,
    %c1_109 = arith.constant 1 : index
    %c0_110 = arith.constant 0 : index
    %c512_111 = arith.constant 512 : index
    %120 = vector.load %arg1[%c1_109, %c0_110, %c512_111] : memref<4x64x1024xf32, #tpu.memory_space<vmem>>, vector<1x64x128xf32>
    %121 = vector.shape_cast %120 : vector<1x64x128xf32> to vector<64x128xf32>
    %122 = vector.extract_strided_slice %121 {offsets = [0, 0], sizes = [64, 64], strides = [1, 1]} : vector<64x128xf32> to vector<64x64xf32>
    %c1_112 = arith.constant 1 : index
    %c8_113 = arith.constant 8 : index
    %c0_114 = arith.constant 0 : index
    %c0_115 = arith.constant 0 : index
    %123 = vector.load %arg2[%c1_112, %c8_113, %c0_114, %c0_115] : memref<4x16x64x64xf32, #tpu.memory_space<vmem>>, vector<1x1x64x64xf32>
    %124 = vector.shape_cast %123 : vector<1x1x64x64xf32> to vector<64x64xf32>
    %125 = vector.shape_cast %122 : vector<64x64xf32> to vector<1x1x64x64xf32>
    tpu.vector_store %arg2[%c1_112, %c8_113, %c0_114, %c0_115], %125 {strides = array<i32>} : memref<4x16x64x64xf32, #tpu.memory_space<vmem>>, vector<1x1x64x64xf32>,
    %126 = vector.extract_strided_slice %121 {offsets = [0, 64], sizes = [64, 64], strides = [1, 1]} : vector<64x128xf32> to vector<64x64xf32>
    %c1_116 = arith.constant 1 : index
    %c9_117 = arith.constant 9 : index
    %c0_118 = arith.constant 0 : index
    %c0_119 = arith.constant 0 : index
    %127 = vector.load %arg2[%c1_116, %c9_117, %c0_118, %c0_119] : memref<4x16x64x64xf32, #tpu.memory_space<vmem>>, vector<1x1x64x64xf32>
    %128 = vector.shape_cast %127 : vector<1x1x64x64xf32> to vector<64x64xf32>
    %129 = vector.shape_cast %126 : vector<64x64xf32> to vector<1x1x64x64xf32>
    tpu.vector_store %arg2[%c1_116, %c9_117, %c0_118, %c0_119], %129 {strides = array<i32>} : memref<4x16x64x64xf32, #tpu.memory_space<vmem>>, vector<1x1x64x64xf32>,
    %c1_120 = arith.constant 1 : index
    %c0_121 = arith.constant 0 : index
    %c640_122 = arith.constant 640 : index
    %130 = vector.load %arg1[%c1_120, %c0_121, %c640_122] : memref<4x64x1024xf32, #tpu.memory_space<vmem>>, vector<1x64x128xf32>
    %131 = vector.shape_cast %130 : vector<1x64x128xf32> to vector<64x128xf32>
    %132 = vector.extract_strided_slice %131 {offsets = [0, 0], sizes = [64, 64], strides = [1, 1]} : vector<64x128xf32> to vector<64x64xf32>
    %c1_123 = arith.constant 1 : index
    %c10_124 = arith.constant 10 : index
    %c0_125 = arith.constant 0 : index
    %c0_126 = arith.constant 0 : index
    %133 = vector.load %arg2[%c1_123, %c10_124, %c0_125, %c0_126] : memref<4x16x64x64xf32, #tpu.memory_space<vmem>>, vector<1x1x64x64xf32>
    %134 = vector.shape_cast %133 : vector<1x1x64x64xf32> to vector<64x64xf32>
    %135 = vector.shape_cast %132 : vector<64x64xf32> to vector<1x1x64x64xf32>
    tpu.vector_store %arg2[%c1_123, %c10_124, %c0_125, %c0_126], %135 {strides = array<i32>} : memref<4x16x64x64xf32, #tpu.memory_space<vmem>>, vector<1x1x64x64xf32>,
    %136 = vector.extract_strided_slice %131 {offsets = [0, 64], sizes = [64, 64], strides = [1, 1]} : vector<64x128xf32> to vector<64x64xf32>
    %c1_127 = arith.constant 1 : index
    %c11_128 = arith.constant 11 : index
    %c0_129 = arith.constant 0 : index
    %c0_130 = arith.constant 0 : index
    %137 = vector.load %arg2[%c1_127, %c11_128, %c0_129, %c0_130] : memref<4x16x64x64xf32, #tpu.memory_space<vmem>>, vector<1x1x64x64xf32>
    %138 = vector.shape_cast %137 : vector<1x1x64x64xf32> to vector<64x64xf32>
    %139 = vector.shape_cast %136 : vector<64x64xf32> to vector<1x1x64x64xf32>
    tpu.vector_store %arg2[%c1_127, %c11_128, %c0_129, %c0_130], %139 {strides = array<i32>} : memref<4x16x64x64xf32, #tpu.memory_space<vmem>>, vector<1x1x64x64xf32>,
    %c1_131 = arith.constant 1 : index
    %c0_132 = arith.constant 0 : index
    %c768_133 = arith.constant 768 : index
    %140 = vector.load %arg1[%c1_131, %c0_132, %c768_133] : memref<4x64x1024xf32, #tpu.memory_space<vmem>>, vector<1x64x128xf32>
    %141 = vector.shape_cast %140 : vector<1x64x128xf32> to vector<64x128xf32>
    %142 = vector.extract_strided_slice %141 {offsets = [0, 0], sizes = [64, 64], strides = [1, 1]} : vector<64x128xf32> to vector<64x64xf32>
    %c1_134 = arith.constant 1 : index
    %c12_135 = arith.constant 12 : index
    %c0_136 = arith.constant 0 : index
    %c0_137 = arith.constant 0 : index
    %143 = vector.load %arg2[%c1_134, %c12_135, %c0_136, %c0_137] : memref<4x16x64x64xf32, #tpu.memory_space<vmem>>, vector<1x1x64x64xf32>
    %144 = vector.shape_cast %143 : vector<1x1x64x64xf32> to vector<64x64xf32>
    %145 = vector.shape_cast %142 : vector<64x64xf32> to vector<1x1x64x64xf32>
    tpu.vector_store %arg2[%c1_134, %c12_135, %c0_136, %c0_137], %145 {strides = array<i32>} : memref<4x16x64x64xf32, #tpu.memory_space<vmem>>, vector<1x1x64x64xf32>,
    %146 = vector.extract_strided_slice %141 {offsets = [0, 64], sizes = [64, 64], strides = [1, 1]} : vector<64x128xf32> to vector<64x64xf32>
    %c1_138 = arith.constant 1 : index
    %c13_139 = arith.constant 13 : index
    %c0_140 = arith.constant 0 : index
    %c0_141 = arith.constant 0 : index
    %147 = vector.load %arg2[%c1_138, %c13_139, %c0_140, %c0_141] : memref<4x16x64x64xf32, #tpu.memory_space<vmem>>, vector<1x1x64x64xf32>
    %148 = vector.shape_cast %147 : vector<1x1x64x64xf32> to vector<64x64xf32>
    %149 = vector.shape_cast %146 : vector<64x64xf32> to vector<1x1x64x64xf32>
    tpu.vector_store %arg2[%c1_138, %c13_139, %c0_140, %c0_141], %149 {strides = array<i32>} : memref<4x16x64x64xf32, #tpu.memory_space<vmem>>, vector<1x1x64x64xf32>,
    %c1_142 = arith.constant 1 : index
    %c0_143 = arith.constant 0 : index
    %c896_144 = arith.constant 896 : index
    %150 = vector.load %arg1[%c1_142, %c0_143, %c896_144] : memref<4x64x1024xf32, #tpu.memory_space<vmem>>, vector<1x64x128xf32>
    %151 = vector.shape_cast %150 : vector<1x64x128xf32> to vector<64x128xf32>
    %152 = vector.extract_strided_slice %151 {offsets = [0, 0], sizes = [64, 64], strides = [1, 1]} : vector<64x128xf32> to vector<64x64xf32>
    %c1_145 = arith.constant 1 : index
    %c14_146 = arith.constant 14 : index
    %c0_147 = arith.constant 0 : index
    %c0_148 = arith.constant 0 : index
    %153 = vector.load %arg2[%c1_145, %c14_146, %c0_147, %c0_148] : memref<4x16x64x64xf32, #tpu.memory_space<vmem>>, vector<1x1x64x64xf32>
    %154 = vector.shape_cast %153 : vector<1x1x64x64xf32> to vector<64x64xf32>
    %155 = vector.shape_cast %152 : vector<64x64xf32> to vector<1x1x64x64xf32>
    tpu.vector_store %arg2[%c1_145, %c14_146, %c0_147, %c0_148], %155 {strides = array<i32>} : memref<4x16x64x64xf32, #tpu.memory_space<vmem>>, vector<1x1x64x64xf32>,
    %156 = vector.extract_strided_slice %151 {offsets = [0, 64], sizes = [64, 64], strides = [1, 1]} : vector<64x128xf32> to vector<64x64xf32>
    %c1_149 = arith.constant 1 : index
    %c15_150 = arith.constant 15 : index
    %c0_151 = arith.constant 0 : index
    %c0_152 = arith.constant 0 : index
    %157 = vector.load %arg2[%c1_149, %c15_150, %c0_151, %c0_152] : memref<4x16x64x64xf32, #tpu.memory_space<vmem>>, vector<1x1x64x64xf32>
    %158 = vector.shape_cast %157 : vector<1x1x64x64xf32> to vector<64x64xf32>
    %159 = vector.shape_cast %156 : vector<64x64xf32> to vector<1x1x64x64xf32>
    tpu.vector_store %arg2[%c1_149, %c15_150, %c0_151, %c0_152], %159 {strides = array<i32>} : memref<4x16x64x64xf32, #tpu.memory_space<vmem>>, vector<1x1x64x64xf32>,
    %c2_153 = arith.constant 2 : index
    %c0_154 = arith.constant 0 : index
    %c0_155 = arith.constant 0 : index
    %160 = vector.load %arg1[%c2_153, %c0_154, %c0_155] : memref<4x64x1024xf32, #tpu.memory_space<vmem>>, vector<1x64x128xf32>
    %161 = vector.shape_cast %160 : vector<1x64x128xf32> to vector<64x128xf32>
    %162 = vector.extract_strided_slice %161 {offsets = [0, 0], sizes = [64, 64], strides = [1, 1]} : vector<64x128xf32> to vector<64x64xf32>
    %c2_156 = arith.constant 2 : index
    %c0_157 = arith.constant 0 : index
    %c0_158 = arith.constant 0 : index
    %c0_159 = arith.constant 0 : index
    %163 = vector.load %arg2[%c2_156, %c0_157, %c0_158, %c0_159] : memref<4x16x64x64xf32, #tpu.memory_space<vmem>>, vector<1x1x64x64xf32>
    %164 = vector.shape_cast %163 : vector<1x1x64x64xf32> to vector<64x64xf32>
    %165 = vector.shape_cast %162 : vector<64x64xf32> to vector<1x1x64x64xf32>
    tpu.vector_store %arg2[%c2_156, %c0_157, %c0_158, %c0_159], %165 {strides = array<i32>} : memref<4x16x64x64xf32, #tpu.memory_space<vmem>>, vector<1x1x64x64xf32>,
    %166 = vector.extract_strided_slice %161 {offsets = [0, 64], sizes = [64, 64], strides = [1, 1]} : vector<64x128xf32> to vector<64x64xf32>
    %c2_160 = arith.constant 2 : index
    %c1_161 = arith.constant 1 : index
    %c0_162 = arith.constant 0 : index
    %c0_163 = arith.constant 0 : index
    %167 = vector.load %arg2[%c2_160, %c1_161, %c0_162, %c0_163] : memref<4x16x64x64xf32, #tpu.memory_space<vmem>>, vector<1x1x64x64xf32>
    %168 = vector.shape_cast %167 : vector<1x1x64x64xf32> to vector<64x64xf32>
    %169 = vector.shape_cast %166 : vector<64x64xf32> to vector<1x1x64x64xf32>
    tpu.vector_store %arg2[%c2_160, %c1_161, %c0_162, %c0_163], %169 {strides = array<i32>} : memref<4x16x64x64xf32, #tpu.memory_space<vmem>>, vector<1x1x64x64xf32>,
    %c2_164 = arith.constant 2 : index
    %c0_165 = arith.constant 0 : index
    %c128_166 = arith.constant 128 : index
    %170 = vector.load %arg1[%c2_164, %c0_165, %c128_166] : memref<4x64x1024xf32, #tpu.memory_space<vmem>>, vector<1x64x128xf32>
    %171 = vector.shape_cast %170 : vector<1x64x128xf32> to vector<64x128xf32>
    %172 = vector.extract_strided_slice %171 {offsets = [0, 0], sizes = [64, 64], strides = [1, 1]} : vector<64x128xf32> to vector<64x64xf32>
    %c2_167 = arith.constant 2 : index
    %c2_168 = arith.constant 2 : index
    %c0_169 = arith.constant 0 : index
    %c0_170 = arith.constant 0 : index
    %173 = vector.load %arg2[%c2_167, %c2_168, %c0_169, %c0_170] : memref<4x16x64x64xf32, #tpu.memory_space<vmem>>, vector<1x1x64x64xf32>
    %174 = vector.shape_cast %173 : vector<1x1x64x64xf32> to vector<64x64xf32>
    %175 = vector.shape_cast %172 : vector<64x64xf32> to vector<1x1x64x64xf32>
    tpu.vector_store %arg2[%c2_167, %c2_168, %c0_169, %c0_170], %175 {strides = array<i32>} : memref<4x16x64x64xf32, #tpu.memory_space<vmem>>, vector<1x1x64x64xf32>,
    %176 = vector.extract_strided_slice %171 {offsets = [0, 64], sizes = [64, 64], strides = [1, 1]} : vector<64x128xf32> to vector<64x64xf32>
    %c2_171 = arith.constant 2 : index
    %c3_172 = arith.constant 3 : index
    %c0_173 = arith.constant 0 : index
    %c0_174 = arith.constant 0 : index
    %177 = vector.load %arg2[%c2_171, %c3_172, %c0_173, %c0_174] : memref<4x16x64x64xf32, #tpu.memory_space<vmem>>, vector<1x1x64x64xf32>
    %178 = vector.shape_cast %177 : vector<1x1x64x64xf32> to vector<64x64xf32>
    %179 = vector.shape_cast %176 : vector<64x64xf32> to vector<1x1x64x64xf32>
    tpu.vector_store %arg2[%c2_171, %c3_172, %c0_173, %c0_174], %179 {strides = array<i32>} : memref<4x16x64x64xf32, #tpu.memory_space<vmem>>, vector<1x1x64x64xf32>,
    %c2_175 = arith.constant 2 : index
    %c0_176 = arith.constant 0 : index
    %c256_177 = arith.constant 256 : index
    %180 = vector.load %arg1[%c2_175, %c0_176, %c256_177] : memref<4x64x1024xf32, #tpu.memory_space<vmem>>, vector<1x64x128xf32>
    %181 = vector.shape_cast %180 : vector<1x64x128xf32> to vector<64x128xf32>
    %182 = vector.extract_strided_slice %181 {offsets = [0, 0], sizes = [64, 64], strides = [1, 1]} : vector<64x128xf32> to vector<64x64xf32>
    %c2_178 = arith.constant 2 : index
    %c4_179 = arith.constant 4 : index
    %c0_180 = arith.constant 0 : index
    %c0_181 = arith.constant 0 : index
    %183 = vector.load %arg2[%c2_178, %c4_179, %c0_180, %c0_181] : memref<4x16x64x64xf32, #tpu.memory_space<vmem>>, vector<1x1x64x64xf32>
    %184 = vector.shape_cast %183 : vector<1x1x64x64xf32> to vector<64x64xf32>
    %185 = vector.shape_cast %182 : vector<64x64xf32> to vector<1x1x64x64xf32>
    tpu.vector_store %arg2[%c2_178, %c4_179, %c0_180, %c0_181], %185 {strides = array<i32>} : memref<4x16x64x64xf32, #tpu.memory_space<vmem>>, vector<1x1x64x64xf32>,
    %186 = vector.extract_strided_slice %181 {offsets = [0, 64], sizes = [64, 64], strides = [1, 1]} : vector<64x128xf32> to vector<64x64xf32>
    %c2_182 = arith.constant 2 : index
    %c5_183 = arith.constant 5 : index
    %c0_184 = arith.constant 0 : index
    %c0_185 = arith.constant 0 : index
    %187 = vector.load %arg2[%c2_182, %c5_183, %c0_184, %c0_185] : memref<4x16x64x64xf32, #tpu.memory_space<vmem>>, vector<1x1x64x64xf32>
    %188 = vector.shape_cast %187 : vector<1x1x64x64xf32> to vector<64x64xf32>
    %189 = vector.shape_cast %186 : vector<64x64xf32> to vector<1x1x64x64xf32>
    tpu.vector_store %arg2[%c2_182, %c5_183, %c0_184, %c0_185], %189 {strides = array<i32>} : memref<4x16x64x64xf32, #tpu.memory_space<vmem>>, vector<1x1x64x64xf32>,
    %c2_186 = arith.constant 2 : index
    %c0_187 = arith.constant 0 : index
    %c384_188 = arith.constant 384 : index
    %190 = vector.load %arg1[%c2_186, %c0_187, %c384_188] : memref<4x64x1024xf32, #tpu.memory_space<vmem>>, vector<1x64x128xf32>
    %191 = vector.shape_cast %190 : vector<1x64x128xf32> to vector<64x128xf32>
    %192 = vector.extract_strided_slice %191 {offsets = [0, 0], sizes = [64, 64], strides = [1, 1]} : vector<64x128xf32> to vector<64x64xf32>
    %c2_189 = arith.constant 2 : index
    %c6_190 = arith.constant 6 : index
    %c0_191 = arith.constant 0 : index
    %c0_192 = arith.constant 0 : index
    %193 = vector.load %arg2[%c2_189, %c6_190, %c0_191, %c0_192] : memref<4x16x64x64xf32, #tpu.memory_space<vmem>>, vector<1x1x64x64xf32>
    %194 = vector.shape_cast %193 : vector<1x1x64x64xf32> to vector<64x64xf32>
    %195 = vector.shape_cast %192 : vector<64x64xf32> to vector<1x1x64x64xf32>
    tpu.vector_store %arg2[%c2_189, %c6_190, %c0_191, %c0_192], %195 {strides = array<i32>} : memref<4x16x64x64xf32, #tpu.memory_space<vmem>>, vector<1x1x64x64xf32>,
    %196 = vector.extract_strided_slice %191 {offsets = [0, 64], sizes = [64, 64], strides = [1, 1]} : vector<64x128xf32> to vector<64x64xf32>
    %c2_193 = arith.constant 2 : index
    %c7_194 = arith.constant 7 : index
    %c0_195 = arith.constant 0 : index
    %c0_196 = arith.constant 0 : index
    %197 = vector.load %arg2[%c2_193, %c7_194, %c0_195, %c0_196] : memref<4x16x64x64xf32, #tpu.memory_space<vmem>>, vector<1x1x64x64xf32>
    %198 = vector.shape_cast %197 : vector<1x1x64x64xf32> to vector<64x64xf32>
    %199 = vector.shape_cast %196 : vector<64x64xf32> to vector<1x1x64x64xf32>
    tpu.vector_store %arg2[%c2_193, %c7_194, %c0_195, %c0_196], %199 {strides = array<i32>} : memref<4x16x64x64xf32, #tpu.memory_space<vmem>>, vector<1x1x64x64xf32>,
    %c2_197 = arith.constant 2 : index
    %c0_198 = arith.constant 0 : index
    %c512_199 = arith.constant 512 : index
    %200 = vector.load %arg1[%c2_197, %c0_198, %c512_199] : memref<4x64x1024xf32, #tpu.memory_space<vmem>>, vector<1x64x128xf32>
    %201 = vector.shape_cast %200 : vector<1x64x128xf32> to vector<64x128xf32>
    %202 = vector.extract_strided_slice %201 {offsets = [0, 0], sizes = [64, 64], strides = [1, 1]} : vector<64x128xf32> to vector<64x64xf32>
    %c2_200 = arith.constant 2 : index
    %c8_201 = arith.constant 8 : index
    %c0_202 = arith.constant 0 : index
    %c0_203 = arith.constant 0 : index
    %203 = vector.load %arg2[%c2_200, %c8_201, %c0_202, %c0_203] : memref<4x16x64x64xf32, #tpu.memory_space<vmem>>, vector<1x1x64x64xf32>
    %204 = vector.shape_cast %203 : vector<1x1x64x64xf32> to vector<64x64xf32>
    %205 = vector.shape_cast %202 : vector<64x64xf32> to vector<1x1x64x64xf32>
    tpu.vector_store %arg2[%c2_200, %c8_201, %c0_202, %c0_203], %205 {strides = array<i32>} : memref<4x16x64x64xf32, #tpu.memory_space<vmem>>, vector<1x1x64x64xf32>,
    %206 = vector.extract_strided_slice %201 {offsets = [0, 64], sizes = [64, 64], strides = [1, 1]} : vector<64x128xf32> to vector<64x64xf32>
    %c2_204 = arith.constant 2 : index
    %c9_205 = arith.constant 9 : index
    %c0_206 = arith.constant 0 : index
    %c0_207 = arith.constant 0 : index
    %207 = vector.load %arg2[%c2_204, %c9_205, %c0_206, %c0_207] : memref<4x16x64x64xf32, #tpu.memory_space<vmem>>, vector<1x1x64x64xf32>
    %208 = vector.shape_cast %207 : vector<1x1x64x64xf32> to vector<64x64xf32>
    %209 = vector.shape_cast %206 : vector<64x64xf32> to vector<1x1x64x64xf32>
    tpu.vector_store %arg2[%c2_204, %c9_205, %c0_206, %c0_207], %209 {strides = array<i32>} : memref<4x16x64x64xf32, #tpu.memory_space<vmem>>, vector<1x1x64x64xf32>,
    %c2_208 = arith.constant 2 : index
    %c0_209 = arith.constant 0 : index
    %c640_210 = arith.constant 640 : index
    %210 = vector.load %arg1[%c2_208, %c0_209, %c640_210] : memref<4x64x1024xf32, #tpu.memory_space<vmem>>, vector<1x64x128xf32>
    %211 = vector.shape_cast %210 : vector<1x64x128xf32> to vector<64x128xf32>
    %212 = vector.extract_strided_slice %211 {offsets = [0, 0], sizes = [64, 64], strides = [1, 1]} : vector<64x128xf32> to vector<64x64xf32>
    %c2_211 = arith.constant 2 : index
    %c10_212 = arith.constant 10 : index
    %c0_213 = arith.constant 0 : index
    %c0_214 = arith.constant 0 : index
    %213 = vector.load %arg2[%c2_211, %c10_212, %c0_213, %c0_214] : memref<4x16x64x64xf32, #tpu.memory_space<vmem>>, vector<1x1x64x64xf32>
    %214 = vector.shape_cast %213 : vector<1x1x64x64xf32> to vector<64x64xf32>
    %215 = vector.shape_cast %212 : vector<64x64xf32> to vector<1x1x64x64xf32>
    tpu.vector_store %arg2[%c2_211, %c10_212, %c0_213, %c0_214], %215 {strides = array<i32>} : memref<4x16x64x64xf32, #tpu.memory_space<vmem>>, vector<1x1x64x64xf32>,
    %216 = vector.extract_strided_slice %211 {offsets = [0, 64], sizes = [64, 64], strides = [1, 1]} : vector<64x128xf32> to vector<64x64xf32>
    %c2_215 = arith.constant 2 : index
    %c11_216 = arith.constant 11 : index
    %c0_217 = arith.constant 0 : index
    %c0_218 = arith.constant 0 : index
    %217 = vector.load %arg2[%c2_215, %c11_216, %c0_217, %c0_218] : memref<4x16x64x64xf32, #tpu.memory_space<vmem>>, vector<1x1x64x64xf32>
    %218 = vector.shape_cast %217 : vector<1x1x64x64xf32> to vector<64x64xf32>
    %219 = vector.shape_cast %216 : vector<64x64xf32> to vector<1x1x64x64xf32>
    tpu.vector_store %arg2[%c2_215, %c11_216, %c0_217, %c0_218], %219 {strides = array<i32>} : memref<4x16x64x64xf32, #tpu.memory_space<vmem>>, vector<1x1x64x64xf32>,
    %c2_219 = arith.constant 2 : index
    %c0_220 = arith.constant 0 : index
    %c768_221 = arith.constant 768 : index
    %220 = vector.load %arg1[%c2_219, %c0_220, %c768_221] : memref<4x64x1024xf32, #tpu.memory_space<vmem>>, vector<1x64x128xf32>
    %221 = vector.shape_cast %220 : vector<1x64x128xf32> to vector<64x128xf32>
    %222 = vector.extract_strided_slice %221 {offsets = [0, 0], sizes = [64, 64], strides = [1, 1]} : vector<64x128xf32> to vector<64x64xf32>
    %c2_222 = arith.constant 2 : index
    %c12_223 = arith.constant 12 : index
    %c0_224 = arith.constant 0 : index
    %c0_225 = arith.constant 0 : index
    %223 = vector.load %arg2[%c2_222, %c12_223, %c0_224, %c0_225] : memref<4x16x64x64xf32, #tpu.memory_space<vmem>>, vector<1x1x64x64xf32>
    %224 = vector.shape_cast %223 : vector<1x1x64x64xf32> to vector<64x64xf32>
    %225 = vector.shape_cast %222 : vector<64x64xf32> to vector<1x1x64x64xf32>
    tpu.vector_store %arg2[%c2_222, %c12_223, %c0_224, %c0_225], %225 {strides = array<i32>} : memref<4x16x64x64xf32, #tpu.memory_space<vmem>>, vector<1x1x64x64xf32>,
    %226 = vector.extract_strided_slice %221 {offsets = [0, 64], sizes = [64, 64], strides = [1, 1]} : vector<64x128xf32> to vector<64x64xf32>
    %c2_226 = arith.constant 2 : index
    %c13_227 = arith.constant 13 : index
    %c0_228 = arith.constant 0 : index
    %c0_229 = arith.constant 0 : index
    %227 = vector.load %arg2[%c2_226, %c13_227, %c0_228, %c0_229] : memref<4x16x64x64xf32, #tpu.memory_space<vmem>>, vector<1x1x64x64xf32>
    %228 = vector.shape_cast %227 : vector<1x1x64x64xf32> to vector<64x64xf32>
    %229 = vector.shape_cast %226 : vector<64x64xf32> to vector<1x1x64x64xf32>
    tpu.vector_store %arg2[%c2_226, %c13_227, %c0_228, %c0_229], %229 {strides = array<i32>} : memref<4x16x64x64xf32, #tpu.memory_space<vmem>>, vector<1x1x64x64xf32>,
    %c2_230 = arith.constant 2 : index
    %c0_231 = arith.constant 0 : index
    %c896_232 = arith.constant 896 : index
    %230 = vector.load %arg1[%c2_230, %c0_231, %c896_232] : memref<4x64x1024xf32, #tpu.memory_space<vmem>>, vector<1x64x128xf32>
    %231 = vector.shape_cast %230 : vector<1x64x128xf32> to vector<64x128xf32>
    %232 = vector.extract_strided_slice %231 {offsets = [0, 0], sizes = [64, 64], strides = [1, 1]} : vector<64x128xf32> to vector<64x64xf32>
    %c2_233 = arith.constant 2 : index
    %c14_234 = arith.constant 14 : index
    %c0_235 = arith.constant 0 : index
    %c0_236 = arith.constant 0 : index
    %233 = vector.load %arg2[%c2_233, %c14_234, %c0_235, %c0_236] : memref<4x16x64x64xf32, #tpu.memory_space<vmem>>, vector<1x1x64x64xf32>
    %234 = vector.shape_cast %233 : vector<1x1x64x64xf32> to vector<64x64xf32>
    %235 = vector.shape_cast %232 : vector<64x64xf32> to vector<1x1x64x64xf32>
    tpu.vector_store %arg2[%c2_233, %c14_234, %c0_235, %c0_236], %235 {strides = array<i32>} : memref<4x16x64x64xf32, #tpu.memory_space<vmem>>, vector<1x1x64x64xf32>,
    %236 = vector.extract_strided_slice %231 {offsets = [0, 64], sizes = [64, 64], strides = [1, 1]} : vector<64x128xf32> to vector<64x64xf32>
    %c2_237 = arith.constant 2 : index
    %c15_238 = arith.constant 15 : index
    %c0_239 = arith.constant 0 : index
    %c0_240 = arith.constant 0 : index
    %237 = vector.load %arg2[%c2_237, %c15_238, %c0_239, %c0_240] : memref<4x16x64x64xf32, #tpu.memory_space<vmem>>, vector<1x1x64x64xf32>
    %238 = vector.shape_cast %237 : vector<1x1x64x64xf32> to vector<64x64xf32>
    %239 = vector.shape_cast %236 : vector<64x64xf32> to vector<1x1x64x64xf32>
    tpu.vector_store %arg2[%c2_237, %c15_238, %c0_239, %c0_240], %239 {strides = array<i32>} : memref<4x16x64x64xf32, #tpu.memory_space<vmem>>, vector<1x1x64x64xf32>,
    %c3_241 = arith.constant 3 : index
    %c0_242 = arith.constant 0 : index
    %c0_243 = arith.constant 0 : index
    %240 = vector.load %arg1[%c3_241, %c0_242, %c0_243] : memref<4x64x1024xf32, #tpu.memory_space<vmem>>, vector<1x64x128xf32>
    %241 = vector.shape_cast %240 : vector<1x64x128xf32> to vector<64x128xf32>
    %242 = vector.extract_strided_slice %241 {offsets = [0, 0], sizes = [64, 64], strides = [1, 1]} : vector<64x128xf32> to vector<64x64xf32>
    %c3_244 = arith.constant 3 : index
    %c0_245 = arith.constant 0 : index
    %c0_246 = arith.constant 0 : index
    %c0_247 = arith.constant 0 : index
    %243 = vector.load %arg2[%c3_244, %c0_245, %c0_246, %c0_247] : memref<4x16x64x64xf32, #tpu.memory_space<vmem>>, vector<1x1x64x64xf32>
    %244 = vector.shape_cast %243 : vector<1x1x64x64xf32> to vector<64x64xf32>
    %245 = vector.shape_cast %242 : vector<64x64xf32> to vector<1x1x64x64xf32>
    tpu.vector_store %arg2[%c3_244, %c0_245, %c0_246, %c0_247], %245 {strides = array<i32>} : memref<4x16x64x64xf32, #tpu.memory_space<vmem>>, vector<1x1x64x64xf32>,
    %246 = vector.extract_strided_slice %241 {offsets = [0, 64], sizes = [64, 64], strides = [1, 1]} : vector<64x128xf32> to vector<64x64xf32>
    %c3_248 = arith.constant 3 : index
    %c1_249 = arith.constant 1 : index
    %c0_250 = arith.constant 0 : index
    %c0_251 = arith.constant 0 : index
    %247 = vector.load %arg2[%c3_248, %c1_249, %c0_250, %c0_251] : memref<4x16x64x64xf32, #tpu.memory_space<vmem>>, vector<1x1x64x64xf32>
    %248 = vector.shape_cast %247 : vector<1x1x64x64xf32> to vector<64x64xf32>
    %249 = vector.shape_cast %246 : vector<64x64xf32> to vector<1x1x64x64xf32>
    tpu.vector_store %arg2[%c3_248, %c1_249, %c0_250, %c0_251], %249 {strides = array<i32>} : memref<4x16x64x64xf32, #tpu.memory_space<vmem>>, vector<1x1x64x64xf32>,
    %c3_252 = arith.constant 3 : index
    %c0_253 = arith.constant 0 : index
    %c128_254 = arith.constant 128 : index
    %250 = vector.load %arg1[%c3_252, %c0_253, %c128_254] : memref<4x64x1024xf32, #tpu.memory_space<vmem>>, vector<1x64x128xf32>
    %251 = vector.shape_cast %250 : vector<1x64x128xf32> to vector<64x128xf32>
    %252 = vector.extract_strided_slice %251 {offsets = [0, 0], sizes = [64, 64], strides = [1, 1]} : vector<64x128xf32> to vector<64x64xf32>
    %c3_255 = arith.constant 3 : index
    %c2_256 = arith.constant 2 : index
    %c0_257 = arith.constant 0 : index
    %c0_258 = arith.constant 0 : index
    %253 = vector.load %arg2[%c3_255, %c2_256, %c0_257, %c0_258] : memref<4x16x64x64xf32, #tpu.memory_space<vmem>>, vector<1x1x64x64xf32>
    %254 = vector.shape_cast %253 : vector<1x1x64x64xf32> to vector<64x64xf32>
    %255 = vector.shape_cast %252 : vector<64x64xf32> to vector<1x1x64x64xf32>
    tpu.vector_store %arg2[%c3_255, %c2_256, %c0_257, %c0_258], %255 {strides = array<i32>} : memref<4x16x64x64xf32, #tpu.memory_space<vmem>>, vector<1x1x64x64xf32>,
    %256 = vector.extract_strided_slice %251 {offsets = [0, 64], sizes = [64, 64], strides = [1, 1]} : vector<64x128xf32> to vector<64x64xf32>
    %c3_259 = arith.constant 3 : index
    %c3_260 = arith.constant 3 : index
    %c0_261 = arith.constant 0 : index
    %c0_262 = arith.constant 0 : index
    %257 = vector.load %arg2[%c3_259, %c3_260, %c0_261, %c0_262] : memref<4x16x64x64xf32, #tpu.memory_space<vmem>>, vector<1x1x64x64xf32>
    %258 = vector.shape_cast %257 : vector<1x1x64x64xf32> to vector<64x64xf32>
    %259 = vector.shape_cast %256 : vector<64x64xf32> to vector<1x1x64x64xf32>
    tpu.vector_store %arg2[%c3_259, %c3_260, %c0_261, %c0_262], %259 {strides = array<i32>} : memref<4x16x64x64xf32, #tpu.memory_space<vmem>>, vector<1x1x64x64xf32>,
    %c3_263 = arith.constant 3 : index
    %c0_264 = arith.constant 0 : index
    %c256_265 = arith.constant 256 : index
    %260 = vector.load %arg1[%c3_263, %c0_264, %c256_265] : memref<4x64x1024xf32, #tpu.memory_space<vmem>>, vector<1x64x128xf32>
    %261 = vector.shape_cast %260 : vector<1x64x128xf32> to vector<64x128xf32>
    %262 = vector.extract_strided_slice %261 {offsets = [0, 0], sizes = [64, 64], strides = [1, 1]} : vector<64x128xf32> to vector<64x64xf32>
    %c3_266 = arith.constant 3 : index
    %c4_267 = arith.constant 4 : index
    %c0_268 = arith.constant 0 : index
    %c0_269 = arith.constant 0 : index
    %263 = vector.load %arg2[%c3_266, %c4_267, %c0_268, %c0_269] : memref<4x16x64x64xf32, #tpu.memory_space<vmem>>, vector<1x1x64x64xf32>
    %264 = vector.shape_cast %263 : vector<1x1x64x64xf32> to vector<64x64xf32>
    %265 = vector.shape_cast %262 : vector<64x64xf32> to vector<1x1x64x64xf32>
    tpu.vector_store %arg2[%c3_266, %c4_267, %c0_268, %c0_269], %265 {strides = array<i32>} : memref<4x16x64x64xf32, #tpu.memory_space<vmem>>, vector<1x1x64x64xf32>,
    %266 = vector.extract_strided_slice %261 {offsets = [0, 64], sizes = [64, 64], strides = [1, 1]} : vector<64x128xf32> to vector<64x64xf32>
    %c3_270 = arith.constant 3 : index
    %c5_271 = arith.constant 5 : index
    %c0_272 = arith.constant 0 : index
    %c0_273 = arith.constant 0 : index
    %267 = vector.load %arg2[%c3_270, %c5_271, %c0_272, %c0_273] : memref<4x16x64x64xf32, #tpu.memory_space<vmem>>, vector<1x1x64x64xf32>
    %268 = vector.shape_cast %267 : vector<1x1x64x64xf32> to vector<64x64xf32>
    %269 = vector.shape_cast %266 : vector<64x64xf32> to vector<1x1x64x64xf32>
    tpu.vector_store %arg2[%c3_270, %c5_271, %c0_272, %c0_273], %269 {strides = array<i32>} : memref<4x16x64x64xf32, #tpu.memory_space<vmem>>, vector<1x1x64x64xf32>,
    %c3_274 = arith.constant 3 : index
    %c0_275 = arith.constant 0 : index
    %c384_276 = arith.constant 384 : index
    %270 = vector.load %arg1[%c3_274, %c0_275, %c384_276] : memref<4x64x1024xf32, #tpu.memory_space<vmem>>, vector<1x64x128xf32>
    %271 = vector.shape_cast %270 : vector<1x64x128xf32> to vector<64x128xf32>
    %272 = vector.extract_strided_slice %271 {offsets = [0, 0], sizes = [64, 64], strides = [1, 1]} : vector<64x128xf32> to vector<64x64xf32>
    %c3_277 = arith.constant 3 : index
    %c6_278 = arith.constant 6 : index
    %c0_279 = arith.constant 0 : index
    %c0_280 = arith.constant 0 : index
    %273 = vector.load %arg2[%c3_277, %c6_278, %c0_279, %c0_280] : memref<4x16x64x64xf32, #tpu.memory_space<vmem>>, vector<1x1x64x64xf32>
    %274 = vector.shape_cast %273 : vector<1x1x64x64xf32> to vector<64x64xf32>
    %275 = vector.shape_cast %272 : vector<64x64xf32> to vector<1x1x64x64xf32>
    tpu.vector_store %arg2[%c3_277, %c6_278, %c0_279, %c0_280], %275 {strides = array<i32>} : memref<4x16x64x64xf32, #tpu.memory_space<vmem>>, vector<1x1x64x64xf32>,
    %276 = vector.extract_strided_slice %271 {offsets = [0, 64], sizes = [64, 64], strides = [1, 1]} : vector<64x128xf32> to vector<64x64xf32>
    %c3_281 = arith.constant 3 : index
    %c7_282 = arith.constant 7 : index
    %c0_283 = arith.constant 0 : index
    %c0_284 = arith.constant 0 : index
    %277 = vector.load %arg2[%c3_281, %c7_282, %c0_283, %c0_284] : memref<4x16x64x64xf32, #tpu.memory_space<vmem>>, vector<1x1x64x64xf32>
    %278 = vector.shape_cast %277 : vector<1x1x64x64xf32> to vector<64x64xf32>
    %279 = vector.shape_cast %276 : vector<64x64xf32> to vector<1x1x64x64xf32>
    tpu.vector_store %arg2[%c3_281, %c7_282, %c0_283, %c0_284], %279 {strides = array<i32>} : memref<4x16x64x64xf32, #tpu.memory_space<vmem>>, vector<1x1x64x64xf32>,
    %c3_285 = arith.constant 3 : index
    %c0_286 = arith.constant 0 : index
    %c512_287 = arith.constant 512 : index
    %280 = vector.load %arg1[%c3_285, %c0_286, %c512_287] : memref<4x64x1024xf32, #tpu.memory_space<vmem>>, vector<1x64x128xf32>
    %281 = vector.shape_cast %280 : vector<1x64x128xf32> to vector<64x128xf32>
    %282 = vector.extract_strided_slice %281 {offsets = [0, 0], sizes = [64, 64], strides = [1, 1]} : vector<64x128xf32> to vector<64x64xf32>
    %c3_288 = arith.constant 3 : index
    %c8_289 = arith.constant 8 : index
    %c0_290 = arith.constant 0 : index
    %c0_291 = arith.constant 0 : index
    %283 = vector.load %arg2[%c3_288, %c8_289, %c0_290, %c0_291] : memref<4x16x64x64xf32, #tpu.memory_space<vmem>>, vector<1x1x64x64xf32>
    %284 = vector.shape_cast %283 : vector<1x1x64x64xf32> to vector<64x64xf32>
    %285 = vector.shape_cast %282 : vector<64x64xf32> to vector<1x1x64x64xf32>
    tpu.vector_store %arg2[%c3_288, %c8_289, %c0_290, %c0_291], %285 {strides = array<i32>} : memref<4x16x64x64xf32, #tpu.memory_space<vmem>>, vector<1x1x64x64xf32>,
    %286 = vector.extract_strided_slice %281 {offsets = [0, 64], sizes = [64, 64], strides = [1, 1]} : vector<64x128xf32> to vector<64x64xf32>
    %c3_292 = arith.constant 3 : index
    %c9_293 = arith.constant 9 : index
    %c0_294 = arith.constant 0 : index
    %c0_295 = arith.constant 0 : index
    %287 = vector.load %arg2[%c3_292, %c9_293, %c0_294, %c0_295] : memref<4x16x64x64xf32, #tpu.memory_space<vmem>>, vector<1x1x64x64xf32>
    %288 = vector.shape_cast %287 : vector<1x1x64x64xf32> to vector<64x64xf32>
    %289 = vector.shape_cast %286 : vector<64x64xf32> to vector<1x1x64x64xf32>
    tpu.vector_store %arg2[%c3_292, %c9_293, %c0_294, %c0_295], %289 {strides = array<i32>} : memref<4x16x64x64xf32, #tpu.memory_space<vmem>>, vector<1x1x64x64xf32>,
    %c3_296 = arith.constant 3 : index
    %c0_297 = arith.constant 0 : index
    %c640_298 = arith.constant 640 : index
    %290 = vector.load %arg1[%c3_296, %c0_297, %c640_298] : memref<4x64x1024xf32, #tpu.memory_space<vmem>>, vector<1x64x128xf32>
    %291 = vector.shape_cast %290 : vector<1x64x128xf32> to vector<64x128xf32>
    %292 = vector.extract_strided_slice %291 {offsets = [0, 0], sizes = [64, 64], strides = [1, 1]} : vector<64x128xf32> to vector<64x64xf32>
    %c3_299 = arith.constant 3 : index
    %c10_300 = arith.constant 10 : index
    %c0_301 = arith.constant 0 : index
    %c0_302 = arith.constant 0 : index
    %293 = vector.load %arg2[%c3_299, %c10_300, %c0_301, %c0_302] : memref<4x16x64x64xf32, #tpu.memory_space<vmem>>, vector<1x1x64x64xf32>
    %294 = vector.shape_cast %293 : vector<1x1x64x64xf32> to vector<64x64xf32>
    %295 = vector.shape_cast %292 : vector<64x64xf32> to vector<1x1x64x64xf32>
    tpu.vector_store %arg2[%c3_299, %c10_300, %c0_301, %c0_302], %295 {strides = array<i32>} : memref<4x16x64x64xf32, #tpu.memory_space<vmem>>, vector<1x1x64x64xf32>,
    %296 = vector.extract_strided_slice %291 {offsets = [0, 64], sizes = [64, 64], strides = [1, 1]} : vector<64x128xf32> to vector<64x64xf32>
    %c3_303 = arith.constant 3 : index
    %c11_304 = arith.constant 11 : index
    %c0_305 = arith.constant 0 : index
    %c0_306 = arith.constant 0 : index
    %297 = vector.load %arg2[%c3_303, %c11_304, %c0_305, %c0_306] : memref<4x16x64x64xf32, #tpu.memory_space<vmem>>, vector<1x1x64x64xf32>
    %298 = vector.shape_cast %297 : vector<1x1x64x64xf32> to vector<64x64xf32>
    %299 = vector.shape_cast %296 : vector<64x64xf32> to vector<1x1x64x64xf32>
    tpu.vector_store %arg2[%c3_303, %c11_304, %c0_305, %c0_306], %299 {strides = array<i32>} : memref<4x16x64x64xf32, #tpu.memory_space<vmem>>, vector<1x1x64x64xf32>,
    %c3_307 = arith.constant 3 : index
    %c0_308 = arith.constant 0 : index
    %c768_309 = arith.constant 768 : index
    %300 = vector.load %arg1[%c3_307, %c0_308, %c768_309] : memref<4x64x1024xf32, #tpu.memory_space<vmem>>, vector<1x64x128xf32>
    %301 = vector.shape_cast %300 : vector<1x64x128xf32> to vector<64x128xf32>
    %302 = vector.extract_strided_slice %301 {offsets = [0, 0], sizes = [64, 64], strides = [1, 1]} : vector<64x128xf32> to vector<64x64xf32>
    %c3_310 = arith.constant 3 : index
    %c12_311 = arith.constant 12 : index
    %c0_312 = arith.constant 0 : index
    %c0_313 = arith.constant 0 : index
    %303 = vector.load %arg2[%c3_310, %c12_311, %c0_312, %c0_313] : memref<4x16x64x64xf32, #tpu.memory_space<vmem>>, vector<1x1x64x64xf32>
    %304 = vector.shape_cast %303 : vector<1x1x64x64xf32> to vector<64x64xf32>
    %305 = vector.shape_cast %302 : vector<64x64xf32> to vector<1x1x64x64xf32>
    tpu.vector_store %arg2[%c3_310, %c12_311, %c0_312, %c0_313], %305 {strides = array<i32>} : memref<4x16x64x64xf32, #tpu.memory_space<vmem>>, vector<1x1x64x64xf32>,
    %306 = vector.extract_strided_slice %301 {offsets = [0, 64], sizes = [64, 64], strides = [1, 1]} : vector<64x128xf32> to vector<64x64xf32>
    %c3_314 = arith.constant 3 : index
    %c13_315 = arith.constant 13 : index
    %c0_316 = arith.constant 0 : index
    %c0_317 = arith.constant 0 : index
    %307 = vector.load %arg2[%c3_314, %c13_315, %c0_316, %c0_317] : memref<4x16x64x64xf32, #tpu.memory_space<vmem>>, vector<1x1x64x64xf32>
    %308 = vector.shape_cast %307 : vector<1x1x64x64xf32> to vector<64x64xf32>
    %309 = vector.shape_cast %306 : vector<64x64xf32> to vector<1x1x64x64xf32>
    tpu.vector_store %arg2[%c3_314, %c13_315, %c0_316, %c0_317], %309 {strides = array<i32>} : memref<4x16x64x64xf32, #tpu.memory_space<vmem>>, vector<1x1x64x64xf32>,
    %c3_318 = arith.constant 3 : index
    %c0_319 = arith.constant 0 : index
    %c896_320 = arith.constant 896 : index
    %310 = vector.load %arg1[%c3_318, %c0_319, %c896_320] : memref<4x64x1024xf32, #tpu.memory_space<vmem>>, vector<1x64x128xf32>
    %311 = vector.shape_cast %310 : vector<1x64x128xf32> to vector<64x128xf32>
    %312 = vector.extract_strided_slice %311 {offsets = [0, 0], sizes = [64, 64], strides = [1, 1]} : vector<64x128xf32> to vector<64x64xf32>
    %c3_321 = arith.constant 3 : index
    %c14_322 = arith.constant 14 : index
    %c0_323 = arith.constant 0 : index
    %c0_324 = arith.constant 0 : index
    %313 = vector.load %arg2[%c3_321, %c14_322, %c0_323, %c0_324] : memref<4x16x64x64xf32, #tpu.memory_space<vmem>>, vector<1x1x64x64xf32>
    %314 = vector.shape_cast %313 : vector<1x1x64x64xf32> to vector<64x64xf32>
    %315 = vector.shape_cast %312 : vector<64x64xf32> to vector<1x1x64x64xf32>
    tpu.vector_store %arg2[%c3_321, %c14_322, %c0_323, %c0_324], %315 {strides = array<i32>} : memref<4x16x64x64xf32, #tpu.memory_space<vmem>>, vector<1x1x64x64xf32>,
    %316 = vector.extract_strided_slice %311 {offsets = [0, 64], sizes = [64, 64], strides = [1, 1]} : vector<64x128xf32> to vector<64x64xf32>
    %c3_325 = arith.constant 3 : index
    %c15_326 = arith.constant 15 : index
    %c0_327 = arith.constant 0 : index
    %c0_328 = arith.constant 0 : index
    %317 = vector.load %arg2[%c3_325, %c15_326, %c0_327, %c0_328] : memref<4x16x64x64xf32, #tpu.memory_space<vmem>>, vector<1x1x64x64xf32>
    %318 = vector.shape_cast %317 : vector<1x1x64x64xf32> to vector<64x64xf32>
    %319 = vector.shape_cast %316 : vector<64x64xf32> to vector<1x1x64x64xf32>
    tpu.vector_store %arg2[%c3_325, %c15_326, %c0_327, %c0_328], %319 {strides = array<i32>} : memref<4x16x64x64xf32, #tpu.memory_space<vmem>>, vector<1x1x64x64xf32>,
    return
  }
  func.func @transform_0(%arg0: i32) -> (i32, i32, i32) {
    %c0_i32 = arith.constant 0 : i32
    %c0_i32_0 = arith.constant 0 : i32
    %c0_i32_1 = arith.constant 0 : i32
    return %arg0, %c0_i32, %c0_i32_0 : i32, i32, i32
  }
  func.func @transform_1(%arg0: i32) -> (i32, i32, i32, i32) {
    %c0_i32 = arith.constant 0 : i32
    %c0_i32_0 = arith.constant 0 : i32
    %c0_i32_1 = arith.constant 0 : i32
    %c0_i32_2 = arith.constant 0 : i32
    return %arg0, %c0_i32, %c0_i32_0, %c0_i32_1 : i32, i32, i32, i32
  }
}

</mosaic_0001>

<llo_original>
// kernel: tpu_custom_call.1
$region0: #{tpu_custom_call.1}
  #allocation0 [shape = 'u32[]', space=smem, size = 0x4, offset = 0x4, fixed_abs, tag = 'smem constant byte address 0x4 - core index']
  #allocation1 [shape = 'u32[144,128]{1,0:T(1,128)}', space=vmem, size = 0x12000, scoped, tag = 'internal scratch']
  %s0 = inlined_call_operand.hbm [shape: f32[16,64,1024], index: 0, kind: input, shape index: {}]
  %s1 = inlined_call_operand.hbm [shape: f32[16,16,64,64], index: 1, kind: output, shape index: {}]
  %s2 = sld [smem:[#allocation0]]
  $region41: #{tpu_custom_call.1} parent=0
    _
  %s4 = ssub.s32 1, %s2
  %s5 = scalar_select 0, %s4, %s2
  $region1: #{tpu_custom_call.1} parent=0
    #allocation2 [shape = 'u8[2097152]{0}', space=vmem, size = 0x200000, scoped, tag = 'input window, operand 0']
    #allocation3 [shape = 's32[2]{0}', space=sflag, size = 0x8, scoped, tag = 'scoped memory for tpu_custom_call.1']
    #allocation4 [shape = 's32[2]{0}', space=sflag, size = 0x8, scoped, tag = 'scoped memory for tpu_custom_call.1']
    #allocation5 [shape = 'u8[4194304]{0}', space=vmem, size = 0x400000, scoped, tag = 'output window, operand 0']
    %6 = vsyncpa [#allocation3], 0
    %s7 = scalar_lea.sflag [#allocation3], 1
    %8 = vsyncpa %s7, 0
    %9 = vsyncpa [#allocation4], 0
    %s10 = scalar_lea.sflag [#allocation4], 1
    %11 = vsyncpa %s10, 0
    loop: start=0, step=1, limit=6
    $region2: #{tpu_custom_call.1} parent=1 // loop_pre_header
      _
    $region3: #{tpu_custom_call.1} parent=1 // loop_header
      %s13 = sphi 0, %s17
      %p14 = scmp.ge.s32.totalorder %s13, 6
      %s23 = sphi 0, %s25
      %s26 = sphi 0, %s23
      %s27 = sphi 0, %s26
      %s43 = sphi 0, %s27
      %s49 = sphi 0, %s51
      %s52 = sphi 0, %s49
      %s53 = sphi 0, %s52
      %s69 = sphi 0, %s53
    $region4: #{tpu_custom_call.1} parent=1 // loop_header_branch
      %16 = sbr.rel (%p14) target = $region8
    $region5: #{tpu_custom_call.1} parent=1 // loop_body
      %s18 = ssub.s32 %s13, 1
      %s19 = ssub.s32 %s13, 2
      %s20 = sadd.s32 %s13, 1
      %s21 = ssub.s32 %s13, %s20
      %p22 = scmp.eq.s32.totalorder %s21, 0
      %s24 = sadd.s32 %s23, 1
      %s25 = scalar_select %p22, %s23, %s24
      %p28 = pneg %p22
      %p29 = scmp.eq.s32.totalorder %s13, 3
      %p30 = por %p28, %p29
      %p31 = scmp.ne.s32.totalorder %s23, %s26
      %p32 = scmp.eq.s32.totalorder %s13, 0
      %p33 = por %p31, %p32
      %p34 = scmp.ne.s32.totalorder %s23, %s26
      %p35 = scmp.eq.s32.totalorder %s18, 3
      %p36 = por %p34, %p35
      %p37 = scmp.ne.s32.totalorder %s26, %s27
      %p38 = scmp.eq.s32.totalorder %s18, 0
      %p39 = por %p37, %p38
      %p40 = scmp.ne.s32.totalorder %s26, %s27
      %p41 = scmp.eq.s32.totalorder %s19, 3
      %p42 = por %p40, %p41
      %p44 = scmp.ne.s32.totalorder %s27, %s43
      %p45 = scmp.eq.s32.totalorder %s19, 0
      %p46 = por %p44, %p45
      %s47 = ssub.s32 %s13, %s20
      %p48 = scmp.eq.s32.totalorder %s47, 0
      %s50 = sadd.s32 %s49, 1
      %s51 = scalar_select %p48, %s49, %s50
      %p54 = pneg %p48
      %p55 = scmp.eq.s32.totalorder %s13, 3
      %p56 = por %p54, %p55
      %p57 = scmp.ne.s32.totalorder %s49, %s52
      %p58 = scmp.eq.s32.totalorder %s13, 0
      %p59 = por %p57, %p58
      %p60 = scmp.ne.s32.totalorder %s49, %s52
      %p61 = scmp.eq.s32.totalorder %s18, 3
      %p62 = por %p60, %p61
      %p63 = scmp.ne.s32.totalorder %s52, %s53
      %p64 = scmp.eq.s32.totalorder %s18, 0
      %p65 = por %p63, %p64
      %p66 = scmp.ne.s32.totalorder %s52, %s53
      %p67 = scmp.eq.s32.totalorder %s19, 3
      %p68 = por %p66, %p67
      %p70 = scmp.ne.s32.totalorder %s53, %s69
      %p71 = scmp.eq.s32.totalorder %s19, 0
      %p72 = por %p70, %p71
      %p73 = scmp.le.s32.totalorder 1, %s13
      %p74 = scmp.lt.s32.totalorder %s13, 5
      %p75 = pnand %p73, %p74
      %p76 = pneg %p75
      // Predicated region
      $region9: #{tpu_custom_call.1} parent=5 // pred_check
        _
      $region10: #{tpu_custom_call.1} parent=5 // pred_check_branch
        %78 = sbr.rel (%p75) target = $region12
      $region11: #{tpu_custom_call.1} parent=5 // pred_region
        %s79 = ssub.s32 %s13, 1
      $region12: #{tpu_custom_call.1} parent=5 // pred_fallthru
        _
      %p80 = scmp.lt.s32.totalorder %s13, 4
      // Predicated region
      $region13: #{tpu_custom_call.1} parent=5 // pred_check
        %p81 = pneg %p80
      $region14: #{tpu_custom_call.1} parent=5 // pred_check_branch
        %83 = sbr.rel (%p81) target = $region16
      $region15: #{tpu_custom_call.1} parent=5 // pred_region
        // Predicated region
        $region17: #{tpu_custom_call.1} parent=15 // pred_check
          %p84 = pneg %p33
        $region18: #{tpu_custom_call.1} parent=15 // pred_check_branch
          %86 = sbr.rel (%p84) target = $region20
        $region19: #{tpu_custom_call.1} parent=15 // pred_region
          %s87 = sand.u32 %s23, 1
          %s88 = scalar_lea.sflag [#allocation3], %s87
          %s89 = sand.u32 %s23, 1
          %s90 = smul.addr %s89, 2048
          %s91 = scalar_lea.vmem [#allocation2], %s90
          %s92 = smul.u32 4, %s13
          %s94 = ssub.s32 32768, 32768
          %95 = vsyncadd %s88, %s94
          %s96 = smul.addr %s92, 64
          %s97 = smul.addr %s96, 128
          %s98 = scalar_lea.hbm %s0, %s97
          %s99 = sshll.u32 %s91, 4
          %s100 = int_to_ptr.vmem [resolvable:$true] %s99
          %105 = dma.hbm_to_vmem [thread:$0]  %s98, 32768, %s100, %s88, 1024, 1024, 64
        $region20: #{tpu_custom_call.1} parent=15 // pred_fallthru
          _
      $region16: #{tpu_custom_call.1} parent=5 // pred_fallthru
        _
      %p106 = scmp.le.s32.totalorder 1, %s13
      %p107 = scmp.lt.s32.totalorder %s13, 5
      %p108 = pnand %p106, %p107
      %p109 = pneg %p108
      // Predicated region
      $region21: #{tpu_custom_call.1} parent=5 // pred_check
        _
      $region22: #{tpu_custom_call.1} parent=5 // pred_check_branch
        %111 = sbr.rel (%p108) target = $region24
      $region23: #{tpu_custom_call.1} parent=5 // pred_region
        %s112 = ssub.s32 %s13, 1
        %s113 = sand.u32 %s26, 1
        %s114 = scalar_lea.sflag [#allocation3], %s113
        %s115 = sand.u32 %s26, 1
        %s116 = smul.addr %s115, 2048
        %s117 = scalar_lea.vmem [#allocation2], %s116
        // Predicated region
        $region25: #{tpu_custom_call.1} parent=23 // pred_check
          %p118 = pneg %p39
        $region26: #{tpu_custom_call.1} parent=23 // pred_check_branch
          %120 = sbr.rel (%p118) target = $region28
        $region27: #{tpu_custom_call.1} parent=23 // pred_region
          %121 = dma.done %s114, 32768
        $region28: #{tpu_custom_call.1} parent=23 // pred_fallthru
          _
        %s122 = sand.u32 %s26, 1
        %s123 = scalar_lea.sflag [#allocation3], %s122
        %s124 = sand.u32 %s26, 1
        %s125 = smul.addr %s124, 2048
        %s126 = scalar_lea.vmem [#allocation2], %s125
        %p127 = pneg %p39
        %p128 = pneg %p36
        %p129 = pneg %p65
        %p130 = pneg %p62
        %s131 = sand.u32 %s52, 1
        %s132 = scalar_lea.sflag [#allocation4], %s131
        %s133 = sand.u32 %s52, 1
        %s134 = smul.addr %s133, 4096
        %s135 = scalar_lea.vmem [#allocation5], %s134
        %s136 = smul.u32 4, %s18
        %s137 = smul.u32 4, %s18
        %v138 = vld [vmem:[%s117] sm:$0xff]
        %v139 = vld [vmem:[%s117 + $0x40] sm:$0xff]
        %v140 = vld [vmem:[%s117 + $0x80] sm:$0xff]
        %v141 = vld [vmem:[%s117 + $0xc0] sm:$0xff]
        %v142 = vld [vmem:[%s117 + $0x100] sm:$0xff]
        %v143 = vld [vmem:[%s117 + $0x140] sm:$0xff]
        %v144 = vld [vmem:[%s117 + $0x180] sm:$0xff]
        %v145 = vld [vmem:[%s117 + $0x1c0] sm:$0xff]
        %vm146 = vcmask 523264
        %147 = vst.msk [vmem:[%s135] sm:$0xff] %vm146, %v138
        %148 = vst.msk [vmem:[%s135 + $0x8] sm:$0xff] %vm146, %v139
        %149 = vst.msk [vmem:[%s135 + $0x10] sm:$0xff] %vm146, %v140
        %150 = vst.msk [vmem:[%s135 + $0x18] sm:$0xff] %vm146, %v141
        %151 = vst.msk [vmem:[%s135 + $0x20] sm:$0xff] %vm146, %v142
        %152 = vst.msk [vmem:[%s135 + $0x28] sm:$0xff] %vm146, %v143
        %153 = vst.msk [vmem:[%s135 + $0x30] sm:$0xff] %vm146, %v144
        %154 = vst.msk [vmem:[%s135 + $0x38] sm:$0xff] %vm146, %v145
        %163 = vrot.lane.b32.xlu0 %v138, 64
        %v164 = vpop.permute.xlu0 %163
        %165 = vrot.lane.b32.xlu0 %v139, 64
        %v166 = vpop.permute.xlu0 %165
        %167 = vrot.lane.b32.xlu0 %v140, 64
        %v168 = vpop.permute.xlu0 %167
        %169 = vrot.lane.b32.xlu0 %v141, 64
        %v170 = vpop.permute.xlu0 %169
        %171 = vrot.lane.b32.xlu0 %v142, 64
        %v172 = vpop.permute.xlu0 %171
        %173 = vrot.lane.b32.xlu0 %v143, 64
        %v174 = vpop.permute.xlu0 %173
        %175 = vrot.lane.b32.xlu0 %v144, 64
        %v176 = vpop.permute.xlu0 %175
        %177 = vrot.lane.b32.xlu0 %v145, 64
        %v178 = vpop.permute.xlu0 %177
        %s187 = scalar_lea.vmem %s135, 64 [#allocation5]
        %188 = vst.msk [vmem:[%s187] sm:$0xff] %vm146, %v164
        %189 = vst.msk [vmem:[%s187 + $0x8] sm:$0xff] %vm146, %v166
        %190 = vst.msk [vmem:[%s187 + $0x10] sm:$0xff] %vm146, %v168
        %191 = vst.msk [vmem:[%s187 + $0x18] sm:$0xff] %vm146, %v170
        %192 = vst.msk [vmem:[%s187 + $0x20] sm:$0xff] %vm146, %v172
        %193 = vst.msk [vmem:[%s187 + $0x28] sm:$0xff] %vm146, %v174
        %194 = vst.msk [vmem:[%s187 + $0x30] sm:$0xff] %vm146, %v176
        %195 = vst.msk [vmem:[%s187 + $0x38] sm:$0xff] %vm146, %v178
        %v196 = vld [vmem:[%s117 + $0x8] sm:$0xff]
        %v197 = vld [vmem:[%s117 + $0x48] sm:$0xff]
        %v198 = vld [vmem:[%s117 + $0x88] sm:$0xff]
        %v199 = vld [vmem:[%s117 + $0xc8] sm:$0xff]
        %v200 = vld [vmem:[%s117 + $0x108] sm:$0xff]
        %v201 = vld [vmem:[%s117 + $0x148] sm:$0xff]
        %v202 = vld [vmem:[%s117 + $0x188] sm:$0xff]
        %v203 = vld [vmem:[%s117 + $0x1c8] sm:$0xff]
        %s204 = scalar_lea.vmem %s135, 128 [#allocation5]
        %205 = vst.msk [vmem:[%s204] sm:$0xff] %vm146, %v196
        %206 = vst.msk [vmem:[%s204 + $0x8] sm:$0xff] %vm146, %v197
        %207 = vst.msk [vmem:[%s204 + $0x10] sm:$0xff] %vm146, %v198
        %208 = vst.msk [vmem:[%s204 + $0x18] sm:$0xff] %vm146, %v199
        %209 = vst.msk [vmem:[%s204 + $0x20] sm:$0xff] %vm146, %v200
        %210 = vst.msk [vmem:[%s204 + $0x28] sm:$0xff] %vm146, %v201
        %211 = vst.msk [vmem:[%s204 + $0x30] sm:$0xff] %vm146, %v202
        %212 = vst.msk [vmem:[%s204 + $0x38] sm:$0xff] %vm146, %v203
        %221 = vrot.lane.b32.xlu0 %v196, 64
        %v222 = vpop.permute.xlu0 %221
        %223 = vrot.lane.b32.xlu0 %v197, 64
        %v224 = vpop.permute.xlu0 %223
        %225 = vrot.lane.b32.xlu0 %v198, 64
        %v226 = vpop.permute.xlu0 %225
        %227 = vrot.lane.b32.xlu0 %v199, 64
        %v228 = vpop.permute.xlu0 %227
        %229 = vrot.lane.b32.xlu0 %v200, 64
        %v230 = vpop.permute.xlu0 %229
        %231 = vrot.lane.b32.xlu0 %v201, 64
        %v232 = vpop.permute.xlu0 %231
        %233 = vrot.lane.b32.xlu0 %v202, 64
        %v234 = vpop.permute.xlu0 %233
        %235 = vrot.lane.b32.xlu0 %v203, 64
        %v236 = vpop.permute.xlu0 %235
        %s245 = scalar_lea.vmem %s135, 192 [#allocation5]
        %246 = vst.msk [vmem:[%s245] sm:$0xff] %vm146, %v222
        %247 = vst.msk [vmem:[%s245 + $0x8] sm:$0xff] %vm146, %v224
        %248 = vst.msk [vmem:[%s245 + $0x10] sm:$0xff] %vm146, %v226
        %249 = vst.msk [vmem:[%s245 + $0x18] sm:$0xff] %vm146, %v228
        %250 = vst.msk [vmem:[%s245 + $0x20] sm:$0xff] %vm146, %v230
        %251 = vst.msk [vmem:[%s245 + $0x28] sm:$0xff] %vm146, %v232
        %252 = vst.msk [vmem:[%s245 + $0x30] sm:$0xff] %vm146, %v234
        %253 = vst.msk [vmem:[%s245 + $0x38] sm:$0xff] %vm146, %v236
        %v254 = vld [vmem:[%s117 + $0x10] sm:$0xff]
        %v255 = vld [vmem:[%s117 + $0x50] sm:$0xff]
        %v256 = vld [vmem:[%s117 + $0x90] sm:$0xff]
        %v257 = vld [vmem:[%s117 + $0xd0] sm:$0xff]
        %v258 = vld [vmem:[%s117 + $0x110] sm:$0xff]
        %v259 = vld [vmem:[%s117 + $0x150] sm:$0xff]
        %v260 = vld [vmem:[%s117 + $0x190] sm:$0xff]
        %v261 = vld [vmem:[%s117 + $0x1d0] sm:$0xff]
        %s262 = scalar_lea.vmem %s135, 256 [#allocation5]
        %263 = vst.msk [vmem:[%s262] sm:$0xff] %vm146, %v254
        %264 = vst.msk [vmem:[%s262 + $0x8] sm:$0xff] %vm146, %v255
        %265 = vst.msk [vmem:[%s262 + $0x10] sm:$0xff] %vm146, %v256
        %266 = vst.msk [vmem:[%s262 + $0x18] sm:$0xff] %vm146, %v257
        %267 = vst.msk [vmem:[%s262 + $0x20] sm:$0xff] %vm146, %v258
        %268 = vst.msk [vmem:[%s262 + $0x28] sm:$0xff] %vm146, %v259
        %269 = vst.msk [vmem:[%s262 + $0x30] sm:$0xff] %vm146, %v260
        %270 = vst.msk [vmem:[%s262 + $0x38] sm:$0xff] %vm146, %v261
        %279 = vrot.lane.b32.xlu0 %v254, 64
        %v280 = vpop.permute.xlu0 %279
        %281 = vrot.lane.b32.xlu0 %v255, 64
        %v282 = vpop.permute.xlu0 %281
        %283 = vrot.lane.b32.xlu0 %v256, 64
        %v284 = vpop.permute.xlu0 %283
        %285 = vrot.lane.b32.xlu0 %v257, 64
        %v286 = vpop.permute.xlu0 %285
        %287 = vrot.lane.b32.xlu0 %v258, 64
        %v288 = vpop.permute.xlu0 %287
        %289 = vrot.lane.b32.xlu0 %v259, 64
        %v290 = vpop.permute.xlu0 %289
        %291 = vrot.lane.b32.xlu0 %v260, 64
        %v292 = vpop.permute.xlu0 %291
        %293 = vrot.lane.b32.xlu0 %v261, 64
        %v294 = vpop.permute.xlu0 %293
        %s303 = scalar_lea.vmem %s135, 320 [#allocation5]
        %304 = vst.msk [vmem:[%s303] sm:$0xff] %vm146, %v280
        %305 = vst.msk [vmem:[%s303 + $0x8] sm:$0xff] %vm146, %v282
        %306 = vst.msk [vmem:[%s303 + $0x10] sm:$0xff] %vm146, %v284
        %307 = vst.msk [vmem:[%s303 + $0x18] sm:$0xff] %vm146, %v286
        %308 = vst.msk [vmem:[%s303 + $0x20] sm:$0xff] %vm146, %v288
        %309 = vst.msk [vmem:[%s303 + $0x28] sm:$0xff] %vm146, %v290
        %310 = vst.msk [vmem:[%s303 + $0x30] sm:$0xff] %vm146, %v292
        %311 = vst.msk [vmem:[%s303 + $0x38] sm:$0xff] %vm146, %v294
        %v312 = vld [vmem:[%s117 + $0x18] sm:$0xff]
        %v313 = vld [vmem:[%s117 + $0x58] sm:$0xff]
        %v314 = vld [vmem:[%s117 + $0x98] sm:$0xff]
        %v315 = vld [vmem:[%s117 + $0xd8] sm:$0xff]
        %v316 = vld [vmem:[%s117 + $0x118] sm:$0xff]
        %v317 = vld [vmem:[%s117 + $0x158] sm:$0xff]
        %v318 = vld [vmem:[%s117 + $0x198] sm:$0xff]
        %v319 = vld [vmem:[%s117 + $0x1d8] sm:$0xff]
        %s320 = scalar_lea.vmem %s135, 384 [#allocation5]
        %321 = vst.msk [vmem:[%s320] sm:$0xff] %vm146, %v312
        %322 = vst.msk [vmem:[%s320 + $0x8] sm:$0xff] %vm146, %v313
        %323 = vst.msk [vmem:[%s320 + $0x10] sm:$0xff] %vm146, %v314
        %324 = vst.msk [vmem:[%s320 + $0x18] sm:$0xff] %vm146, %v315
        %325 = vst.msk [vmem:[%s320 + $0x20] sm:$0xff] %vm146, %v316
        %326 = vst.msk [vmem:[%s320 + $0x28] sm:$0xff] %vm146, %v317
        %327 = vst.msk [vmem:[%s320 + $0x30] sm:$0xff] %vm146, %v318
        %328 = vst.msk [vmem:[%s320 + $0x38] sm:$0xff] %vm146, %v319
        %337 = vrot.lane.b32.xlu0 %v312, 64
        %v338 = vpop.permute.xlu0 %337
        %339 = vrot.lane.b32.xlu0 %v313, 64
        %v340 = vpop.permute.xlu0 %339
        %341 = vrot.lane.b32.xlu0 %v314, 64
        %v342 = vpop.permute.xlu0 %341
        %343 = vrot.lane.b32.xlu0 %v315, 64
        %v344 = vpop.permute.xlu0 %343
        %345 = vrot.lane.b32.xlu0 %v316, 64
        %v346 = vpop.permute.xlu0 %345
        %347 = vrot.lane.b32.xlu0 %v317, 64
        %v348 = vpop.permute.xlu0 %347
        %349 = vrot.lane.b32.xlu0 %v318, 64
        %v350 = vpop.permute.xlu0 %349
        %351 = vrot.lane.b32.xlu0 %v319, 64
        %v352 = vpop.permute.xlu0 %351
        %s361 = scalar_lea.vmem %s135, 448 [#allocation5]
        %362 = vst.msk [vmem:[%s361] sm:$0xff] %vm146, %v338
        %363 = vst.msk [vmem:[%s361 + $0x8] sm:$0xff] %vm146, %v340
        %364 = vst.msk [vmem:[%s361 + $0x10] sm:$0xff] %vm146, %v342
        %365 = vst.msk [vmem:[%s361 + $0x18] sm:$0xff] %vm146, %v344
        %366 = vst.msk [vmem:[%s361 + $0x20] sm:$0xff] %vm146, %v346
        %367 = vst.msk [vmem:[%s361 + $0x28] sm:$0xff] %vm146, %v348
        %368 = vst.msk [vmem:[%s361 + $0x30] sm:$0xff] %vm146, %v350
        %369 = vst.msk [vmem:[%s361 + $0x38] sm:$0xff] %vm146, %v352
        %v370 = vld [vmem:[%s117 + $0x20] sm:$0xff]
        %v371 = vld [vmem:[%s117 + $0x60] sm:$0xff]
        %v372 = vld [vmem:[%s117 + $0xa0] sm:$0xff]
        %v373 = vld [vmem:[%s117 + $0xe0] sm:$0xff]
        %v374 = vld [vmem:[%s117 + $0x120] sm:$0xff]
        %v375 = vld [vmem:[%s117 + $0x160] sm:$0xff]
        %v376 = vld [vmem:[%s117 + $0x1a0] sm:$0xff]
        %v377 = vld [vmem:[%s117 + $0x1e0] sm:$0xff]
        %s378 = scalar_lea.vmem %s135, 512 [#allocation5]
        %379 = vst.msk [vmem:[%s378] sm:$0xff] %vm146, %v370
        %380 = vst.msk [vmem:[%s378 + $0x8] sm:$0xff] %vm146, %v371
        %381 = vst.msk [vmem:[%s378 + $0x10] sm:$0xff] %vm146, %v372
        %382 = vst.msk [vmem:[%s378 + $0x18] sm:$0xff] %vm146, %v373
        %383 = vst.msk [vmem:[%s378 + $0x20] sm:$0xff] %vm146, %v374
        %384 = vst.msk [vmem:[%s378 + $0x28] sm:$0xff] %vm146, %v375
        %385 = vst.msk [vmem:[%s378 + $0x30] sm:$0xff] %vm146, %v376
        %386 = vst.msk [vmem:[%s378 + $0x38] sm:$0xff] %vm146, %v377
        %395 = vrot.lane.b32.xlu0 %v370, 64
        %v396 = vpop.permute.xlu0 %395
        %397 = vrot.lane.b32.xlu0 %v371, 64
        %v398 = vpop.permute.xlu0 %397
        %399 = vrot.lane.b32.xlu0 %v372, 64
        %v400 = vpop.permute.xlu0 %399
        %401 = vrot.lane.b32.xlu0 %v373, 64
        %v402 = vpop.permute.xlu0 %401
        %403 = vrot.lane.b32.xlu0 %v374, 64
        %v404 = vpop.permute.xlu0 %403
        %405 = vrot.lane.b32.xlu0 %v375, 64
        %v406 = vpop.permute.xlu0 %405
        %407 = vrot.lane.b32.xlu0 %v376, 64
        %v408 = vpop.permute.xlu0 %407
        %409 = vrot.lane.b32.xlu0 %v377, 64
        %v410 = vpop.permute.xlu0 %409
        %s419 = scalar_lea.vmem %s135, 576 [#allocation5]
        %420 = vst.msk [vmem:[%s419] sm:$0xff] %vm146, %v396
        %421 = vst.msk [vmem:[%s419 + $0x8] sm:$0xff] %vm146, %v398
        %422 = vst.msk [vmem:[%s419 + $0x10] sm:$0xff] %vm146, %v400
        %423 = vst.msk [vmem:[%s419 + $0x18] sm:$0xff] %vm146, %v402
        %424 = vst.msk [vmem:[%s419 + $0x20] sm:$0xff] %vm146, %v404
        %425 = vst.msk [vmem:[%s419 + $0x28] sm:$0xff] %vm146, %v406
        %426 = vst.msk [vmem:[%s419 + $0x30] sm:$0xff] %vm146, %v408
        %427 = vst.msk [vmem:[%s419 + $0x38] sm:$0xff] %vm146, %v410
        %v428 = vld [vmem:[%s117 + $0x28] sm:$0xff]
        %v429 = vld [vmem:[%s117 + $0x68] sm:$0xff]
        %v430 = vld [vmem:[%s117 + $0xa8] sm:$0xff]
        %v431 = vld [vmem:[%s117 + $0xe8] sm:$0xff]
        %v432 = vld [vmem:[%s117 + $0x128] sm:$0xff]
        %v433 = vld [vmem:[%s117 + $0x168] sm:$0xff]
        %v434 = vld [vmem:[%s117 + $0x1a8] sm:$0xff]
        %v435 = vld [vmem:[%s117 + $0x1e8] sm:$0xff]
        %s436 = scalar_lea.vmem %s135, 640 [#allocation5]
        %437 = vst.msk [vmem:[%s436] sm:$0xff] %vm146, %v428
        %438 = vst.msk [vmem:[%s436 + $0x8] sm:$0xff] %vm146, %v429
        %439 = vst.msk [vmem:[%s436 + $0x10] sm:$0xff] %vm146, %v430
        %440 = vst.msk [vmem:[%s436 + $0x18] sm:$0xff] %vm146, %v431
        %441 = vst.msk [vmem:[%s436 + $0x20] sm:$0xff] %vm146, %v432
        %442 = vst.msk [vmem:[%s436 + $0x28] sm:$0xff] %vm146, %v433
        %443 = vst.msk [vmem:[%s436 + $0x30] sm:$0xff] %vm146, %v434
        %444 = vst.msk [vmem:[%s436 + $0x38] sm:$0xff] %vm146, %v435
        %453 = vrot.lane.b32.xlu0 %v428, 64
        %v454 = vpop.permute.xlu0 %453
        %455 = vrot.lane.b32.xlu0 %v429, 64
        %v456 = vpop.permute.xlu0 %455
        %457 = vrot.lane.b32.xlu0 %v430, 64
        %v458 = vpop.permute.xlu0 %457
        %459 = vrot.lane.b32.xlu0 %v431, 64
        %v460 = vpop.permute.xlu0 %459
        %461 = vrot.lane.b32.xlu0 %v432, 64
        %v462 = vpop.permute.xlu0 %461
        %463 = vrot.lane.b32.xlu0 %v433, 64
        %v464 = vpop.permute.xlu0 %463
        %465 = vrot.lane.b32.xlu0 %v434, 64
        %v466 = vpop.permute.xlu0 %465
        %467 = vrot.lane.b32.xlu0 %v435, 64
        %v468 = vpop.permute.xlu0 %467
        %s477 = scalar_lea.vmem %s135, 704 [#allocation5]
        %478 = vst.msk [vmem:[%s477] sm:$0xff] %vm146, %v454
        %479 = vst.msk [vmem:[%s477 + $0x8] sm:$0xff] %vm146, %v456
        %480 = vst.msk [vmem:[%s477 + $0x10] sm:$0xff] %vm146, %v458
        %481 = vst.msk [vmem:[%s477 + $0x18] sm:$0xff] %vm146, %v460
        %482 = vst.msk [vmem:[%s477 + $0x20] sm:$0xff] %vm146, %v462
        %483 = vst.msk [vmem:[%s477 + $0x28] sm:$0xff] %vm146, %v464
        %484 = vst.msk [vmem:[%s477 + $0x30] sm:$0xff] %vm146, %v466
        %485 = vst.msk [vmem:[%s477 + $0x38] sm:$0xff] %vm146, %v468
        %v486 = vld [vmem:[%s117 + $0x30] sm:$0xff]
        %v487 = vld [vmem:[%s117 + $0x70] sm:$0xff]
        %v488 = vld [vmem:[%s117 + $0xb0] sm:$0xff]
        %v489 = vld [vmem:[%s117 + $0xf0] sm:$0xff]
        %v490 = vld [vmem:[%s117 + $0x130] sm:$0xff]
        %v491 = vld [vmem:[%s117 + $0x170] sm:$0xff]
        %v492 = vld [vmem:[%s117 + $0x1b0] sm:$0xff]
        %v493 = vld [vmem:[%s117 + $0x1f0] sm:$0xff]
        %s494 = scalar_lea.vmem %s135, 768 [#allocation5]
        %495 = vst.msk [vmem:[%s494] sm:$0xff] %vm146, %v486
        %496 = vst.msk [vmem:[%s494 + $0x8] sm:$0xff] %vm146, %v487
        %497 = vst.msk [vmem:[%s494 + $0x10] sm:$0xff] %vm146, %v488
        %498 = vst.msk [vmem:[%s494 + $0x18] sm:$0xff] %vm146, %v489
        %499 = vst.msk [vmem:[%s494 + $0x20] sm:$0xff] %vm146, %v490
        %500 = vst.msk [vmem:[%s494 + $0x28] sm:$0xff] %vm146, %v491
        %501 = vst.msk [vmem:[%s494 + $0x30] sm:$0xff] %vm146, %v492
        %502 = vst.msk [vmem:[%s494 + $0x38] sm:$0xff] %vm146, %v493
        %511 = vrot.lane.b32.xlu0 %v486, 64
        %v512 = vpop.permute.xlu0 %511
        %513 = vrot.lane.b32.xlu0 %v487, 64
        %v514 = vpop.permute.xlu0 %513
        %515 = vrot.lane.b32.xlu0 %v488, 64
        %v516 = vpop.permute.xlu0 %515
        %517 = vrot.lane.b32.xlu0 %v489, 64
        %v518 = vpop.permute.xlu0 %517
        %519 = vrot.lane.b32.xlu0 %v490, 64
        %v520 = vpop.permute.xlu0 %519
        %521 = vrot.lane.b32.xlu0 %v491, 64
        %v522 = vpop.permute.xlu0 %521
        %523 = vrot.lane.b32.xlu0 %v492, 64
        %v524 = vpop.permute.xlu0 %523
        %525 = vrot.lane.b32.xlu0 %v493, 64
        %v526 = vpop.permute.xlu0 %525
        %s535 = scalar_lea.vmem %s135, 832 [#allocation5]
        %536 = vst.msk [vmem:[%s535] sm:$0xff] %vm146, %v512
        %537 = vst.msk [vmem:[%s535 + $0x8] sm:$0xff] %vm146, %v514
        %538 = vst.msk [vmem:[%s535 + $0x10] sm:$0xff] %vm146, %v516
        %539 = vst.msk [vmem:[%s535 + $0x18] sm:$0xff] %vm146, %v518
        %540 = vst.msk [vmem:[%s535 + $0x20] sm:$0xff] %vm146, %v520
        %541 = vst.msk [vmem:[%s535 + $0x28] sm:$0xff] %vm146, %v522
        %542 = vst.msk [vmem:[%s535 + $0x30] sm:$0xff] %vm146, %v524
        %543 = vst.msk [vmem:[%s535 + $0x38] sm:$0xff] %vm146, %v526
        %v544 = vld [vmem:[%s117 + $0x38] sm:$0xff]
        %v545 = vld [vmem:[%s117 + $0x78] sm:$0xff]
        %v546 = vld [vmem:[%s117 + $0xb8] sm:$0xff]
        %v547 = vld [vmem:[%s117 + $0xf8] sm:$0xff]
        %v548 = vld [vmem:[%s117 + $0x138] sm:$0xff]
        %v549 = vld [vmem:[%s117 + $0x178] sm:$0xff]
        %v550 = vld [vmem:[%s117 + $0x1b8] sm:$0xff]
        %v551 = vld [vmem:[%s117 + $0x1f8] sm:$0xff]
        %s552 = scalar_lea.vmem %s135, 896 [#allocation5]
        %553 = vst.msk [vmem:[%s552] sm:$0xff] %vm146, %v544
        %554 = vst.msk [vmem:[%s552 + $0x8] sm:$0xff] %vm146, %v545
        %555 = vst.msk [vmem:[%s552 + $0x10] sm:$0xff] %vm146, %v546
        %556 = vst.msk [vmem:[%s552 + $0x18] sm:$0xff] %vm146, %v547
        %557 = vst.msk [vmem:[%s552 + $0x20] sm:$0xff] %vm146, %v548
        %558 = vst.msk [vmem:[%s552 + $0x28] sm:$0xff] %vm146, %v549
        %559 = vst.msk [vmem:[%s552 + $0x30] sm:$0xff] %vm146, %v550
        %560 = vst.msk [vmem:[%s552 + $0x38] sm:$0xff] %vm146, %v551
        %569 = vrot.lane.b32.xlu0 %v544, 64
        %v570 = vpop.permute.xlu0 %569
        %571 = vrot.lane.b32.xlu0 %v545, 64
        %v572 = vpop.permute.xlu0 %571
        %573 = vrot.lane.b32.xlu0 %v546, 64
        %v574 = vpop.permute.xlu0 %573
        %575 = vrot.lane.b32.xlu0 %v547, 64
        %v576 = vpop.permute.xlu0 %575
        %577 = vrot.lane.b32.xlu0 %v548, 64
        %v578 = vpop.permute.xlu0 %577
        %579 = vrot.lane.b32.xlu0 %v549, 64
        %v580 = vpop.permute.xlu0 %579
        %581 = vrot.lane.b32.xlu0 %v550, 64
        %v582 = vpop.permute.xlu0 %581
        %583 = vrot.lane.b32.xlu0 %v551, 64
        %v584 = vpop.permute.xlu0 %583
        %s593 = scalar_lea.vmem %s135, 960 [#allocation5]
        %594 = vst.msk [vmem:[%s593] sm:$0xff] %vm146, %v570
        %595 = vst.msk [vmem:[%s593 + $0x8] sm:$0xff] %vm146, %v572
        %596 = vst.msk [vmem:[%s593 + $0x10] sm:$0xff] %vm146, %v574
        %597 = vst.msk [vmem:[%s593 + $0x18] sm:$0xff] %vm146, %v576
        %598 = vst.msk [vmem:[%s593 + $0x20] sm:$0xff] %vm146, %v578
        %599 = vst.msk [vmem:[%s593 + $0x28] sm:$0xff] %vm146, %v580
        %600 = vst.msk [vmem:[%s593 + $0x30] sm:$0xff] %vm146, %v582
        %601 = vst.msk [vmem:[%s593 + $0x38] sm:$0xff] %vm146, %v584
        %s602 = scalar_lea.vmem %s117, 512 [#allocation2]
        %v603 = vld [vmem:[%s602] sm:$0xff]
        %v604 = vld [vmem:[%s602 + $0x40] sm:$0xff]
        %v605 = vld [vmem:[%s602 + $0x80] sm:$0xff]
        %v606 = vld [vmem:[%s602 + $0xc0] sm:$0xff]
        %v607 = vld [vmem:[%s602 + $0x100] sm:$0xff]
        %v608 = vld [vmem:[%s602 + $0x140] sm:$0xff]
        %v609 = vld [vmem:[%s602 + $0x180] sm:$0xff]
        %v610 = vld [vmem:[%s602 + $0x1c0] sm:$0xff]
        %s611 = scalar_lea.vmem %s135, 1024 [#allocation5]
        %612 = vst.msk [vmem:[%s611] sm:$0xff] %vm146, %v603
        %613 = vst.msk [vmem:[%s611 + $0x8] sm:$0xff] %vm146, %v604
        %614 = vst.msk [vmem:[%s611 + $0x10] sm:$0xff] %vm146, %v605
        %615 = vst.msk [vmem:[%s611 + $0x18] sm:$0xff] %vm146, %v606
        %616 = vst.msk [vmem:[%s611 + $0x20] sm:$0xff] %vm146, %v607
        %617 = vst.msk [vmem:[%s611 + $0x28] sm:$0xff] %vm146, %v608
        %618 = vst.msk [vmem:[%s611 + $0x30] sm:$0xff] %vm146, %v609
        %619 = vst.msk [vmem:[%s611 + $0x38] sm:$0xff] %vm146, %v610
        %628 = vrot.lane.b32.xlu0 %v603, 64
        %v629 = vpop.permute.xlu0 %628
        %630 = vrot.lane.b32.xlu0 %v604, 64
        %v631 = vpop.permute.xlu0 %630
        %632 = vrot.lane.b32.xlu0 %v605, 64
        %v633 = vpop.permute.xlu0 %632
        %634 = vrot.lane.b32.xlu0 %v606, 64
        %v635 = vpop.permute.xlu0 %634
        %636 = vrot.lane.b32.xlu0 %v607, 64
        %v637 = vpop.permute.xlu0 %636
        %638 = vrot.lane.b32.xlu0 %v608, 64
        %v639 = vpop.permute.xlu0 %638
        %640 = vrot.lane.b32.xlu0 %v609, 64
        %v641 = vpop.permute.xlu0 %640
        %642 = vrot.lane.b32.xlu0 %v610, 64
        %v643 = vpop.permute.xlu0 %642
        %s652 = scalar_lea.vmem %s135, 1088 [#allocation5]
        %653 = vst.msk [vmem:[%s652] sm:$0xff] %vm146, %v629
        %654 = vst.msk [vmem:[%s652 + $0x8] sm:$0xff] %vm146, %v631
        %655 = vst.msk [vmem:[%s652 + $0x10] sm:$0xff] %vm146, %v633
        %656 = vst.msk [vmem:[%s652 + $0x18] sm:$0xff] %vm146, %v635
        %657 = vst.msk [vmem:[%s652 + $0x20] sm:$0xff] %vm146, %v637
        %658 = vst.msk [vmem:[%s652 + $0x28] sm:$0xff] %vm146, %v639
        %659 = vst.msk [vmem:[%s652 + $0x30] sm:$0xff] %vm146, %v641
        %660 = vst.msk [vmem:[%s652 + $0x38] sm:$0xff] %vm146, %v643
        %v661 = vld [vmem:[%s602 + $0x8] sm:$0xff]
        %v662 = vld [vmem:[%s602 + $0x48] sm:$0xff]
        %v663 = vld [vmem:[%s602 + $0x88] sm:$0xff]
        %v664 = vld [vmem:[%s602 + $0xc8] sm:$0xff]
        %v665 = vld [vmem:[%s602 + $0x108] sm:$0xff]
        %v666 = vld [vmem:[%s602 + $0x148] sm:$0xff]
        %v667 = vld [vmem:[%s602 + $0x188] sm:$0xff]
        %v668 = vld [vmem:[%s602 + $0x1c8] sm:$0xff]
        %s669 = scalar_lea.vmem %s135, 1152 [#allocation5]
        %670 = vst.msk [vmem:[%s669] sm:$0xff] %vm146, %v661
        %671 = vst.msk [vmem:[%s669 + $0x8] sm:$0xff] %vm146, %v662
        %672 = vst.msk [vmem:[%s669 + $0x10] sm:$0xff] %vm146, %v663
        %673 = vst.msk [vmem:[%s669 + $0x18] sm:$0xff] %vm146, %v664
        %674 = vst.msk [vmem:[%s669 + $0x20] sm:$0xff] %vm146, %v665
        %675 = vst.msk [vmem:[%s669 + $0x28] sm:$0xff] %vm146, %v666
        %676 = vst.msk [vmem:[%s669 + $0x30] sm:$0xff] %vm146, %v667
        %677 = vst.msk [vmem:[%s669 + $0x38] sm:$0xff] %vm146, %v668
        %686 = vrot.lane.b32.xlu0 %v661, 64
        %v687 = vpop.permute.xlu0 %686
        %688 = vrot.lane.b32.xlu0 %v662, 64
        %v689 = vpop.permute.xlu0 %688
        %690 = vrot.lane.b32.xlu0 %v663, 64
        %v691 = vpop.permute.xlu0 %690
        %692 = vrot.lane.b32.xlu0 %v664, 64
        %v693 = vpop.permute.xlu0 %692
        %694 = vrot.lane.b32.xlu0 %v665, 64
        %v695 = vpop.permute.xlu0 %694
        %696 = vrot.lane.b32.xlu0 %v666, 64
        %v697 = vpop.permute.xlu0 %696
        %698 = vrot.lane.b32.xlu0 %v667, 64
        %v699 = vpop.permute.xlu0 %698
        %700 = vrot.lane.b32.xlu0 %v668, 64
        %v701 = vpop.permute.xlu0 %700
        %s710 = scalar_lea.vmem %s135, 1216 [#allocation5]
        %711 = vst.msk [vmem:[%s710] sm:$0xff] %vm146, %v687
        %712 = vst.msk [vmem:[%s710 + $0x8] sm:$0xff] %vm146, %v689
        %713 = vst.msk [vmem:[%s710 + $0x10] sm:$0xff] %vm146, %v691
        %714 = vst.msk [vmem:[%s710 + $0x18] sm:$0xff] %vm146, %v693
        %715 = vst.msk [vmem:[%s710 + $0x20] sm:$0xff] %vm146, %v695
        %716 = vst.msk [vmem:[%s710 + $0x28] sm:$0xff] %vm146, %v697
        %717 = vst.msk [vmem:[%s710 + $0x30] sm:$0xff] %vm146, %v699
        %718 = vst.msk [vmem:[%s710 + $0x38] sm:$0xff] %vm146, %v701
        %v719 = vld [vmem:[%s602 + $0x10] sm:$0xff]
        %v720 = vld [vmem:[%s602 + $0x50] sm:$0xff]
        %v721 = vld [vmem:[%s602 + $0x90] sm:$0xff]
        %v722 = vld [vmem:[%s602 + $0xd0] sm:$0xff]
        %v723 = vld [vmem:[%s602 + $0x110] sm:$0xff]
        %v724 = vld [vmem:[%s602 + $0x150] sm:$0xff]
        %v725 = vld [vmem:[%s602 + $0x190] sm:$0xff]
        %v726 = vld [vmem:[%s602 + $0x1d0] sm:$0xff]
        %s727 = scalar_lea.vmem %s135, 1280 [#allocation5]
        %728 = vst.msk [vmem:[%s727] sm:$0xff] %vm146, %v719
        %729 = vst.msk [vmem:[%s727 + $0x8] sm:$0xff] %vm146, %v720
        %730 = vst.msk [vmem:[%s727 + $0x10] sm:$0xff] %vm146, %v721
        %731 = vst.msk [vmem:[%s727 + $0x18] sm:$0xff] %vm146, %v722
        %732 = vst.msk [vmem:[%s727 + $0x20] sm:$0xff] %vm146, %v723
        %733 = vst.msk [vmem:[%s727 + $0x28] sm:$0xff] %vm146, %v724
        %734 = vst.msk [vmem:[%s727 + $0x30] sm:$0xff] %vm146, %v725
        %735 = vst.msk [vmem:[%s727 + $0x38] sm:$0xff] %vm146, %v726
        %744 = vrot.lane.b32.xlu0 %v719, 64
        %v745 = vpop.permute.xlu0 %744
        %746 = vrot.lane.b32.xlu0 %v720, 64
        %v747 = vpop.permute.xlu0 %746
        %748 = vrot.lane.b32.xlu0 %v721, 64
        %v749 = vpop.permute.xlu0 %748
        %750 = vrot.lane.b32.xlu0 %v722, 64
        %v751 = vpop.permute.xlu0 %750
        %752 = vrot.lane.b32.xlu0 %v723, 64
        %v753 = vpop.permute.xlu0 %752
        %754 = vrot.lane.b32.xlu0 %v724, 64
        %v755 = vpop.permute.xlu0 %754
        %756 = vrot.lane.b32.xlu0 %v725, 64
        %v757 = vpop.permute.xlu0 %756
        %758 = vrot.lane.b32.xlu0 %v726, 64
        %v759 = vpop.permute.xlu0 %758
        %s768 = scalar_lea.vmem %s135, 1344 [#allocation5]
        %769 = vst.msk [vmem:[%s768] sm:$0xff] %vm146, %v745
        %770 = vst.msk [vmem:[%s768 + $0x8] sm:$0xff] %vm146, %v747
        %771 = vst.msk [vmem:[%s768 + $0x10] sm:$0xff] %vm146, %v749
        %772 = vst.msk [vmem:[%s768 + $0x18] sm:$0xff] %vm146, %v751
        %773 = vst.msk [vmem:[%s768 + $0x20] sm:$0xff] %vm146, %v753
        %774 = vst.msk [vmem:[%s768 + $0x28] sm:$0xff] %vm146, %v755
        %775 = vst.msk [vmem:[%s768 + $0x30] sm:$0xff] %vm146, %v757
        %776 = vst.msk [vmem:[%s768 + $0x38] sm:$0xff] %vm146, %v759
        %v777 = vld [vmem:[%s602 + $0x18] sm:$0xff]
        %v778 = vld [vmem:[%s602 + $0x58] sm:$0xff]
        %v779 = vld [vmem:[%s602 + $0x98] sm:$0xff]
        %v780 = vld [vmem:[%s602 + $0xd8] sm:$0xff]
        %v781 = vld [vmem:[%s602 + $0x118] sm:$0xff]
        %v782 = vld [vmem:[%s602 + $0x158] sm:$0xff]
        %v783 = vld [vmem:[%s602 + $0x198] sm:$0xff]
        %v784 = vld [vmem:[%s602 + $0x1d8] sm:$0xff]
        %s785 = scalar_lea.vmem %s135, 1408 [#allocation5]
        %786 = vst.msk [vmem:[%s785] sm:$0xff] %vm146, %v777
        %787 = vst.msk [vmem:[%s785 + $0x8] sm:$0xff] %vm146, %v778
        %788 = vst.msk [vmem:[%s785 + $0x10] sm:$0xff] %vm146, %v779
        %789 = vst.msk [vmem:[%s785 + $0x18] sm:$0xff] %vm146, %v780
        %790 = vst.msk [vmem:[%s785 + $0x20] sm:$0xff] %vm146, %v781
        %791 = vst.msk [vmem:[%s785 + $0x28] sm:$0xff] %vm146, %v782
        %792 = vst.msk [vmem:[%s785 + $0x30] sm:$0xff] %vm146, %v783
        %793 = vst.msk [vmem:[%s785 + $0x38] sm:$0xff] %vm146, %v784
        %802 = vrot.lane.b32.xlu0 %v777, 64
        %v803 = vpop.permute.xlu0 %802
        %804 = vrot.lane.b32.xlu0 %v778, 64
        %v805 = vpop.permute.xlu0 %804
        %806 = vrot.lane.b32.xlu0 %v779, 64
        %v807 = vpop.permute.xlu0 %806
        %808 = vrot.lane.b32.xlu0 %v780, 64
        %v809 = vpop.permute.xlu0 %808
        %810 = vrot.lane.b32.xlu0 %v781, 64
        %v811 = vpop.permute.xlu0 %810
        %812 = vrot.lane.b32.xlu0 %v782, 64
        %v813 = vpop.permute.xlu0 %812
        %814 = vrot.lane.b32.xlu0 %v783, 64
        %v815 = vpop.permute.xlu0 %814
        %816 = vrot.lane.b32.xlu0 %v784, 64
        %v817 = vpop.permute.xlu0 %816
        %s826 = scalar_lea.vmem %s135, 1472 [#allocation5]
        %827 = vst.msk [vmem:[%s826] sm:$0xff] %vm146, %v803
        %828 = vst.msk [vmem:[%s826 + $0x8] sm:$0xff] %vm146, %v805
        %829 = vst.msk [vmem:[%s826 + $0x10] sm:$0xff] %vm146, %v807
        %830 = vst.msk [vmem:[%s826 + $0x18] sm:$0xff] %vm146, %v809
        %831 = vst.msk [vmem:[%s826 + $0x20] sm:$0xff] %vm146, %v811
        %832 = vst.msk [vmem:[%s826 + $0x28] sm:$0xff] %vm146, %v813
        %833 = vst.msk [vmem:[%s826 + $0x30] sm:$0xff] %vm146, %v815
        %834 = vst.msk [vmem:[%s826 + $0x38] sm:$0xff] %vm146, %v817
        %v835 = vld [vmem:[%s602 + $0x20] sm:$0xff]
        %v836 = vld [vmem:[%s602 + $0x60] sm:$0xff]
        %v837 = vld [vmem:[%s602 + $0xa0] sm:$0xff]
        %v838 = vld [vmem:[%s602 + $0xe0] sm:$0xff]
        %v839 = vld [vmem:[%s602 + $0x120] sm:$0xff]
        %v840 = vld [vmem:[%s602 + $0x160] sm:$0xff]
        %v841 = vld [vmem:[%s602 + $0x1a0] sm:$0xff]
        %v842 = vld [vmem:[%s602 + $0x1e0] sm:$0xff]
        %s843 = scalar_lea.vmem %s135, 1536 [#allocation5]
        %844 = vst.msk [vmem:[%s843] sm:$0xff] %vm146, %v835
        %845 = vst.msk [vmem:[%s843 + $0x8] sm:$0xff] %vm146, %v836
        %846 = vst.msk [vmem:[%s843 + $0x10] sm:$0xff] %vm146, %v837
        %847 = vst.msk [vmem:[%s843 + $0x18] sm:$0xff] %vm146, %v838
        %848 = vst.msk [vmem:[%s843 + $0x20] sm:$0xff] %vm146, %v839
        %849 = vst.msk [vmem:[%s843 + $0x28] sm:$0xff] %vm146, %v840
        %850 = vst.msk [vmem:[%s843 + $0x30] sm:$0xff] %vm146, %v841
        %851 = vst.msk [vmem:[%s843 + $0x38] sm:$0xff] %vm146, %v842
        %860 = vrot.lane.b32.xlu0 %v835, 64
        %v861 = vpop.permute.xlu0 %860
        %862 = vrot.lane.b32.xlu0 %v836, 64
        %v863 = vpop.permute.xlu0 %862
        %864 = vrot.lane.b32.xlu0 %v837, 64
        %v865 = vpop.permute.xlu0 %864
        %866 = vrot.lane.b32.xlu0 %v838, 64
        %v867 = vpop.permute.xlu0 %866
        %868 = vrot.lane.b32.xlu0 %v839, 64
        %v869 = vpop.permute.xlu0 %868
        %870 = vrot.lane.b32.xlu0 %v840, 64
        %v871 = vpop.permute.xlu0 %870
        %872 = vrot.lane.b32.xlu0 %v841, 64
        %v873 = vpop.permute.xlu0 %872
        %874 = vrot.lane.b32.xlu0 %v842, 64
        %v875 = vpop.permute.xlu0 %874
        %s884 = scalar_lea.vmem %s135, 1600 [#allocation5]
        %885 = vst.msk [vmem:[%s884] sm:$0xff] %vm146, %v861
        %886 = vst.msk [vmem:[%s884 + $0x8] sm:$0xff] %vm146, %v863
        %887 = vst.msk [vmem:[%s884 + $0x10] sm:$0xff] %vm146, %v865
        %888 = vst.msk [vmem:[%s884 + $0x18] sm:$0xff] %vm146, %v867
        %889 = vst.msk [vmem:[%s884 + $0x20] sm:$0xff] %vm146, %v869
        %890 = vst.msk [vmem:[%s884 + $0x28] sm:$0xff] %vm146, %v871
        %891 = vst.msk [vmem:[%s884 + $0x30] sm:$0xff] %vm146, %v873
        %892 = vst.msk [vmem:[%s884 + $0x38] sm:$0xff] %vm146, %v875
        %v893 = vld [vmem:[%s602 + $0x28] sm:$0xff]
        %v894 = vld [vmem:[%s602 + $0x68] sm:$0xff]
        %v895 = vld [vmem:[%s602 + $0xa8] sm:$0xff]
        %v896 = vld [vmem:[%s602 + $0xe8] sm:$0xff]
        %v897 = vld [vmem:[%s602 + $0x128] sm:$0xff]
        %v898 = vld [vmem:[%s602 + $0x168] sm:$0xff]
        %v899 = vld [vmem:[%s602 + $0x1a8] sm:$0xff]
        %v900 = vld [vmem:[%s602 + $0x1e8] sm:$0xff]
        %s901 = scalar_lea.vmem %s135, 1664 [#allocation5]
        %902 = vst.msk [vmem:[%s901] sm:$0xff] %vm146, %v893
        %903 = vst.msk [vmem:[%s901 + $0x8] sm:$0xff] %vm146, %v894
        %904 = vst.msk [vmem:[%s901 + $0x10] sm:$0xff] %vm146, %v895
        %905 = vst.msk [vmem:[%s901 + $0x18] sm:$0xff] %vm146, %v896
        %906 = vst.msk [vmem:[%s901 + $0x20] sm:$0xff] %vm146, %v897
        %907 = vst.msk [vmem:[%s901 + $0x28] sm:$0xff] %vm146, %v898
        %908 = vst.msk [vmem:[%s901 + $0x30] sm:$0xff] %vm146, %v899
        %909 = vst.msk [vmem:[%s901 + $0x38] sm:$0xff] %vm146, %v900
        %918 = vrot.lane.b32.xlu0 %v893, 64
        %v919 = vpop.permute.xlu0 %918
        %920 = vrot.lane.b32.xlu0 %v894, 64
        %v921 = vpop.permute.xlu0 %920
        %922 = vrot.lane.b32.xlu0 %v895, 64
        %v923 = vpop.permute.xlu0 %922
        %924 = vrot.lane.b32.xlu0 %v896, 64
        %v925 = vpop.permute.xlu0 %924
        %926 = vrot.lane.b32.xlu0 %v897, 64
        %v927 = vpop.permute.xlu0 %926
        %928 = vrot.lane.b32.xlu0 %v898, 64
        %v929 = vpop.permute.xlu0 %928
        %930 = vrot.lane.b32.xlu0 %v899, 64
        %v931 = vpop.permute.xlu0 %930
        %932 = vrot.lane.b32.xlu0 %v900, 64
        %v933 = vpop.permute.xlu0 %932
        %s942 = scalar_lea.vmem %s135, 1728 [#allocation5]
        %943 = vst.msk [vmem:[%s942] sm:$0xff] %vm146, %v919
        %944 = vst.msk [vmem:[%s942 + $0x8] sm:$0xff] %vm146, %v921
        %945 = vst.msk [vmem:[%s942 + $0x10] sm:$0xff] %vm146, %v923
        %946 = vst.msk [vmem:[%s942 + $0x18] sm:$0xff] %vm146, %v925
        %947 = vst.msk [vmem:[%s942 + $0x20] sm:$0xff] %vm146, %v927
        %948 = vst.msk [vmem:[%s942 + $0x28] sm:$0xff] %vm146, %v929
        %949 = vst.msk [vmem:[%s942 + $0x30] sm:$0xff] %vm146, %v931
        %950 = vst.msk [vmem:[%s942 + $0x38] sm:$0xff] %vm146, %v933
        %v951 = vld [vmem:[%s602 + $0x30] sm:$0xff]
        %v952 = vld [vmem:[%s602 + $0x70] sm:$0xff]
        %v953 = vld [vmem:[%s602 + $0xb0] sm:$0xff]
        %v954 = vld [vmem:[%s602 + $0xf0] sm:$0xff]
        %v955 = vld [vmem:[%s602 + $0x130] sm:$0xff]
        %v956 = vld [vmem:[%s602 + $0x170] sm:$0xff]
        %v957 = vld [vmem:[%s602 + $0x1b0] sm:$0xff]
        %v958 = vld [vmem:[%s602 + $0x1f0] sm:$0xff]
        %s959 = scalar_lea.vmem %s135, 1792 [#allocation5]
        %960 = vst.msk [vmem:[%s959] sm:$0xff] %vm146, %v951
        %961 = vst.msk [vmem:[%s959 + $0x8] sm:$0xff] %vm146, %v952
        %962 = vst.msk [vmem:[%s959 + $0x10] sm:$0xff] %vm146, %v953
        %963 = vst.msk [vmem:[%s959 + $0x18] sm:$0xff] %vm146, %v954
        %964 = vst.msk [vmem:[%s959 + $0x20] sm:$0xff] %vm146, %v955
        %965 = vst.msk [vmem:[%s959 + $0x28] sm:$0xff] %vm146, %v956
        %966 = vst.msk [vmem:[%s959 + $0x30] sm:$0xff] %vm146, %v957
        %967 = vst.msk [vmem:[%s959 + $0x38] sm:$0xff] %vm146, %v958
        %976 = vrot.lane.b32.xlu0 %v951, 64
        %v977 = vpop.permute.xlu0 %976
        %978 = vrot.lane.b32.xlu0 %v952, 64
        %v979 = vpop.permute.xlu0 %978
        %980 = vrot.lane.b32.xlu0 %v953, 64
        %v981 = vpop.permute.xlu0 %980
        %982 = vrot.lane.b32.xlu0 %v954, 64
        %v983 = vpop.permute.xlu0 %982
        %984 = vrot.lane.b32.xlu0 %v955, 64
        %v985 = vpop.permute.xlu0 %984
        %986 = vrot.lane.b32.xlu0 %v956, 64
        %v987 = vpop.permute.xlu0 %986
        %988 = vrot.lane.b32.xlu0 %v957, 64
        %v989 = vpop.permute.xlu0 %988
        %990 = vrot.lane.b32.xlu0 %v958, 64
        %v991 = vpop.permute.xlu0 %990
        %s1000 = scalar_lea.vmem %s135, 1856 [#allocation5]
        %1001 = vst.msk [vmem:[%s1000] sm:$0xff] %vm146, %v977
        %1002 = vst.msk [vmem:[%s1000 + $0x8] sm:$0xff] %vm146, %v979
        %1003 = vst.msk [vmem:[%s1000 + $0x10] sm:$0xff] %vm146, %v981
        %1004 = vst.msk [vmem:[%s1000 + $0x18] sm:$0xff] %vm146, %v983
        %1005 = vst.msk [vmem:[%s1000 + $0x20] sm:$0xff] %vm146, %v985
        %1006 = vst.msk [vmem:[%s1000 + $0x28] sm:$0xff] %vm146, %v987
        %1007 = vst.msk [vmem:[%s1000 + $0x30] sm:$0xff] %vm146, %v989
        %1008 = vst.msk [vmem:[%s1000 + $0x38] sm:$0xff] %vm146, %v991
        %v1009 = vld [vmem:[%s602 + $0x38] sm:$0xff]
        %v1010 = vld [vmem:[%s602 + $0x78] sm:$0xff]
        %v1011 = vld [vmem:[%s602 + $0xb8] sm:$0xff]
        %v1012 = vld [vmem:[%s602 + $0xf8] sm:$0xff]
        %v1013 = vld [vmem:[%s602 + $0x138] sm:$0xff]
        %v1014 = vld [vmem:[%s602 + $0x178] sm:$0xff]
        %v1015 = vld [vmem:[%s602 + $0x1b8] sm:$0xff]
        %v1016 = vld [vmem:[%s602 + $0x1f8] sm:$0xff]
        %s1017 = scalar_lea.vmem %s135, 1920 [#allocation5]
        %1018 = vst.msk [vmem:[%s1017] sm:$0xff] %vm146, %v1009
        %1019 = vst.msk [vmem:[%s1017 + $0x8] sm:$0xff] %vm146, %v1010
        %1020 = vst.msk [vmem:[%s1017 + $0x10] sm:$0xff] %vm146, %v1011
        %1021 = vst.msk [vmem:[%s1017 + $0x18] sm:$0xff] %vm146, %v1012
        %1022 = vst.msk [vmem:[%s1017 + $0x20] sm:$0xff] %vm146, %v1013
        %1023 = vst.msk [vmem:[%s1017 + $0x28] sm:$0xff] %vm146, %v1014
        %1024 = vst.msk [vmem:[%s1017 + $0x30] sm:$0xff] %vm146, %v1015
        %1025 = vst.msk [vmem:[%s1017 + $0x38] sm:$0xff] %vm146, %v1016
        %1034 = vrot.lane.b32.xlu0 %v1009, 64
        %v1035 = vpop.permute.xlu0 %1034
        %1036 = vrot.lane.b32.xlu0 %v1010, 64
        %v1037 = vpop.permute.xlu0 %1036
        %1038 = vrot.lane.b32.xlu0 %v1011, 64
        %v1039 = vpop.permute.xlu0 %1038
        %1040 = vrot.lane.b32.xlu0 %v1012, 64
        %v1041 = vpop.permute.xlu0 %1040
        %1042 = vrot.lane.b32.xlu0 %v1013, 64
        %v1043 = vpop.permute.xlu0 %1042
        %1044 = vrot.lane.b32.xlu0 %v1014, 64
        %v1045 = vpop.permute.xlu0 %1044
        %1046 = vrot.lane.b32.xlu0 %v1015, 64
        %v1047 = vpop.permute.xlu0 %1046
        %1048 = vrot.lane.b32.xlu0 %v1016, 64
        %v1049 = vpop.permute.xlu0 %1048
        %s1058 = scalar_lea.vmem %s135, 1984 [#allocation5]
        %1059 = vst.msk [vmem:[%s1058] sm:$0xff] %vm146, %v1035
        %1060 = vst.msk [vmem:[%s1058 + $0x8] sm:$0xff] %vm146, %v1037
        %1061 = vst.msk [vmem:[%s1058 + $0x10] sm:$0xff] %vm146, %v1039
        %1062 = vst.msk [vmem:[%s1058 + $0x18] sm:$0xff] %vm146, %v1041
        %1063 = vst.msk [vmem:[%s1058 + $0x20] sm:$0xff] %vm146, %v1043
        %1064 = vst.msk [vmem:[%s1058 + $0x28] sm:$0xff] %vm146, %v1045
        %1065 = vst.msk [vmem:[%s1058 + $0x30] sm:$0xff] %vm146, %v1047
        %1066 = vst.msk [vmem:[%s1058 + $0x38] sm:$0xff] %vm146, %v1049
        %s1067 = scalar_lea.vmem %s117, 1024 [#allocation2]
        %v1068 = vld [vmem:[%s1067] sm:$0xff]
        %v1069 = vld [vmem:[%s1067 + $0x40] sm:$0xff]
        %v1070 = vld [vmem:[%s1067 + $0x80] sm:$0xff]
        %v1071 = vld [vmem:[%s1067 + $0xc0] sm:$0xff]
        %v1072 = vld [vmem:[%s1067 + $0x100] sm:$0xff]
        %v1073 = vld [vmem:[%s1067 + $0x140] sm:$0xff]
        %v1074 = vld [vmem:[%s1067 + $0x180] sm:$0xff]
        %v1075 = vld [vmem:[%s1067 + $0x1c0] sm:$0xff]
        %s1076 = scalar_lea.vmem %s135, 2048 [#allocation5]
        %1077 = vst.msk [vmem:[%s1076] sm:$0xff] %vm146, %v1068
        %1078 = vst.msk [vmem:[%s1076 + $0x8] sm:$0xff] %vm146, %v1069
        %1079 = vst.msk [vmem:[%s1076 + $0x10] sm:$0xff] %vm146, %v1070
        %1080 = vst.msk [vmem:[%s1076 + $0x18] sm:$0xff] %vm146, %v1071
        %1081 = vst.msk [vmem:[%s1076 + $0x20] sm:$0xff] %vm146, %v1072
        %1082 = vst.msk [vmem:[%s1076 + $0x28] sm:$0xff] %vm146, %v1073
        %1083 = vst.msk [vmem:[%s1076 + $0x30] sm:$0xff] %vm146, %v1074
        %1084 = vst.msk [vmem:[%s1076 + $0x38] sm:$0xff] %vm146, %v1075
        %1093 = vrot.lane.b32.xlu0 %v1068, 64
        %v1094 = vpop.permute.xlu0 %1093
        %1095 = vrot.lane.b32.xlu0 %v1069, 64
        %v1096 = vpop.permute.xlu0 %1095
        %1097 = vrot.lane.b32.xlu0 %v1070, 64
        %v1098 = vpop.permute.xlu0 %1097
        %1099 = vrot.lane.b32.xlu0 %v1071, 64
        %v1100 = vpop.permute.xlu0 %1099
        %1101 = vrot.lane.b32.xlu0 %v1072, 64
        %v1102 = vpop.permute.xlu0 %1101
        %1103 = vrot.lane.b32.xlu0 %v1073, 64
        %v1104 = vpop.permute.xlu0 %1103
        %1105 = vrot.lane.b32.xlu0 %v1074, 64
        %v1106 = vpop.permute.xlu0 %1105
        %1107 = vrot.lane.b32.xlu0 %v1075, 64
        %v1108 = vpop.permute.xlu0 %1107
        %s1117 = scalar_lea.vmem %s135, 2112 [#allocation5]
        %1118 = vst.msk [vmem:[%s1117] sm:$0xff] %vm146, %v1094
        %1119 = vst.msk [vmem:[%s1117 + $0x8] sm:$0xff] %vm146, %v1096
        %1120 = vst.msk [vmem:[%s1117 + $0x10] sm:$0xff] %vm146, %v1098
        %1121 = vst.msk [vmem:[%s1117 + $0x18] sm:$0xff] %vm146, %v1100
        %1122 = vst.msk [vmem:[%s1117 + $0x20] sm:$0xff] %vm146, %v1102
        %1123 = vst.msk [vmem:[%s1117 + $0x28] sm:$0xff] %vm146, %v1104
        %1124 = vst.msk [vmem:[%s1117 + $0x30] sm:$0xff] %vm146, %v1106
        %1125 = vst.msk [vmem:[%s1117 + $0x38] sm:$0xff] %vm146, %v1108
        %v1126 = vld [vmem:[%s1067 + $0x8] sm:$0xff]
        %v1127 = vld [vmem:[%s1067 + $0x48] sm:$0xff]
        %v1128 = vld [vmem:[%s1067 + $0x88] sm:$0xff]
        %v1129 = vld [vmem:[%s1067 + $0xc8] sm:$0xff]
        %v1130 = vld [vmem:[%s1067 + $0x108] sm:$0xff]
        %v1131 = vld [vmem:[%s1067 + $0x148] sm:$0xff]
        %v1132 = vld [vmem:[%s1067 + $0x188] sm:$0xff]
        %v1133 = vld [vmem:[%s1067 + $0x1c8] sm:$0xff]
        %s1134 = scalar_lea.vmem %s135, 2176 [#allocation5]
        %1135 = vst.msk [vmem:[%s1134] sm:$0xff] %vm146, %v1126
        %1136 = vst.msk [vmem:[%s1134 + $0x8] sm:$0xff] %vm146, %v1127
        %1137 = vst.msk [vmem:[%s1134 + $0x10] sm:$0xff] %vm146, %v1128
        %1138 = vst.msk [vmem:[%s1134 + $0x18] sm:$0xff] %vm146, %v1129
        %1139 = vst.msk [vmem:[%s1134 + $0x20] sm:$0xff] %vm146, %v1130
        %1140 = vst.msk [vmem:[%s1134 + $0x28] sm:$0xff] %vm146, %v1131
        %1141 = vst.msk [vmem:[%s1134 + $0x30] sm:$0xff] %vm146, %v1132
        %1142 = vst.msk [vmem:[%s1134 + $0x38] sm:$0xff] %vm146, %v1133
        %1151 = vrot.lane.b32.xlu0 %v1126, 64
        %v1152 = vpop.permute.xlu0 %1151
        %1153 = vrot.lane.b32.xlu0 %v1127, 64
        %v1154 = vpop.permute.xlu0 %1153
        %1155 = vrot.lane.b32.xlu0 %v1128, 64
        %v1156 = vpop.permute.xlu0 %1155
        %1157 = vrot.lane.b32.xlu0 %v1129, 64
        %v1158 = vpop.permute.xlu0 %1157
        %1159 = vrot.lane.b32.xlu0 %v1130, 64
        %v1160 = vpop.permute.xlu0 %1159
        %1161 = vrot.lane.b32.xlu0 %v1131, 64
        %v1162 = vpop.permute.xlu0 %1161
        %1163 = vrot.lane.b32.xlu0 %v1132, 64
        %v1164 = vpop.permute.xlu0 %1163
        %1165 = vrot.lane.b32.xlu0 %v1133, 64
        %v1166 = vpop.permute.xlu0 %1165
        %s1175 = scalar_lea.vmem %s135, 2240 [#allocation5]
        %1176 = vst.msk [vmem:[%s1175] sm:$0xff] %vm146, %v1152
        %1177 = vst.msk [vmem:[%s1175 + $0x8] sm:$0xff] %vm146, %v1154
        %1178 = vst.msk [vmem:[%s1175 + $0x10] sm:$0xff] %vm146, %v1156
        %1179 = vst.msk [vmem:[%s1175 + $0x18] sm:$0xff] %vm146, %v1158
        %1180 = vst.msk [vmem:[%s1175 + $0x20] sm:$0xff] %vm146, %v1160
        %1181 = vst.msk [vmem:[%s1175 + $0x28] sm:$0xff] %vm146, %v1162
        %1182 = vst.msk [vmem:[%s1175 + $0x30] sm:$0xff] %vm146, %v1164
        %1183 = vst.msk [vmem:[%s1175 + $0x38] sm:$0xff] %vm146, %v1166
        %v1184 = vld [vmem:[%s1067 + $0x10] sm:$0xff]
        %v1185 = vld [vmem:[%s1067 + $0x50] sm:$0xff]
        %v1186 = vld [vmem:[%s1067 + $0x90] sm:$0xff]
        %v1187 = vld [vmem:[%s1067 + $0xd0] sm:$0xff]
        %v1188 = vld [vmem:[%s1067 + $0x110] sm:$0xff]
        %v1189 = vld [vmem:[%s1067 + $0x150] sm:$0xff]
        %v1190 = vld [vmem:[%s1067 + $0x190] sm:$0xff]
        %v1191 = vld [vmem:[%s1067 + $0x1d0] sm:$0xff]
        %s1192 = scalar_lea.vmem %s135, 2304 [#allocation5]
        %1193 = vst.msk [vmem:[%s1192] sm:$0xff] %vm146, %v1184
        %1194 = vst.msk [vmem:[%s1192 + $0x8] sm:$0xff] %vm146, %v1185
        %1195 = vst.msk [vmem:[%s1192 + $0x10] sm:$0xff] %vm146, %v1186
        %1196 = vst.msk [vmem:[%s1192 + $0x18] sm:$0xff] %vm146, %v1187
        %1197 = vst.msk [vmem:[%s1192 + $0x20] sm:$0xff] %vm146, %v1188
        %1198 = vst.msk [vmem:[%s1192 + $0x28] sm:$0xff] %vm146, %v1189
        %1199 = vst.msk [vmem:[%s1192 + $0x30] sm:$0xff] %vm146, %v1190
        %1200 = vst.msk [vmem:[%s1192 + $0x38] sm:$0xff] %vm146, %v1191
        %1209 = vrot.lane.b32.xlu0 %v1184, 64
        %v1210 = vpop.permute.xlu0 %1209
        %1211 = vrot.lane.b32.xlu0 %v1185, 64
        %v1212 = vpop.permute.xlu0 %1211
        %1213 = vrot.lane.b32.xlu0 %v1186, 64
        %v1214 = vpop.permute.xlu0 %1213
        %1215 = vrot.lane.b32.xlu0 %v1187, 64
        %v1216 = vpop.permute.xlu0 %1215
        %1217 = vrot.lane.b32.xlu0 %v1188, 64
        %v1218 = vpop.permute.xlu0 %1217
        %1219 = vrot.lane.b32.xlu0 %v1189, 64
        %v1220 = vpop.permute.xlu0 %1219
        %1221 = vrot.lane.b32.xlu0 %v1190, 64
        %v1222 = vpop.permute.xlu0 %1221
        %1223 = vrot.lane.b32.xlu0 %v1191, 64
        %v1224 = vpop.permute.xlu0 %1223
        %s1233 = scalar_lea.vmem %s135, 2368 [#allocation5]
        %1234 = vst.msk [vmem:[%s1233] sm:$0xff] %vm146, %v1210
        %1235 = vst.msk [vmem:[%s1233 + $0x8] sm:$0xff] %vm146, %v1212
        %1236 = vst.msk [vmem:[%s1233 + $0x10] sm:$0xff] %vm146, %v1214
        %1237 = vst.msk [vmem:[%s1233 + $0x18] sm:$0xff] %vm146, %v1216
        %1238 = vst.msk [vmem:[%s1233 + $0x20] sm:$0xff] %vm146, %v1218
        %1239 = vst.msk [vmem:[%s1233 + $0x28] sm:$0xff] %vm146, %v1220
        %1240 = vst.msk [vmem:[%s1233 + $0x30] sm:$0xff] %vm146, %v1222
        %1241 = vst.msk [vmem:[%s1233 + $0x38] sm:$0xff] %vm146, %v1224
        %v1242 = vld [vmem:[%s1067 + $0x18] sm:$0xff]
        %v1243 = vld [vmem:[%s1067 + $0x58] sm:$0xff]
        %v1244 = vld [vmem:[%s1067 + $0x98] sm:$0xff]
        %v1245 = vld [vmem:[%s1067 + $0xd8] sm:$0xff]
        %v1246 = vld [vmem:[%s1067 + $0x118] sm:$0xff]
        %v1247 = vld [vmem:[%s1067 + $0x158] sm:$0xff]
        %v1248 = vld [vmem:[%s1067 + $0x198] sm:$0xff]
        %v1249 = vld [vmem:[%s1067 + $0x1d8] sm:$0xff]
        %s1250 = scalar_lea.vmem %s135, 2432 [#allocation5]
        %1251 = vst.msk [vmem:[%s1250] sm:$0xff] %vm146, %v1242
        %1252 = vst.msk [vmem:[%s1250 + $0x8] sm:$0xff] %vm146, %v1243
        %1253 = vst.msk [vmem:[%s1250 + $0x10] sm:$0xff] %vm146, %v1244
        %1254 = vst.msk [vmem:[%s1250 + $0x18] sm:$0xff] %vm146, %v1245
        %1255 = vst.msk [vmem:[%s1250 + $0x20] sm:$0xff] %vm146, %v1246
        %1256 = vst.msk [vmem:[%s1250 + $0x28] sm:$0xff] %vm146, %v1247
        %1257 = vst.msk [vmem:[%s1250 + $0x30] sm:$0xff] %vm146, %v1248
        %1258 = vst.msk [vmem:[%s1250 + $0x38] sm:$0xff] %vm146, %v1249
        %1267 = vrot.lane.b32.xlu0 %v1242, 64
        %v1268 = vpop.permute.xlu0 %1267
        %1269 = vrot.lane.b32.xlu0 %v1243, 64
        %v1270 = vpop.permute.xlu0 %1269
        %1271 = vrot.lane.b32.xlu0 %v1244, 64
        %v1272 = vpop.permute.xlu0 %1271
        %1273 = vrot.lane.b32.xlu0 %v1245, 64
        %v1274 = vpop.permute.xlu0 %1273
        %1275 = vrot.lane.b32.xlu0 %v1246, 64
        %v1276 = vpop.permute.xlu0 %1275
        %1277 = vrot.lane.b32.xlu0 %v1247, 64
        %v1278 = vpop.permute.xlu0 %1277
        %1279 = vrot.lane.b32.xlu0 %v1248, 64
        %v1280 = vpop.permute.xlu0 %1279
        %1281 = vrot.lane.b32.xlu0 %v1249, 64
        %v1282 = vpop.permute.xlu0 %1281
        %s1291 = scalar_lea.vmem %s135, 2496 [#allocation5]
        %1292 = vst.msk [vmem:[%s1291] sm:$0xff] %vm146, %v1268
        %1293 = vst.msk [vmem:[%s1291 + $0x8] sm:$0xff] %vm146, %v1270
        %1294 = vst.msk [vmem:[%s1291 + $0x10] sm:$0xff] %vm146, %v1272
        %1295 = vst.msk [vmem:[%s1291 + $0x18] sm:$0xff] %vm146, %v1274
        %1296 = vst.msk [vmem:[%s1291 + $0x20] sm:$0xff] %vm146, %v1276
        %1297 = vst.msk [vmem:[%s1291 + $0x28] sm:$0xff] %vm146, %v1278
        %1298 = vst.msk [vmem:[%s1291 + $0x30] sm:$0xff] %vm146, %v1280
        %1299 = vst.msk [vmem:[%s1291 + $0x38] sm:$0xff] %vm146, %v1282
        %v1300 = vld [vmem:[%s1067 + $0x20] sm:$0xff]
        %v1301 = vld [vmem:[%s1067 + $0x60] sm:$0xff]
        %v1302 = vld [vmem:[%s1067 + $0xa0] sm:$0xff]
        %v1303 = vld [vmem:[%s1067 + $0xe0] sm:$0xff]
        %v1304 = vld [vmem:[%s1067 + $0x120] sm:$0xff]
        %v1305 = vld [vmem:[%s1067 + $0x160] sm:$0xff]
        %v1306 = vld [vmem:[%s1067 + $0x1a0] sm:$0xff]
        %v1307 = vld [vmem:[%s1067 + $0x1e0] sm:$0xff]
        %s1308 = scalar_lea.vmem %s135, 2560 [#allocation5]
        %1309 = vst.msk [vmem:[%s1308] sm:$0xff] %vm146, %v1300
        %1310 = vst.msk [vmem:[%s1308 + $0x8] sm:$0xff] %vm146, %v1301
        %1311 = vst.msk [vmem:[%s1308 + $0x10] sm:$0xff] %vm146, %v1302
        %1312 = vst.msk [vmem:[%s1308 + $0x18] sm:$0xff] %vm146, %v1303
        %1313 = vst.msk [vmem:[%s1308 + $0x20] sm:$0xff] %vm146, %v1304
        %1314 = vst.msk [vmem:[%s1308 + $0x28] sm:$0xff] %vm146, %v1305
        %1315 = vst.msk [vmem:[%s1308 + $0x30] sm:$0xff] %vm146, %v1306
        %1316 = vst.msk [vmem:[%s1308 + $0x38] sm:$0xff] %vm146, %v1307
        %1325 = vrot.lane.b32.xlu0 %v1300, 64
        %v1326 = vpop.permute.xlu0 %1325
        %1327 = vrot.lane.b32.xlu0 %v1301, 64
        %v1328 = vpop.permute.xlu0 %1327
        %1329 = vrot.lane.b32.xlu0 %v1302, 64
        %v1330 = vpop.permute.xlu0 %1329
        %1331 = vrot.lane.b32.xlu0 %v1303, 64
        %v1332 = vpop.permute.xlu0 %1331
        %1333 = vrot.lane.b32.xlu0 %v1304, 64
        %v1334 = vpop.permute.xlu0 %1333
        %1335 = vrot.lane.b32.xlu0 %v1305, 64
        %v1336 = vpop.permute.xlu0 %1335
        %1337 = vrot.lane.b32.xlu0 %v1306, 64
        %v1338 = vpop.permute.xlu0 %1337
        %1339 = vrot.lane.b32.xlu0 %v1307, 64
        %v1340 = vpop.permute.xlu0 %1339
        %s1349 = scalar_lea.vmem %s135, 2624 [#allocation5]
        %1350 = vst.msk [vmem:[%s1349] sm:$0xff] %vm146, %v1326
        %1351 = vst.msk [vmem:[%s1349 + $0x8] sm:$0xff] %vm146, %v1328
        %1352 = vst.msk [vmem:[%s1349 + $0x10] sm:$0xff] %vm146, %v1330
        %1353 = vst.msk [vmem:[%s1349 + $0x18] sm:$0xff] %vm146, %v1332
        %1354 = vst.msk [vmem:[%s1349 + $0x20] sm:$0xff] %vm146, %v1334
        %1355 = vst.msk [vmem:[%s1349 + $0x28] sm:$0xff] %vm146, %v1336
        %1356 = vst.msk [vmem:[%s1349 + $0x30] sm:$0xff] %vm146, %v1338
        %1357 = vst.msk [vmem:[%s1349 + $0x38] sm:$0xff] %vm146, %v1340
        %v1358 = vld [vmem:[%s1067 + $0x28] sm:$0xff]
        %v1359 = vld [vmem:[%s1067 + $0x68] sm:$0xff]
        %v1360 = vld [vmem:[%s1067 + $0xa8] sm:$0xff]
        %v1361 = vld [vmem:[%s1067 + $0xe8] sm:$0xff]
        %v1362 = vld [vmem:[%s1067 + $0x128] sm:$0xff]
        %v1363 = vld [vmem:[%s1067 + $0x168] sm:$0xff]
        %v1364 = vld [vmem:[%s1067 + $0x1a8] sm:$0xff]
        %v1365 = vld [vmem:[%s1067 + $0x1e8] sm:$0xff]
        %s1366 = scalar_lea.vmem %s135, 2688 [#allocation5]
        %1367 = vst.msk [vmem:[%s1366] sm:$0xff] %vm146, %v1358
        %1368 = vst.msk [vmem:[%s1366 + $0x8] sm:$0xff] %vm146, %v1359
        %1369 = vst.msk [vmem:[%s1366 + $0x10] sm:$0xff] %vm146, %v1360
        %1370 = vst.msk [vmem:[%s1366 + $0x18] sm:$0xff] %vm146, %v1361
        %1371 = vst.msk [vmem:[%s1366 + $0x20] sm:$0xff] %vm146, %v1362
        %1372 = vst.msk [vmem:[%s1366 + $0x28] sm:$0xff] %vm146, %v1363
        %1373 = vst.msk [vmem:[%s1366 + $0x30] sm:$0xff] %vm146, %v1364
        %1374 = vst.msk [vmem:[%s1366 + $0x38] sm:$0xff] %vm146, %v1365
        %1383 = vrot.lane.b32.xlu0 %v1358, 64
        %v1384 = vpop.permute.xlu0 %1383
        %1385 = vrot.lane.b32.xlu0 %v1359, 64
        %v1386 = vpop.permute.xlu0 %1385
        %1387 = vrot.lane.b32.xlu0 %v1360, 64
        %v1388 = vpop.permute.xlu0 %1387
        %1389 = vrot.lane.b32.xlu0 %v1361, 64
        %v1390 = vpop.permute.xlu0 %1389
        %1391 = vrot.lane.b32.xlu0 %v1362, 64
        %v1392 = vpop.permute.xlu0 %1391
        %1393 = vrot.lane.b32.xlu0 %v1363, 64
        %v1394 = vpop.permute.xlu0 %1393
        %1395 = vrot.lane.b32.xlu0 %v1364, 64
        %v1396 = vpop.permute.xlu0 %1395
        %1397 = vrot.lane.b32.xlu0 %v1365, 64
        %v1398 = vpop.permute.xlu0 %1397
        %s1407 = scalar_lea.vmem %s135, 2752 [#allocation5]
        %1408 = vst.msk [vmem:[%s1407] sm:$0xff] %vm146, %v1384
        %1409 = vst.msk [vmem:[%s1407 + $0x8] sm:$0xff] %vm146, %v1386
        %1410 = vst.msk [vmem:[%s1407 + $0x10] sm:$0xff] %vm146, %v1388
        %1411 = vst.msk [vmem:[%s1407 + $0x18] sm:$0xff] %vm146, %v1390
        %1412 = vst.msk [vmem:[%s1407 + $0x20] sm:$0xff] %vm146, %v1392
        %1413 = vst.msk [vmem:[%s1407 + $0x28] sm:$0xff] %vm146, %v1394
        %1414 = vst.msk [vmem:[%s1407 + $0x30] sm:$0xff] %vm146, %v1396
        %1415 = vst.msk [vmem:[%s1407 + $0x38] sm:$0xff] %vm146, %v1398
        %v1416 = vld [vmem:[%s1067 + $0x30] sm:$0xff]
        %v1417 = vld [vmem:[%s1067 + $0x70] sm:$0xff]
        %v1418 = vld [vmem:[%s1067 + $0xb0] sm:$0xff]
        %v1419 = vld [vmem:[%s1067 + $0xf0] sm:$0xff]
        %v1420 = vld [vmem:[%s1067 + $0x130] sm:$0xff]
        %v1421 = vld [vmem:[%s1067 + $0x170] sm:$0xff]
        %v1422 = vld [vmem:[%s1067 + $0x1b0] sm:$0xff]
        %v1423 = vld [vmem:[%s1067 + $0x1f0] sm:$0xff]
        %s1424 = scalar_lea.vmem %s135, 2816 [#allocation5]
        %1425 = vst.msk [vmem:[%s1424] sm:$0xff] %vm146, %v1416
        %1426 = vst.msk [vmem:[%s1424 + $0x8] sm:$0xff] %vm146, %v1417
        %1427 = vst.msk [vmem:[%s1424 + $0x10] sm:$0xff] %vm146, %v1418
        %1428 = vst.msk [vmem:[%s1424 + $0x18] sm:$0xff] %vm146, %v1419
        %1429 = vst.msk [vmem:[%s1424 + $0x20] sm:$0xff] %vm146, %v1420
        %1430 = vst.msk [vmem:[%s1424 + $0x28] sm:$0xff] %vm146, %v1421
        %1431 = vst.msk [vmem:[%s1424 + $0x30] sm:$0xff] %vm146, %v1422
        %1432 = vst.msk [vmem:[%s1424 + $0x38] sm:$0xff] %vm146, %v1423
        %1441 = vrot.lane.b32.xlu0 %v1416, 64
        %v1442 = vpop.permute.xlu0 %1441
        %1443 = vrot.lane.b32.xlu0 %v1417, 64
        %v1444 = vpop.permute.xlu0 %1443
        %1445 = vrot.lane.b32.xlu0 %v1418, 64
        %v1446 = vpop.permute.xlu0 %1445
        %1447 = vrot.lane.b32.xlu0 %v1419, 64
        %v1448 = vpop.permute.xlu0 %1447
        %1449 = vrot.lane.b32.xlu0 %v1420, 64
        %v1450 = vpop.permute.xlu0 %1449
        %1451 = vrot.lane.b32.xlu0 %v1421, 64
        %v1452 = vpop.permute.xlu0 %1451
        %1453 = vrot.lane.b32.xlu0 %v1422, 64
        %v1454 = vpop.permute.xlu0 %1453
        %1455 = vrot.lane.b32.xlu0 %v1423, 64
        %v1456 = vpop.permute.xlu0 %1455
        %s1465 = scalar_lea.vmem %s135, 2880 [#allocation5]
        %1466 = vst.msk [vmem:[%s1465] sm:$0xff] %vm146, %v1442
        %1467 = vst.msk [vmem:[%s1465 + $0x8] sm:$0xff] %vm146, %v1444
        %1468 = vst.msk [vmem:[%s1465 + $0x10] sm:$0xff] %vm146, %v1446
        %1469 = vst.msk [vmem:[%s1465 + $0x18] sm:$0xff] %vm146, %v1448
        %1470 = vst.msk [vmem:[%s1465 + $0x20] sm:$0xff] %vm146, %v1450
        %1471 = vst.msk [vmem:[%s1465 + $0x28] sm:$0xff] %vm146, %v1452
        %1472 = vst.msk [vmem:[%s1465 + $0x30] sm:$0xff] %vm146, %v1454
        %1473 = vst.msk [vmem:[%s1465 + $0x38] sm:$0xff] %vm146, %v1456
        %v1474 = vld [vmem:[%s1067 + $0x38] sm:$0xff]
        %v1475 = vld [vmem:[%s1067 + $0x78] sm:$0xff]
        %v1476 = vld [vmem:[%s1067 + $0xb8] sm:$0xff]
        %v1477 = vld [vmem:[%s1067 + $0xf8] sm:$0xff]
        %v1478 = vld [vmem:[%s1067 + $0x138] sm:$0xff]
        %v1479 = vld [vmem:[%s1067 + $0x178] sm:$0xff]
        %v1480 = vld [vmem:[%s1067 + $0x1b8] sm:$0xff]
        %v1481 = vld [vmem:[%s1067 + $0x1f8] sm:$0xff]
        %s1482 = scalar_lea.vmem %s135, 2944 [#allocation5]
        %1483 = vst.msk [vmem:[%s1482] sm:$0xff] %vm146, %v1474
        %1484 = vst.msk [vmem:[%s1482 + $0x8] sm:$0xff] %vm146, %v1475
        %1485 = vst.msk [vmem:[%s1482 + $0x10] sm:$0xff] %vm146, %v1476
        %1486 = vst.msk [vmem:[%s1482 + $0x18] sm:$0xff] %vm146, %v1477
        %1487 = vst.msk [vmem:[%s1482 + $0x20] sm:$0xff] %vm146, %v1478
        %1488 = vst.msk [vmem:[%s1482 + $0x28] sm:$0xff] %vm146, %v1479
        %1489 = vst.msk [vmem:[%s1482 + $0x30] sm:$0xff] %vm146, %v1480
        %1490 = vst.msk [vmem:[%s1482 + $0x38] sm:$0xff] %vm146, %v1481
        %1499 = vrot.lane.b32.xlu0 %v1474, 64
        %v1500 = vpop.permute.xlu0 %1499
        %1501 = vrot.lane.b32.xlu0 %v1475, 64
        %v1502 = vpop.permute.xlu0 %1501
        %1503 = vrot.lane.b32.xlu0 %v1476, 64
        %v1504 = vpop.permute.xlu0 %1503
        %1505 = vrot.lane.b32.xlu0 %v1477, 64
        %v1506 = vpop.permute.xlu0 %1505
        %1507 = vrot.lane.b32.xlu0 %v1478, 64
        %v1508 = vpop.permute.xlu0 %1507
        %1509 = vrot.lane.b32.xlu0 %v1479, 64
        %v1510 = vpop.permute.xlu0 %1509
        %1511 = vrot.lane.b32.xlu0 %v1480, 64
        %v1512 = vpop.permute.xlu0 %1511
        %1513 = vrot.lane.b32.xlu0 %v1481, 64
        %v1514 = vpop.permute.xlu0 %1513
        %s1523 = scalar_lea.vmem %s135, 3008 [#allocation5]
        %1524 = vst.msk [vmem:[%s1523] sm:$0xff] %vm146, %v1500
        %1525 = vst.msk [vmem:[%s1523 + $0x8] sm:$0xff] %vm146, %v1502
        %1526 = vst.msk [vmem:[%s1523 + $0x10] sm:$0xff] %vm146, %v1504
        %1527 = vst.msk [vmem:[%s1523 + $0x18] sm:$0xff] %vm146, %v1506
        %1528 = vst.msk [vmem:[%s1523 + $0x20] sm:$0xff] %vm146, %v1508
        %1529 = vst.msk [vmem:[%s1523 + $0x28] sm:$0xff] %vm146, %v1510
        %1530 = vst.msk [vmem:[%s1523 + $0x30] sm:$0xff] %vm146, %v1512
        %1531 = vst.msk [vmem:[%s1523 + $0x38] sm:$0xff] %vm146, %v1514
        %s1532 = scalar_lea.vmem %s117, 1536 [#allocation2]
        %v1533 = vld [vmem:[%s1532] sm:$0xff]
        %v1534 = vld [vmem:[%s1532 + $0x40] sm:$0xff]
        %v1535 = vld [vmem:[%s1532 + $0x80] sm:$0xff]
        %v1536 = vld [vmem:[%s1532 + $0xc0] sm:$0xff]
        %v1537 = vld [vmem:[%s1532 + $0x100] sm:$0xff]
        %v1538 = vld [vmem:[%s1532 + $0x140] sm:$0xff]
        %v1539 = vld [vmem:[%s1532 + $0x180] sm:$0xff]
        %v1540 = vld [vmem:[%s1532 + $0x1c0] sm:$0xff]
        %s1541 = scalar_lea.vmem %s135, 3072 [#allocation5]
        %1542 = vst.msk [vmem:[%s1541] sm:$0xff] %vm146, %v1533
        %1543 = vst.msk [vmem:[%s1541 + $0x8] sm:$0xff] %vm146, %v1534
        %1544 = vst.msk [vmem:[%s1541 + $0x10] sm:$0xff] %vm146, %v1535
        %1545 = vst.msk [vmem:[%s1541 + $0x18] sm:$0xff] %vm146, %v1536
        %1546 = vst.msk [vmem:[%s1541 + $0x20] sm:$0xff] %vm146, %v1537
        %1547 = vst.msk [vmem:[%s1541 + $0x28] sm:$0xff] %vm146, %v1538
        %1548 = vst.msk [vmem:[%s1541 + $0x30] sm:$0xff] %vm146, %v1539
        %1549 = vst.msk [vmem:[%s1541 + $0x38] sm:$0xff] %vm146, %v1540
        %1558 = vrot.lane.b32.xlu0 %v1533, 64
        %v1559 = vpop.permute.xlu0 %1558
        %1560 = vrot.lane.b32.xlu0 %v1534, 64
        %v1561 = vpop.permute.xlu0 %1560
        %1562 = vrot.lane.b32.xlu0 %v1535, 64
        %v1563 = vpop.permute.xlu0 %1562
        %1564 = vrot.lane.b32.xlu0 %v1536, 64
        %v1565 = vpop.permute.xlu0 %1564
        %1566 = vrot.lane.b32.xlu0 %v1537, 64
        %v1567 = vpop.permute.xlu0 %1566
        %1568 = vrot.lane.b32.xlu0 %v1538, 64
        %v1569 = vpop.permute.xlu0 %1568
        %1570 = vrot.lane.b32.xlu0 %v1539, 64
        %v1571 = vpop.permute.xlu0 %1570
        %1572 = vrot.lane.b32.xlu0 %v1540, 64
        %v1573 = vpop.permute.xlu0 %1572
        %s1582 = scalar_lea.vmem %s135, 3136 [#allocation5]
        %1583 = vst.msk [vmem:[%s1582] sm:$0xff] %vm146, %v1559
        %1584 = vst.msk [vmem:[%s1582 + $0x8] sm:$0xff] %vm146, %v1561
        %1585 = vst.msk [vmem:[%s1582 + $0x10] sm:$0xff] %vm146, %v1563
        %1586 = vst.msk [vmem:[%s1582 + $0x18] sm:$0xff] %vm146, %v1565
        %1587 = vst.msk [vmem:[%s1582 + $0x20] sm:$0xff] %vm146, %v1567
        %1588 = vst.msk [vmem:[%s1582 + $0x28] sm:$0xff] %vm146, %v1569
        %1589 = vst.msk [vmem:[%s1582 + $0x30] sm:$0xff] %vm146, %v1571
        %1590 = vst.msk [vmem:[%s1582 + $0x38] sm:$0xff] %vm146, %v1573
        %v1591 = vld [vmem:[%s1532 + $0x8] sm:$0xff]
        %v1592 = vld [vmem:[%s1532 + $0x48] sm:$0xff]
        %v1593 = vld [vmem:[%s1532 + $0x88] sm:$0xff]
        %v1594 = vld [vmem:[%s1532 + $0xc8] sm:$0xff]
        %v1595 = vld [vmem:[%s1532 + $0x108] sm:$0xff]
        %v1596 = vld [vmem:[%s1532 + $0x148] sm:$0xff]
        %v1597 = vld [vmem:[%s1532 + $0x188] sm:$0xff]
        %v1598 = vld [vmem:[%s1532 + $0x1c8] sm:$0xff]
        %s1599 = scalar_lea.vmem %s135, 3200 [#allocation5]
        %1600 = vst.msk [vmem:[%s1599] sm:$0xff] %vm146, %v1591
        %1601 = vst.msk [vmem:[%s1599 + $0x8] sm:$0xff] %vm146, %v1592
        %1602 = vst.msk [vmem:[%s1599 + $0x10] sm:$0xff] %vm146, %v1593
        %1603 = vst.msk [vmem:[%s1599 + $0x18] sm:$0xff] %vm146, %v1594
        %1604 = vst.msk [vmem:[%s1599 + $0x20] sm:$0xff] %vm146, %v1595
        %1605 = vst.msk [vmem:[%s1599 + $0x28] sm:$0xff] %vm146, %v1596
        %1606 = vst.msk [vmem:[%s1599 + $0x30] sm:$0xff] %vm146, %v1597
        %1607 = vst.msk [vmem:[%s1599 + $0x38] sm:$0xff] %vm146, %v1598
        %1616 = vrot.lane.b32.xlu0 %v1591, 64
        %v1617 = vpop.permute.xlu0 %1616
        %1618 = vrot.lane.b32.xlu0 %v1592, 64
        %v1619 = vpop.permute.xlu0 %1618
        %1620 = vrot.lane.b32.xlu0 %v1593, 64
        %v1621 = vpop.permute.xlu0 %1620
        %1622 = vrot.lane.b32.xlu0 %v1594, 64
        %v1623 = vpop.permute.xlu0 %1622
        %1624 = vrot.lane.b32.xlu0 %v1595, 64
        %v1625 = vpop.permute.xlu0 %1624
        %1626 = vrot.lane.b32.xlu0 %v1596, 64
        %v1627 = vpop.permute.xlu0 %1626
        %1628 = vrot.lane.b32.xlu0 %v1597, 64
        %v1629 = vpop.permute.xlu0 %1628
        %1630 = vrot.lane.b32.xlu0 %v1598, 64
        %v1631 = vpop.permute.xlu0 %1630
        %s1640 = scalar_lea.vmem %s135, 3264 [#allocation5]
        %1641 = vst.msk [vmem:[%s1640] sm:$0xff] %vm146, %v1617
        %1642 = vst.msk [vmem:[%s1640 + $0x8] sm:$0xff] %vm146, %v1619
        %1643 = vst.msk [vmem:[%s1640 + $0x10] sm:$0xff] %vm146, %v1621
        %1644 = vst.msk [vmem:[%s1640 + $0x18] sm:$0xff] %vm146, %v1623
        %1645 = vst.msk [vmem:[%s1640 + $0x20] sm:$0xff] %vm146, %v1625
        %1646 = vst.msk [vmem:[%s1640 + $0x28] sm:$0xff] %vm146, %v1627
        %1647 = vst.msk [vmem:[%s1640 + $0x30] sm:$0xff] %vm146, %v1629
        %1648 = vst.msk [vmem:[%s1640 + $0x38] sm:$0xff] %vm146, %v1631
        %v1649 = vld [vmem:[%s1532 + $0x10] sm:$0xff]
        %v1650 = vld [vmem:[%s1532 + $0x50] sm:$0xff]
        %v1651 = vld [vmem:[%s1532 + $0x90] sm:$0xff]
        %v1652 = vld [vmem:[%s1532 + $0xd0] sm:$0xff]
        %v1653 = vld [vmem:[%s1532 + $0x110] sm:$0xff]
        %v1654 = vld [vmem:[%s1532 + $0x150] sm:$0xff]
        %v1655 = vld [vmem:[%s1532 + $0x190] sm:$0xff]
        %v1656 = vld [vmem:[%s1532 + $0x1d0] sm:$0xff]
        %s1657 = scalar_lea.vmem %s135, 3328 [#allocation5]
        %1658 = vst.msk [vmem:[%s1657] sm:$0xff] %vm146, %v1649
        %1659 = vst.msk [vmem:[%s1657 + $0x8] sm:$0xff] %vm146, %v1650
        %1660 = vst.msk [vmem:[%s1657 + $0x10] sm:$0xff] %vm146, %v1651
        %1661 = vst.msk [vmem:[%s1657 + $0x18] sm:$0xff] %vm146, %v1652
        %1662 = vst.msk [vmem:[%s1657 + $0x20] sm:$0xff] %vm146, %v1653
        %1663 = vst.msk [vmem:[%s1657 + $0x28] sm:$0xff] %vm146, %v1654
        %1664 = vst.msk [vmem:[%s1657 + $0x30] sm:$0xff] %vm146, %v1655
        %1665 = vst.msk [vmem:[%s1657 + $0x38] sm:$0xff] %vm146, %v1656
        %1674 = vrot.lane.b32.xlu0 %v1649, 64
        %v1675 = vpop.permute.xlu0 %1674
        %1676 = vrot.lane.b32.xlu0 %v1650, 64
        %v1677 = vpop.permute.xlu0 %1676
        %1678 = vrot.lane.b32.xlu0 %v1651, 64
        %v1679 = vpop.permute.xlu0 %1678
        %1680 = vrot.lane.b32.xlu0 %v1652, 64
        %v1681 = vpop.permute.xlu0 %1680
        %1682 = vrot.lane.b32.xlu0 %v1653, 64
        %v1683 = vpop.permute.xlu0 %1682
        %1684 = vrot.lane.b32.xlu0 %v1654, 64
        %v1685 = vpop.permute.xlu0 %1684
        %1686 = vrot.lane.b32.xlu0 %v1655, 64
        %v1687 = vpop.permute.xlu0 %1686
        %1688 = vrot.lane.b32.xlu0 %v1656, 64
        %v1689 = vpop.permute.xlu0 %1688
        %s1698 = scalar_lea.vmem %s135, 3392 [#allocation5]
        %1699 = vst.msk [vmem:[%s1698] sm:$0xff] %vm146, %v1675
        %1700 = vst.msk [vmem:[%s1698 + $0x8] sm:$0xff] %vm146, %v1677
        %1701 = vst.msk [vmem:[%s1698 + $0x10] sm:$0xff] %vm146, %v1679
        %1702 = vst.msk [vmem:[%s1698 + $0x18] sm:$0xff] %vm146, %v1681
        %1703 = vst.msk [vmem:[%s1698 + $0x20] sm:$0xff] %vm146, %v1683
        %1704 = vst.msk [vmem:[%s1698 + $0x28] sm:$0xff] %vm146, %v1685
        %1705 = vst.msk [vmem:[%s1698 + $0x30] sm:$0xff] %vm146, %v1687
        %1706 = vst.msk [vmem:[%s1698 + $0x38] sm:$0xff] %vm146, %v1689
        %v1707 = vld [vmem:[%s1532 + $0x18] sm:$0xff]
        %v1708 = vld [vmem:[%s1532 + $0x58] sm:$0xff]
        %v1709 = vld [vmem:[%s1532 + $0x98] sm:$0xff]
        %v1710 = vld [vmem:[%s1532 + $0xd8] sm:$0xff]
        %v1711 = vld [vmem:[%s1532 + $0x118] sm:$0xff]
        %v1712 = vld [vmem:[%s1532 + $0x158] sm:$0xff]
        %v1713 = vld [vmem:[%s1532 + $0x198] sm:$0xff]
        %v1714 = vld [vmem:[%s1532 + $0x1d8] sm:$0xff]
        %s1715 = scalar_lea.vmem %s135, 3456 [#allocation5]
        %1716 = vst.msk [vmem:[%s1715] sm:$0xff] %vm146, %v1707
        %1717 = vst.msk [vmem:[%s1715 + $0x8] sm:$0xff] %vm146, %v1708
        %1718 = vst.msk [vmem:[%s1715 + $0x10] sm:$0xff] %vm146, %v1709
        %1719 = vst.msk [vmem:[%s1715 + $0x18] sm:$0xff] %vm146, %v1710
        %1720 = vst.msk [vmem:[%s1715 + $0x20] sm:$0xff] %vm146, %v1711
        %1721 = vst.msk [vmem:[%s1715 + $0x28] sm:$0xff] %vm146, %v1712
        %1722 = vst.msk [vmem:[%s1715 + $0x30] sm:$0xff] %vm146, %v1713
        %1723 = vst.msk [vmem:[%s1715 + $0x38] sm:$0xff] %vm146, %v1714
        %1732 = vrot.lane.b32.xlu0 %v1707, 64
        %v1733 = vpop.permute.xlu0 %1732
        %1734 = vrot.lane.b32.xlu0 %v1708, 64
        %v1735 = vpop.permute.xlu0 %1734
        %1736 = vrot.lane.b32.xlu0 %v1709, 64
        %v1737 = vpop.permute.xlu0 %1736
        %1738 = vrot.lane.b32.xlu0 %v1710, 64
        %v1739 = vpop.permute.xlu0 %1738
        %1740 = vrot.lane.b32.xlu0 %v1711, 64
        %v1741 = vpop.permute.xlu0 %1740
        %1742 = vrot.lane.b32.xlu0 %v1712, 64
        %v1743 = vpop.permute.xlu0 %1742
        %1744 = vrot.lane.b32.xlu0 %v1713, 64
        %v1745 = vpop.permute.xlu0 %1744
        %1746 = vrot.lane.b32.xlu0 %v1714, 64
        %v1747 = vpop.permute.xlu0 %1746
        %s1756 = scalar_lea.vmem %s135, 3520 [#allocation5]
        %1757 = vst.msk [vmem:[%s1756] sm:$0xff] %vm146, %v1733
        %1758 = vst.msk [vmem:[%s1756 + $0x8] sm:$0xff] %vm146, %v1735
        %1759 = vst.msk [vmem:[%s1756 + $0x10] sm:$0xff] %vm146, %v1737
        %1760 = vst.msk [vmem:[%s1756 + $0x18] sm:$0xff] %vm146, %v1739
        %1761 = vst.msk [vmem:[%s1756 + $0x20] sm:$0xff] %vm146, %v1741
        %1762 = vst.msk [vmem:[%s1756 + $0x28] sm:$0xff] %vm146, %v1743
        %1763 = vst.msk [vmem:[%s1756 + $0x30] sm:$0xff] %vm146, %v1745
        %1764 = vst.msk [vmem:[%s1756 + $0x38] sm:$0xff] %vm146, %v1747
        %v1765 = vld [vmem:[%s1532 + $0x20] sm:$0xff]
        %v1766 = vld [vmem:[%s1532 + $0x60] sm:$0xff]
        %v1767 = vld [vmem:[%s1532 + $0xa0] sm:$0xff]
        %v1768 = vld [vmem:[%s1532 + $0xe0] sm:$0xff]
        %v1769 = vld [vmem:[%s1532 + $0x120] sm:$0xff]
        %v1770 = vld [vmem:[%s1532 + $0x160] sm:$0xff]
        %v1771 = vld [vmem:[%s1532 + $0x1a0] sm:$0xff]
        %v1772 = vld [vmem:[%s1532 + $0x1e0] sm:$0xff]
        %s1773 = scalar_lea.vmem %s135, 3584 [#allocation5]
        %1774 = vst.msk [vmem:[%s1773] sm:$0xff] %vm146, %v1765
        %1775 = vst.msk [vmem:[%s1773 + $0x8] sm:$0xff] %vm146, %v1766
        %1776 = vst.msk [vmem:[%s1773 + $0x10] sm:$0xff] %vm146, %v1767
        %1777 = vst.msk [vmem:[%s1773 + $0x18] sm:$0xff] %vm146, %v1768
        %1778 = vst.msk [vmem:[%s1773 + $0x20] sm:$0xff] %vm146, %v1769
        %1779 = vst.msk [vmem:[%s1773 + $0x28] sm:$0xff] %vm146, %v1770
        %1780 = vst.msk [vmem:[%s1773 + $0x30] sm:$0xff] %vm146, %v1771
        %1781 = vst.msk [vmem:[%s1773 + $0x38] sm:$0xff] %vm146, %v1772
        %1790 = vrot.lane.b32.xlu0 %v1765, 64
        %v1791 = vpop.permute.xlu0 %1790
        %1792 = vrot.lane.b32.xlu0 %v1766, 64
        %v1793 = vpop.permute.xlu0 %1792
        %1794 = vrot.lane.b32.xlu0 %v1767, 64
        %v1795 = vpop.permute.xlu0 %1794
        %1796 = vrot.lane.b32.xlu0 %v1768, 64
        %v1797 = vpop.permute.xlu0 %1796
        %1798 = vrot.lane.b32.xlu0 %v1769, 64
        %v1799 = vpop.permute.xlu0 %1798
        %1800 = vrot.lane.b32.xlu0 %v1770, 64
        %v1801 = vpop.permute.xlu0 %1800
        %1802 = vrot.lane.b32.xlu0 %v1771, 64
        %v1803 = vpop.permute.xlu0 %1802
        %1804 = vrot.lane.b32.xlu0 %v1772, 64
        %v1805 = vpop.permute.xlu0 %1804
        %s1814 = scalar_lea.vmem %s135, 3648 [#allocation5]
        %1815 = vst.msk [vmem:[%s1814] sm:$0xff] %vm146, %v1791
        %1816 = vst.msk [vmem:[%s1814 + $0x8] sm:$0xff] %vm146, %v1793
        %1817 = vst.msk [vmem:[%s1814 + $0x10] sm:$0xff] %vm146, %v1795
        %1818 = vst.msk [vmem:[%s1814 + $0x18] sm:$0xff] %vm146, %v1797
        %1819 = vst.msk [vmem:[%s1814 + $0x20] sm:$0xff] %vm146, %v1799
        %1820 = vst.msk [vmem:[%s1814 + $0x28] sm:$0xff] %vm146, %v1801
        %1821 = vst.msk [vmem:[%s1814 + $0x30] sm:$0xff] %vm146, %v1803
        %1822 = vst.msk [vmem:[%s1814 + $0x38] sm:$0xff] %vm146, %v1805
        %v1823 = vld [vmem:[%s1532 + $0x28] sm:$0xff]
        %v1824 = vld [vmem:[%s1532 + $0x68] sm:$0xff]
        %v1825 = vld [vmem:[%s1532 + $0xa8] sm:$0xff]
        %v1826 = vld [vmem:[%s1532 + $0xe8] sm:$0xff]
        %v1827 = vld [vmem:[%s1532 + $0x128] sm:$0xff]
        %v1828 = vld [vmem:[%s1532 + $0x168] sm:$0xff]
        %v1829 = vld [vmem:[%s1532 + $0x1a8] sm:$0xff]
        %v1830 = vld [vmem:[%s1532 + $0x1e8] sm:$0xff]
        %s1831 = scalar_lea.vmem %s135, 3712 [#allocation5]
        %1832 = vst.msk [vmem:[%s1831] sm:$0xff] %vm146, %v1823
        %1833 = vst.msk [vmem:[%s1831 + $0x8] sm:$0xff] %vm146, %v1824
        %1834 = vst.msk [vmem:[%s1831 + $0x10] sm:$0xff] %vm146, %v1825
        %1835 = vst.msk [vmem:[%s1831 + $0x18] sm:$0xff] %vm146, %v1826
        %1836 = vst.msk [vmem:[%s1831 + $0x20] sm:$0xff] %vm146, %v1827
        %1837 = vst.msk [vmem:[%s1831 + $0x28] sm:$0xff] %vm146, %v1828
        %1838 = vst.msk [vmem:[%s1831 + $0x30] sm:$0xff] %vm146, %v1829
        %1839 = vst.msk [vmem:[%s1831 + $0x38] sm:$0xff] %vm146, %v1830
        %1848 = vrot.lane.b32.xlu0 %v1823, 64
        %v1849 = vpop.permute.xlu0 %1848
        %1850 = vrot.lane.b32.xlu0 %v1824, 64
        %v1851 = vpop.permute.xlu0 %1850
        %1852 = vrot.lane.b32.xlu0 %v1825, 64
        %v1853 = vpop.permute.xlu0 %1852
        %1854 = vrot.lane.b32.xlu0 %v1826, 64
        %v1855 = vpop.permute.xlu0 %1854
        %1856 = vrot.lane.b32.xlu0 %v1827, 64
        %v1857 = vpop.permute.xlu0 %1856
        %1858 = vrot.lane.b32.xlu0 %v1828, 64
        %v1859 = vpop.permute.xlu0 %1858
        %1860 = vrot.lane.b32.xlu0 %v1829, 64
        %v1861 = vpop.permute.xlu0 %1860
        %1862 = vrot.lane.b32.xlu0 %v1830, 64
        %v1863 = vpop.permute.xlu0 %1862
        %s1872 = scalar_lea.vmem %s135, 3776 [#allocation5]
        %1873 = vst.msk [vmem:[%s1872] sm:$0xff] %vm146, %v1849
        %1874 = vst.msk [vmem:[%s1872 + $0x8] sm:$0xff] %vm146, %v1851
        %1875 = vst.msk [vmem:[%s1872 + $0x10] sm:$0xff] %vm146, %v1853
        %1876 = vst.msk [vmem:[%s1872 + $0x18] sm:$0xff] %vm146, %v1855
        %1877 = vst.msk [vmem:[%s1872 + $0x20] sm:$0xff] %vm146, %v1857
        %1878 = vst.msk [vmem:[%s1872 + $0x28] sm:$0xff] %vm146, %v1859
        %1879 = vst.msk [vmem:[%s1872 + $0x30] sm:$0xff] %vm146, %v1861
        %1880 = vst.msk [vmem:[%s1872 + $0x38] sm:$0xff] %vm146, %v1863
        %v1881 = vld [vmem:[%s1532 + $0x30] sm:$0xff]
        %v1882 = vld [vmem:[%s1532 + $0x70] sm:$0xff]
        %v1883 = vld [vmem:[%s1532 + $0xb0] sm:$0xff]
        %v1884 = vld [vmem:[%s1532 + $0xf0] sm:$0xff]
        %v1885 = vld [vmem:[%s1532 + $0x130] sm:$0xff]
        %v1886 = vld [vmem:[%s1532 + $0x170] sm:$0xff]
        %v1887 = vld [vmem:[%s1532 + $0x1b0] sm:$0xff]
        %v1888 = vld [vmem:[%s1532 + $0x1f0] sm:$0xff]
        %s1889 = scalar_lea.vmem %s135, 3840 [#allocation5]
        %1890 = vst.msk [vmem:[%s1889] sm:$0xff] %vm146, %v1881
        %1891 = vst.msk [vmem:[%s1889 + $0x8] sm:$0xff] %vm146, %v1882
        %1892 = vst.msk [vmem:[%s1889 + $0x10] sm:$0xff] %vm146, %v1883
        %1893 = vst.msk [vmem:[%s1889 + $0x18] sm:$0xff] %vm146, %v1884
        %1894 = vst.msk [vmem:[%s1889 + $0x20] sm:$0xff] %vm146, %v1885
        %1895 = vst.msk [vmem:[%s1889 + $0x28] sm:$0xff] %vm146, %v1886
        %1896 = vst.msk [vmem:[%s1889 + $0x30] sm:$0xff] %vm146, %v1887
        %1897 = vst.msk [vmem:[%s1889 + $0x38] sm:$0xff] %vm146, %v1888
        %1906 = vrot.lane.b32.xlu0 %v1881, 64
        %v1907 = vpop.permute.xlu0 %1906
        %1908 = vrot.lane.b32.xlu0 %v1882, 64
        %v1909 = vpop.permute.xlu0 %1908
        %1910 = vrot.lane.b32.xlu0 %v1883, 64
        %v1911 = vpop.permute.xlu0 %1910
        %1912 = vrot.lane.b32.xlu0 %v1884, 64
        %v1913 = vpop.permute.xlu0 %1912
        %1914 = vrot.lane.b32.xlu0 %v1885, 64
        %v1915 = vpop.permute.xlu0 %1914
        %1916 = vrot.lane.b32.xlu0 %v1886, 64
        %v1917 = vpop.permute.xlu0 %1916
        %1918 = vrot.lane.b32.xlu0 %v1887, 64
        %v1919 = vpop.permute.xlu0 %1918
        %1920 = vrot.lane.b32.xlu0 %v1888, 64
        %v1921 = vpop.permute.xlu0 %1920
        %s1930 = scalar_lea.vmem %s135, 3904 [#allocation5]
        %1931 = vst.msk [vmem:[%s1930] sm:$0xff] %vm146, %v1907
        %1932 = vst.msk [vmem:[%s1930 + $0x8] sm:$0xff] %vm146, %v1909
        %1933 = vst.msk [vmem:[%s1930 + $0x10] sm:$0xff] %vm146, %v1911
        %1934 = vst.msk [vmem:[%s1930 + $0x18] sm:$0xff] %vm146, %v1913
        %1935 = vst.msk [vmem:[%s1930 + $0x20] sm:$0xff] %vm146, %v1915
        %1936 = vst.msk [vmem:[%s1930 + $0x28] sm:$0xff] %vm146, %v1917
        %1937 = vst.msk [vmem:[%s1930 + $0x30] sm:$0xff] %vm146, %v1919
        %1938 = vst.msk [vmem:[%s1930 + $0x38] sm:$0xff] %vm146, %v1921
        %v1939 = vld [vmem:[%s1532 + $0x38] sm:$0xff]
        %v1940 = vld [vmem:[%s1532 + $0x78] sm:$0xff]
        %v1941 = vld [vmem:[%s1532 + $0xb8] sm:$0xff]
        %v1942 = vld [vmem:[%s1532 + $0xf8] sm:$0xff]
        %v1943 = vld [vmem:[%s1532 + $0x138] sm:$0xff]
        %v1944 = vld [vmem:[%s1532 + $0x178] sm:$0xff]
        %v1945 = vld [vmem:[%s1532 + $0x1b8] sm:$0xff]
        %v1946 = vld [vmem:[%s1532 + $0x1f8] sm:$0xff]
        %s1947 = scalar_lea.vmem %s135, 3968 [#allocation5]
        %1948 = vst.msk [vmem:[%s1947] sm:$0xff] %vm146, %v1939
        %1949 = vst.msk [vmem:[%s1947 + $0x8] sm:$0xff] %vm146, %v1940
        %1950 = vst.msk [vmem:[%s1947 + $0x10] sm:$0xff] %vm146, %v1941
        %1951 = vst.msk [vmem:[%s1947 + $0x18] sm:$0xff] %vm146, %v1942
        %1952 = vst.msk [vmem:[%s1947 + $0x20] sm:$0xff] %vm146, %v1943
        %1953 = vst.msk [vmem:[%s1947 + $0x28] sm:$0xff] %vm146, %v1944
        %1954 = vst.msk [vmem:[%s1947 + $0x30] sm:$0xff] %vm146, %v1945
        %1955 = vst.msk [vmem:[%s1947 + $0x38] sm:$0xff] %vm146, %v1946
        %1964 = vrot.lane.b32.xlu0 %v1939, 64
        %v1965 = vpop.permute.xlu0 %1964
        %1966 = vrot.lane.b32.xlu0 %v1940, 64
        %v1967 = vpop.permute.xlu0 %1966
        %1968 = vrot.lane.b32.xlu0 %v1941, 64
        %v1969 = vpop.permute.xlu0 %1968
        %1970 = vrot.lane.b32.xlu0 %v1942, 64
        %v1971 = vpop.permute.xlu0 %1970
        %1972 = vrot.lane.b32.xlu0 %v1943, 64
        %v1973 = vpop.permute.xlu0 %1972
        %1974 = vrot.lane.b32.xlu0 %v1944, 64
        %v1975 = vpop.permute.xlu0 %1974
        %1976 = vrot.lane.b32.xlu0 %v1945, 64
        %v1977 = vpop.permute.xlu0 %1976
        %1978 = vrot.lane.b32.xlu0 %v1946, 64
        %v1979 = vpop.permute.xlu0 %1978
        %s1988 = scalar_lea.vmem %s135, 4032 [#allocation5]
        %1989 = vst.msk [vmem:[%s1988] sm:$0xff] %vm146, %v1965
        %1990 = vst.msk [vmem:[%s1988 + $0x8] sm:$0xff] %vm146, %v1967
        %1991 = vst.msk [vmem:[%s1988 + $0x10] sm:$0xff] %vm146, %v1969
        %1992 = vst.msk [vmem:[%s1988 + $0x18] sm:$0xff] %vm146, %v1971
        %1993 = vst.msk [vmem:[%s1988 + $0x20] sm:$0xff] %vm146, %v1973
        %1994 = vst.msk [vmem:[%s1988 + $0x28] sm:$0xff] %vm146, %v1975
        %1995 = vst.msk [vmem:[%s1988 + $0x30] sm:$0xff] %vm146, %v1977
        %1996 = vst.msk [vmem:[%s1988 + $0x38] sm:$0xff] %vm146, %v1979
        %s1997 = sand.u32 %s52, 1
        %s1998 = scalar_lea.sflag [#allocation4], %s1997
        %s1999 = sand.u32 %s52, 1
        %s2000 = smul.addr %s1999, 4096
        %s2001 = scalar_lea.vmem [#allocation5], %s2000
        // Predicated region
        $region29: #{tpu_custom_call.1} parent=23 // pred_check
          %p2002 = pneg %p62
        $region30: #{tpu_custom_call.1} parent=23 // pred_check_branch
          %2004 = sbr.rel (%p2002) target = $region32
        $region31: #{tpu_custom_call.1} parent=23 // pred_region
          %s2005 = smul.u32 4, %s18
          %s2007 = ssub.s32 65536, 65536
          %2008 = vsyncadd %s1998, %s2007
          %s2009 = smul.addr %s2005, 128
          %s2010 = smul.addr %s2009, 128
          %s2011 = scalar_lea.hbm %s1, %s2010
          %s2012 = sshll.u32 %s2001, 4
          %s2013 = int_to_ptr.vmem [resolvable:$true] %s2012
          %2018 = dma.vmem_to_hbm [thread:$0]  %s2013, 65536, %s2011, %s1998, 128, 128, 8
        $region32: #{tpu_custom_call.1} parent=23 // pred_fallthru
          _
      $region24: #{tpu_custom_call.1} parent=5 // pred_fallthru
        _
      %p2019 = scmp.le.s32.totalorder 2, %s13
      // Predicated region
      $region33: #{tpu_custom_call.1} parent=5 // pred_check
        %p2020 = pneg %p2019
      $region34: #{tpu_custom_call.1} parent=5 // pred_check_branch
        %2022 = sbr.rel (%p2020) target = $region36
      $region35: #{tpu_custom_call.1} parent=5 // pred_region
        %s2023 = ssub.s32 %s13, 2
        // Predicated region
        $region37: #{tpu_custom_call.1} parent=35 // pred_check
          %p2024 = pneg %p68
        $region38: #{tpu_custom_call.1} parent=35 // pred_check_branch
          %2026 = sbr.rel (%p2024) target = $region40
        $region39: #{tpu_custom_call.1} parent=35 // pred_region
          %s2027 = sand.u32 %s53, 1
          %s2028 = scalar_lea.sflag [#allocation4], %s2027
          %s2029 = sand.u32 %s53, 1
          %s2030 = smul.addr %s2029, 4096
          %s2031 = scalar_lea.vmem [#allocation5], %s2030
          %2032 = dma.done %s2028, 65536
        $region40: #{tpu_custom_call.1} parent=35 // pred_fallthru
          _
      $region36: #{tpu_custom_call.1} parent=5 // pred_fallthru
        _
    $region6: #{tpu_custom_call.1} parent=1 // loop_footer
      %s17 = sadd.s32 1, %s13
    $region7: #{tpu_custom_call.1} parent=1 // loop_footer_branch
      %12 = sbr.rel target = $region3
    $region8: #{tpu_custom_call.1} parent=1 // loop_exit
      _
    %2033 = vsyncpa [#allocation3], 1
    %s2034 = scalar_lea.sflag [#allocation3], 1
    %2035 = vsyncpa %s2034, 1
    %2036 = vsyncpa [#allocation4], 1
    %s2037 = scalar_lea.sflag [#allocation4], 1
    %2038 = vsyncpa %s2037, 1

</llo_original>
